<compile_context>
chip_gen: v7x
topology: tpu7x:2x2x1
jax: 0.10.0
libtpu: 0.0.40
codegen_flags: <defaults>
</compile_context>

<pallas_src>
import functools

import jax
import jax.numpy as jnp
import numpy as np
from jax.experimental import pallas as pl
from jax.experimental.pallas import tpu as pltpu


def _round_up(x, m):
    return ((x + m - 1) // m) * m


# ----------------------------------------------------------------------------
# Fully fused WaveNet forward kernel: per (C_like, tile_t) time tile it runs
# first conv -> causal layer0 -> all residual blocks -> mean/ReLU -> MLP ->
# projection head, writing only the final (Dout, tile_t) output block.
# ----------------------------------------------------------------------------
def _wavenet_kernel(xin_ref, wfirst_ref, bfirst_ref, wl0_ref, bl0_ref,
                    w1_ref, b1_ref, w2_ref, b2_ref,
                    wm1_ref, bm1_ref, wf_ref, bf_ref,
                    y_ref, halo_ref, *,
                    dilations, n_taps, tile_t, halo_pad, tiles_per_batch,
                    compute_dtype):
    C = wl0_ref.shape[0]
    n_res = len(dilations)
    cdt = compute_dtype
    j = pl.program_id(0)

    # Zero the per-layer causal-halo stash at each batch element's first tile
    # (this also covers the uninitialized scratch at j == 0).
    @pl.when(j % tiles_per_batch == 0)
    def _():
        halo_ref[...] = jnp.zeros_like(halo_ref)

    # --- first 1x1 conv (pointwise channel mix) ------------------------------
    h = jnp.dot(wfirst_ref[...], xin_ref[...].astype(cdt),
                preferred_element_type=jnp.float32) + bfirst_ref[...]

    # --- layer 0: strictly-causal K=3 conv keeps only the h[t-1] tap, ReLU ---
    tail0 = halo_ref[0]                                    # (C, halo_pad) f32
    halo_ref[0] = h[:, tile_t - halo_pad:]                 # stash for next tile
    ha = jnp.concatenate([tail0, h], axis=-1)              # (C, halo_pad + tt)
    h_shift = ha[:, halo_pad - 1:halo_pad - 1 + tile_t]    # h[t-1]
    x = jnp.dot(wl0_ref[...], h_shift.astype(cdt),
                preferred_element_type=jnp.float32) + bl0_ref[...]
    x = jnp.maximum(x, 0.0)                                # (C, tile_t) f32

    # --- residual stack, unrolled: activations never leave VMEM/vregs --------
    acc_sum = jnp.zeros_like(x)
    for l, d in enumerate(dilations):
        tail = halo_ref[l + 1]                             # prev-tile input tail
        halo_ref[l + 1] = x[:, tile_t - halo_pad:]         # stash current tail
        xa = jnp.concatenate([tail, x], axis=-1)           # (C, halo_pad + tt)

        # Fused causal taps -> one MXU matmul with K = n_taps*C; bias is a
        # broadcast VPU add (no ones-row padding of the contraction dim).
        pieces = [x]
        for s in range(1, n_taps):
            sh = s * d
            pieces.append(xa[:, halo_pad - sh:halo_pad + tile_t - sh])
        x_stk = jnp.concatenate(pieces, axis=0).astype(cdt)   # (n_taps*C, tt)

        z = jnp.dot(w1_ref[l], x_stk, preferred_element_type=jnp.float32)
        z = z + b1_ref[l]
        # Gated activation; sigmoid(u) = 0.5*(1 + tanh(u/2)) -> EUP only.
        gate = jnp.tanh(z[:C]) * (0.5 * (jnp.tanh(0.5 * z[C:]) + 1.0))

        out = jnp.dot(w2_ref[l], gate.astype(cdt),
                      preferred_element_type=jnp.float32)
        out = out + b2_ref[l] + x                          # residual add, f32
        acc_sum = acc_sum + out
        x = out

    # --- relu(mean(outs)) -> mlp1 (+ReLU) -> folded (projection_head @ mlp2) --
    m = jnp.maximum(acc_sum * (1.0 / n_res), 0.0)
    a = jnp.dot(wm1_ref[...], m.astype(cdt),
                preferred_element_type=jnp.float32) + bm1_ref[...]
    a = jnp.maximum(a, 0.0)
    y = jnp.dot(wf_ref[...], a.astype(cdt),
                preferred_element_type=jnp.float32) + bf_ref[...]
    y_ref[...] = y.astype(y_ref.dtype)


# ----------------------------------------------------------------------------
# Weight preparation: tap flattening for the fused dilated conv, gate-path row
# reordering, mlp2/projection-head folding, channel padding, dtype casts.
# ----------------------------------------------------------------------------
def _prep_params(params, dilations, kernel_size, cin_pad, compute_dtype):
    f32 = jnp.float32
    cdt = compute_dtype
    C = params["first_w"].shape[0]
    in_ch = params["first_w"].shape[1]
    half = kernel_size // 2
    n_taps = half + 1

    wfirst = jnp.pad(params["first_w"][:, :, 0].astype(f32),
                     ((0, 0), (0, cin_pad - in_ch)))
    bfirst = params["first_b"].astype(f32)[:, None]
    wl0 = params["l0_w"][:, :, 0].astype(f32)   # only the x[t-1] tap survives
    bl0 = params["l0_b"].astype(f32)[:, None]

    # Even conv-output rows (tanh path) first, odd rows (sigmoid path) second,
    # so the in-kernel gate split is a contiguous, sublane-aligned slice.
    perm = np.concatenate([np.arange(0, 2 * C, 2), np.arange(1, 2 * C, 2)])
    W1, B1, W2, B2 = [], [], [], []
    for (w1, b1, w2, b2) in params["res"]:
        w1r = w1[perm].astype(f32)
        # Column block s multiplies x[t - s*dilation] == kernel tap (half - s).
        w1f = jnp.concatenate([w1r[:, :, half - s] for s in range(n_taps)],
                              axis=1)                       # (2C, n_taps*C)
        W1.append(w1f)
        B1.append(b1[perm].astype(f32)[:, None])
        W2.append(w2[:, :, 0].astype(f32))
        B2.append(b2.astype(f32)[:, None])
    W1, B1 = jnp.stack(W1), jnp.stack(B1)
    W2, B2 = jnp.stack(W2), jnp.stack(B2)

    wm1 = params["mlp1_w"][:, :, 0].astype(f32)
    bm1 = params["mlp1_b"].astype(f32)[:, None]
    # mlp2 and the projection head are 1x1 convs with no nonlinearity between
    # them -> fold into a single matmul (removes one full HBM round trip).
    mlp2_w = params["mlp2_w"][:, :, 0].astype(f32)
    ph_w = params["ph_w"][:, :, 0].astype(f32)
    wf = ph_w @ mlp2_w
    bf = (ph_w @ params["mlp2_b"].astype(f32)
          + params["ph_b"].astype(f32))[:, None]

    return (wfirst.astype(cdt), bfirst, wl0.astype(cdt), bl0,
            W1.astype(cdt), B1, W2.astype(cdt), B2,
            wm1.astype(cdt), bm1, wf.astype(cdt), bf)


# ----------------------------------------------------------------------------
# Full WaveNet forward.
# ----------------------------------------------------------------------------
def _wavenet_forward_impl(params, audio, *, output_dim, dilations, kernel_size=3,
                          tile_t=512, compute_dtype=jnp.float32):
    B, in_ch, T = audio.shape
    C = params["first_w"].shape[0]
    dout = params["ph_w"].shape[0]
    n_res = len(dilations)
    half = kernel_size // 2
    n_taps = half + 1

    assert tile_t % 128 == 0
    assert C % 8 == 0, "pad channels (100 -> 128 for the full model) for clean MXU tiles"
    Tp = _round_up(T, tile_t)
    tiles_per_batch = Tp // tile_t
    num_tiles = B * tiles_per_batch
    L = B * Tp
    cin_pad = _round_up(in_ch, 8)

    max_shift = (n_taps - 1) * max(dilations)
    halo_pad = max(128, _round_up(max_shift, 128))
    # TODO(synk): carry a multi-tile halo if (n_taps-1)*max(dilation) > tile_t
    # (only needed if tile_t were lowered below the deepest dilation, 512).
    assert max_shift <= tile_t and halo_pad <= tile_t

    # Lane-dense flattened layout: rows = padded input channels, lanes =
    # (batch, time); per-batch time is contiguous so causality maps to lanes.
    xp = jnp.pad(audio.astype(jnp.float32),
                 ((0, 0), (0, cin_pad - in_ch), (0, Tp - T)))
    xin = jnp.transpose(xp, (1, 0, 2)).reshape(cin_pad, L).astype(compute_dtype)

    weights = _prep_params(params, dilations, kernel_size, cin_pad, compute_dtype)

    kern = functools.partial(
        _wavenet_kernel, dilations=tuple(dilations), n_taps=n_taps,
        tile_t=tile_t, halo_pad=halo_pad, tiles_per_batch=tiles_per_batch,
        compute_dtype=compute_dtype)

    def full_spec(arr):
        nd = arr.ndim
        return pl.BlockSpec(arr.shape, lambda *_: (0,) * nd)  # resident weights

    y2 = pl.pallas_call(
        kern,
        out_shape=jax.ShapeDtypeStruct((dout, L), jnp.float32),
        grid=(num_tiles,),
        in_specs=[pl.BlockSpec((cin_pad, tile_t), lambda j: (0, j))]
                 + [full_spec(w) for w in weights],
        out_specs=pl.BlockSpec((dout, tile_t), lambda j: (0, j)),
        scratch_shapes=[pltpu.VMEM((n_res + 1, C, halo_pad), jnp.float32)],
        compiler_params=pltpu.CompilerParams(
            # The causal halo stash is carried in VMEM scratch across time
            # tiles, so the grid axis must run sequentially (not core-sharded).
            dimension_semantics=("arbitrary",),
            # Explicit, modest cap; raise for the full-size model but budget
            # for v7x's 64 MiB physical VMEM.
            vmem_limit_bytes=32 * 1024 * 1024),
    )(xin, *weights)

    y = y2.reshape(dout, B, Tp).transpose(1, 0, 2)[:, :, :T]     # (B, Dout, T)
    return jnp.swapaxes(y.reshape(B, in_ch, output_dim, T), -1, -2)


wavenet_forward = jax.jit(
    _wavenet_forward_impl,
    static_argnames=("output_dim", "dilations", "kernel_size", "tile_t",
                     "compute_dtype"))


# ----------------------------------------------------------------------------
# Pure-JAX reference matching the PyTorch forward exactly.
# ----------------------------------------------------------------------------
def reference_wavenet(params, audio, *, output_dim, dilations, kernel_size=3):
    hi = jax.lax.Precision.HIGHEST
    x = audio.astype(jnp.float32)
    x = jnp.einsum("oi,bit->bot", params["first_w"][:, :, 0], x,
                   precision=hi) + params["first_b"][None, :, None]
    # strictly-causal first layer: only the x[t-1] tap survives the mask
    x_shift = jnp.pad(x, ((0, 0), (0, 0), (1, 0)))[:, :, :-1]
    x = jax.nn.relu(jnp.einsum("oi,bit->bot", params["l0_w"][:, :, 0], x_shift,
                               precision=hi) + params["l0_b"][None, :, None])
    half = kernel_size // 2
    mask = jnp.ones((kernel_size,), jnp.float32).at[half + 1:].set(0.0)
    outs = []
    for (w1, b1, w2, b2), d in zip(params["res"], dilations):
        y = jax.lax.conv_general_dilated(
            x, w1 * mask[None, None, :], window_strides=(1,),
            padding=[(half * d, half * d)], rhs_dilation=(d,),
            dimension_numbers=("NCH", "OIH", "NCH"),
            precision=hi) + b1[None, :, None]
        g = jnp.tanh(y[:, 0::2, :]) * jax.nn.sigmoid(y[:, 1::2, :])
        x = jnp.einsum("oi,bit->bot", w2[:, :, 0], g,
                       precision=hi) + b2[None, :, None] + x
        outs.append(x)
    h = jax.nn.relu(jnp.mean(jnp.stack(outs, axis=0), axis=0))
    h = jax.nn.relu(jnp.einsum("oi,bit->bot", params["mlp1_w"][:, :, 0], h,
                               precision=hi) + params["mlp1_b"][None, :, None])
    h = jnp.einsum("oi,bit->bot", params["mlp2_w"][:, :, 0], h,
                   precision=hi) + params["mlp2_b"][None, :, None]
    y = jnp.einsum("oi,bit->bot", params["ph_w"][:, :, 0], h,
                   precision=hi) + params["ph_b"][None, :, None]
    B, cin, T = audio.shape
    return jnp.swapaxes(y.reshape(B, cin, output_dim, T), -1, -2)


if __name__ == "__main__":
    # Scaled-down WaveNet config (full model: channel=100 -> pad 128,
    # layer_num=10, repeats=2, output_dim=256; here width 16, 2 x 4 dilation
    # layers, output_dim 32).  T=600 with tile_t=512 gives 2 time tiles per
    # batch element so the cross-tile causal halo path is exercised.
    B, IN_CH, T = 2, 2, 600
    CHANNEL = 16
    LAYER_NUM = 4
    LAYER_REPEATS = 2
    OUTPUT_DIM = 32
    KERNEL_SIZE = 3
    TILE_T = 512
    dilations = tuple(2 ** i for i in range(LAYER_NUM)) * LAYER_REPEATS

    n_keys = 11 + 4 * len(dilations)
    keys = iter(jax.random.split(jax.random.PRNGKey(0), n_keys))

    def nrm(shape):
        return 0.1 * jax.random.normal(next(keys), shape, dtype=jnp.float32)

    audio = jax.random.normal(next(keys), (B, IN_CH, T), dtype=jnp.float32)
    params = {
        "first_w": nrm((CHANNEL, IN_CH, 1)),
        "first_b": nrm((CHANNEL,)),
        "l0_w": nrm((CHANNEL, CHANNEL, KERNEL_SIZE)),
        "l0_b": nrm((CHANNEL,)),
        "mlp1_w": nrm((CHANNEL, CHANNEL, 1)),
        "mlp1_b": nrm((CHANNEL,)),
        "mlp2_w": nrm((CHANNEL, CHANNEL, 1)),
        "mlp2_b": nrm((CHANNEL,)),
        "ph_w": nrm((OUTPUT_DIM * IN_CH, CHANNEL, 1)),
        "ph_b": nrm((OUTPUT_DIM * IN_CH,)),
        "res": [(nrm((2 * CHANNEL, CHANNEL, KERNEL_SIZE)),
                 nrm((2 * CHANNEL,)),
                 nrm((CHANNEL, CHANNEL, 1)),
                 nrm((CHANNEL,))) for _ in dilations],
    }

    ref = reference_wavenet(params, audio, output_dim=OUTPUT_DIM,
                            dilations=dilations, kernel_size=KERNEL_SIZE)

    # Exact path (f32 MXU inputs, f32 accumulation).
    out = wavenet_forward(params, audio, output_dim=OUTPUT_DIM,
                          dilations=dilations, kernel_size=KERNEL_SIZE,
                          tile_t=TILE_T, compute_dtype=jnp.float32)
    out = jax.block_until_ready(out)
    np.testing.assert_allclose(np.asarray(out), np.asarray(ref),
                               atol=1e-3, rtol=1e-3)

    # bf16 MXU-input fast path (recommended on v5e/v6e/v7x), f32 accumulation
    # and f32 bias/gate/residual math.
    out_bf16 = wavenet_forward(params, audio, output_dim=OUTPUT_DIM,
                               dilations=dilations, kernel_size=KERNEL_SIZE,
                               tile_t=TILE_T, compute_dtype=jnp.bfloat16)
    out_bf16 = jax.block_until_ready(out_bf16)
    np.testing.assert_allclose(np.asarray(out_bf16), np.asarray(ref),
                               atol=5e-2, rtol=5e-2)

    print("KERNEL_OK")
</pallas_src>

<mosaic_0001>
module attributes {stable_mosaic.version = 11 : i64} {
  func.func @_wavenet_kernel(%arg0: i32, %arg1: memref<8x512xf32, #tpu.memory_space<vmem>>, %arg2: memref<16x8xf32, #tpu.memory_space<vmem>>, %arg3: memref<16x1xf32, #tpu.memory_space<vmem>>, %arg4: memref<16x16xf32, #tpu.memory_space<vmem>>, %arg5: memref<16x1xf32, #tpu.memory_space<vmem>>, %arg6: memref<8x32x32xf32, #tpu.memory_space<vmem>>, %arg7: memref<8x32x1xf32, #tpu.memory_space<vmem>>, %arg8: memref<8x16x16xf32, #tpu.memory_space<vmem>>, %arg9: memref<8x16x1xf32, #tpu.memory_space<vmem>>, %arg10: memref<16x16xf32, #tpu.memory_space<vmem>>, %arg11: memref<16x1xf32, #tpu.memory_space<vmem>>, %arg12: memref<64x16xf32, #tpu.memory_space<vmem>>, %arg13: memref<64x1xf32, #tpu.memory_space<vmem>>, %arg14: memref<64x512xf32, #tpu.memory_space<vmem>>, %arg15: memref<9x16x128xf32, #tpu.memory_space<vmem>>) attributes {dimension_semantics = [#tpu.dimension_semantics<arbitrary>], iteration_bounds = array<i64: 4>, scalar_prefetch = 0 : i64, scratch_operands = 1 : i64, tpu.core_type = #tpu.core_type<tc>, window_params = [{transform_indices = @transform_0, window_bounds = array<i64: 8, 512>}, {pipeline_mode = #tpu.pipeline_mode<synchronous>, transform_indices = @transform_1, window_bounds = array<i64: 16, 8>}, {pipeline_mode = #tpu.pipeline_mode<synchronous>, transform_indices = @transform_2, window_bounds = array<i64: 16, 1>}, {pipeline_mode = #tpu.pipeline_mode<synchronous>, transform_indices = @transform_3, window_bounds = array<i64: 16, 16>}, {pipeline_mode = #tpu.pipeline_mode<synchronous>, transform_indices = @transform_4, window_bounds = array<i64: 16, 1>}, {pipeline_mode = #tpu.pipeline_mode<synchronous>, transform_indices = @transform_5, window_bounds = array<i64: 8, 32, 32>}, {pipeline_mode = #tpu.pipeline_mode<synchronous>, transform_indices = @transform_6, window_bounds = array<i64: 8, 32, 1>}, {pipeline_mode = #tpu.pipeline_mode<synchronous>, transform_indices = @transform_7, window_bounds = array<i64: 8, 16, 16>}, {pipeline_mode = #tpu.pipeline_mode<synchronous>, transform_indices = @transform_8, window_bounds = array<i64: 8, 16, 1>}, {pipeline_mode = #tpu.pipeline_mode<synchronous>, transform_indices = @transform_9, window_bounds = array<i64: 16, 16>}, {pipeline_mode = #tpu.pipeline_mode<synchronous>, transform_indices = @transform_10, window_bounds = array<i64: 16, 1>}, {pipeline_mode = #tpu.pipeline_mode<synchronous>, transform_indices = @transform_11, window_bounds = array<i64: 64, 16>}, {pipeline_mode = #tpu.pipeline_mode<synchronous>, transform_indices = @transform_12, window_bounds = array<i64: 64, 1>}, {transform_indices = @transform_13, window_bounds = array<i64: 64, 512>}]} {
    %c2_i32 = arith.constant 2 : i32
    %c0_i32 = arith.constant 0 : i32
    %0 = arith.cmpi eq, %c2_i32, %c0_i32 : i32
    %c1_i32 = arith.constant 1 : i32
    %1 = arith.select %0, %c1_i32, %c2_i32 : i32
    %2 = arith.remsi %arg0, %1 : i32
    %c0_i32_0 = arith.constant 0 : i32
    %3 = arith.cmpi ne, %2, %c0_i32_0 : i32
    %c0_i32_1 = arith.constant 0 : i32
    %4 = arith.cmpi slt, %2, %c0_i32_1 : i32
    %c0_i32_2 = arith.constant 0 : i32
    %5 = arith.cmpi slt, %1, %c0_i32_2 : i32
    %6 = arith.xori %4, %5 : i1
    %7 = arith.andi %6, %3 : i1
    %8 = arith.addi %2, %1 : i32
    %9 = arith.select %7, %8, %2 : i32
    %c0_i32_3 = arith.constant 0 : i32
    %10 = arith.cmpi eq, %9, %c0_i32_3 : i32
    %11 = arith.extui %10 : i1 to i32
    %c0_i32_4 = arith.constant 0 : i32
    %12 = arith.cmpi ne, %11, %c0_i32_4 : i32
    scf.if %12 {
      %cst_214 = arith.constant 0.000000e+00 : f32
      %340 = vector.broadcast %cst_214 : f32 to vector<9x16x128xf32>
      %c0_215 = arith.constant 0 : index
      %c0_216 = arith.constant 0 : index
      %c0_217 = arith.constant 0 : index
      %341 = vector.load %arg15[%c0_215, %c0_216, %c0_217] : memref<9x16x128xf32, #tpu.memory_space<vmem>>, vector<9x16x128xf32>
      tpu.vector_store %arg15[%c0_215, %c0_216, %c0_217], %340 {strides = array<i32>} : memref<9x16x128xf32, #tpu.memory_space<vmem>>, vector<9x16x128xf32>,
    } else {
    }
    %c0 = arith.constant 0 : index
    %c0_5 = arith.constant 0 : index
    %13 = vector.load %arg2[%c0, %c0_5] : memref<16x8xf32, #tpu.memory_space<vmem>>, vector<16x8xf32>
    %c0_6 = arith.constant 0 : index
    %c0_7 = arith.constant 0 : index
    %14 = vector.load %arg1[%c0_6, %c0_7] : memref<8x512xf32, #tpu.memory_space<vmem>>, vector<8x512xf32>
    %cst = arith.constant dense<0.000000e+00> : vector<16x512xf32>
    %15 = tpu.matmul %13, %14, %cst {dimension_numbers = #tpu.dot_dimension_numbers<[1], [0], [0], [1], [0, 0, 1, 1], [], []>} : vector<16x8xf32>, vector<8x512xf32>, vector<16x512xf32> -> vector<16x512xf32>
    %c0_8 = arith.constant 0 : index
    %c0_9 = arith.constant 0 : index
    %16 = vector.load %arg3[%c0_8, %c0_9] : memref<16x1xf32, #tpu.memory_space<vmem>>, vector<16x1xf32>
    %17 = vector.broadcast %16 : vector<16x1xf32> to vector<16x512xf32>
    %18 = arith.addf %15, %17 : vector<16x512xf32>
    %c0_10 = arith.constant 0 : index
    %c0_11 = arith.constant 0 : index
    %c0_12 = arith.constant 0 : index
    %19 = vector.load %arg15[%c0_10, %c0_11, %c0_12] : memref<9x16x128xf32, #tpu.memory_space<vmem>>, vector<1x16x128xf32>
    %20 = vector.shape_cast %19 : vector<1x16x128xf32> to vector<16x128xf32>
    %21 = vector.extract_strided_slice %18 {offsets = [0, 384], sizes = [16, 128], strides = [1, 1]} : vector<16x512xf32> to vector<16x128xf32>
    %c0_13 = arith.constant 0 : index
    %c0_14 = arith.constant 0 : index
    %c0_15 = arith.constant 0 : index
    %22 = vector.load %arg15[%c0_13, %c0_14, %c0_15] : memref<9x16x128xf32, #tpu.memory_space<vmem>>, vector<1x16x128xf32>
    %23 = vector.shape_cast %22 : vector<1x16x128xf32> to vector<16x128xf32>
    %24 = vector.shape_cast %21 : vector<16x128xf32> to vector<1x16x128xf32>
    tpu.vector_store %arg15[%c0_13, %c0_14, %c0_15], %24 {strides = array<i32>} : memref<9x16x128xf32, #tpu.memory_space<vmem>>, vector<1x16x128xf32>,
    %25 = tpu.concatenate %20, %18 in 1 : vector<16x128xf32>, vector<16x512xf32> -> vector<16x640xf32>
    %26 = vector.extract_strided_slice %25 {offsets = [0, 127], sizes = [16, 512], strides = [1, 1]} : vector<16x640xf32> to vector<16x512xf32>
    %c0_16 = arith.constant 0 : index
    %c0_17 = arith.constant 0 : index
    %27 = vector.load %arg4[%c0_16, %c0_17] : memref<16x16xf32, #tpu.memory_space<vmem>>, vector<16x16xf32>
    %cst_18 = arith.constant dense<0.000000e+00> : vector<16x512xf32>
    %28 = tpu.matmul %27, %26, %cst_18 {dimension_numbers = #tpu.dot_dimension_numbers<[1], [0], [0], [1], [0, 0, 1, 1], [], []>} : vector<16x16xf32>, vector<16x512xf32>, vector<16x512xf32> -> vector<16x512xf32>
    %c0_19 = arith.constant 0 : index
    %c0_20 = arith.constant 0 : index
    %29 = vector.load %arg5[%c0_19, %c0_20] : memref<16x1xf32, #tpu.memory_space<vmem>>, vector<16x1xf32>
    %30 = vector.broadcast %29 : vector<16x1xf32> to vector<16x512xf32>
    %31 = arith.addf %28, %30 : vector<16x512xf32>
    %cst_21 = arith.constant 0.000000e+00 : f32
    %32 = vector.broadcast %cst_21 : f32 to vector<16x512xf32>
    %33 = arith.maximumf %31, %32 : vector<16x512xf32>
    %cst_22 = arith.constant 0.000000e+00 : f32
    %34 = vector.broadcast %cst_22 : f32 to vector<16x512xf32>
    %c1 = arith.constant 1 : index
    %c0_23 = arith.constant 0 : index
    %c0_24 = arith.constant 0 : index
    %35 = vector.load %arg15[%c1, %c0_23, %c0_24] : memref<9x16x128xf32, #tpu.memory_space<vmem>>, vector<1x16x128xf32>
    %36 = vector.shape_cast %35 : vector<1x16x128xf32> to vector<16x128xf32>
    %37 = vector.extract_strided_slice %33 {offsets = [0, 384], sizes = [16, 128], strides = [1, 1]} : vector<16x512xf32> to vector<16x128xf32>
    %c1_25 = arith.constant 1 : index
    %c0_26 = arith.constant 0 : index
    %c0_27 = arith.constant 0 : index
    %38 = vector.load %arg15[%c1_25, %c0_26, %c0_27] : memref<9x16x128xf32, #tpu.memory_space<vmem>>, vector<1x16x128xf32>
    %39 = vector.shape_cast %38 : vector<1x16x128xf32> to vector<16x128xf32>
    %40 = vector.shape_cast %37 : vector<16x128xf32> to vector<1x16x128xf32>
    tpu.vector_store %arg15[%c1_25, %c0_26, %c0_27], %40 {strides = array<i32>} : memref<9x16x128xf32, #tpu.memory_space<vmem>>, vector<1x16x128xf32>,
    %41 = tpu.concatenate %36, %33 in 1 : vector<16x128xf32>, vector<16x512xf32> -> vector<16x640xf32>
    %42 = vector.extract_strided_slice %41 {offsets = [0, 127], sizes = [16, 512], strides = [1, 1]} : vector<16x640xf32> to vector<16x512xf32>
    %43 = tpu.concatenate %33, %42 in 0 : vector<16x512xf32>, vector<16x512xf32> -> vector<32x512xf32>
    %c0_28 = arith.constant 0 : index
    %c0_29 = arith.constant 0 : index
    %c0_30 = arith.constant 0 : index
    %44 = vector.load %arg6[%c0_28, %c0_29, %c0_30] : memref<8x32x32xf32, #tpu.memory_space<vmem>>, vector<1x32x32xf32>
    %45 = vector.shape_cast %44 : vector<1x32x32xf32> to vector<32x32xf32>
    %cst_31 = arith.constant dense<0.000000e+00> : vector<32x512xf32>
    %46 = tpu.matmul %45, %43, %cst_31 {dimension_numbers = #tpu.dot_dimension_numbers<[1], [0], [0], [1], [0, 0, 1, 1], [], []>} : vector<32x32xf32>, vector<32x512xf32>, vector<32x512xf32> -> vector<32x512xf32>
    %c0_32 = arith.constant 0 : index
    %c0_33 = arith.constant 0 : index
    %c0_34 = arith.constant 0 : index
    %47 = vector.load %arg7[%c0_32, %c0_33, %c0_34] : memref<8x32x1xf32, #tpu.memory_space<vmem>>, vector<1x32x1xf32>
    %48 = vector.shape_cast %47 : vector<1x32x1xf32> to vector<32x1xf32>
    %49 = vector.broadcast %48 : vector<32x1xf32> to vector<32x512xf32>
    %50 = arith.addf %46, %49 : vector<32x512xf32>
    %51 = vector.extract_strided_slice %50 {offsets = [0, 0], sizes = [16, 512], strides = [1, 1]} : vector<32x512xf32> to vector<16x512xf32>
    %52 = math.tanh %51 : vector<16x512xf32>
    %53 = vector.extract_strided_slice %50 {offsets = [16, 0], sizes = [16, 512], strides = [1, 1]} : vector<32x512xf32> to vector<16x512xf32>
    %cst_35 = arith.constant 5.000000e-01 : f32
    %54 = vector.broadcast %cst_35 : f32 to vector<16x512xf32>
    %55 = arith.mulf %54, %53 : vector<16x512xf32>
    %56 = math.tanh %55 : vector<16x512xf32>
    %cst_36 = arith.constant 1.000000e+00 : f32
    %57 = vector.broadcast %cst_36 : f32 to vector<16x512xf32>
    %58 = arith.addf %56, %57 : vector<16x512xf32>
    %cst_37 = arith.constant 5.000000e-01 : f32
    %59 = vector.broadcast %cst_37 : f32 to vector<16x512xf32>
    %60 = arith.mulf %59, %58 : vector<16x512xf32>
    %61 = arith.mulf %52, %60 : vector<16x512xf32>
    %c0_38 = arith.constant 0 : index
    %c0_39 = arith.constant 0 : index
    %c0_40 = arith.constant 0 : index
    %62 = vector.load %arg8[%c0_38, %c0_39, %c0_40] : memref<8x16x16xf32, #tpu.memory_space<vmem>>, vector<1x16x16xf32>
    %63 = vector.shape_cast %62 : vector<1x16x16xf32> to vector<16x16xf32>
    %cst_41 = arith.constant dense<0.000000e+00> : vector<16x512xf32>
    %64 = tpu.matmul %63, %61, %cst_41 {dimension_numbers = #tpu.dot_dimension_numbers<[1], [0], [0], [1], [0, 0, 1, 1], [], []>} : vector<16x16xf32>, vector<16x512xf32>, vector<16x512xf32> -> vector<16x512xf32>
    %c0_42 = arith.constant 0 : index
    %c0_43 = arith.constant 0 : index
    %c0_44 = arith.constant 0 : index
    %65 = vector.load %arg9[%c0_42, %c0_43, %c0_44] : memref<8x16x1xf32, #tpu.memory_space<vmem>>, vector<1x16x1xf32>
    %66 = vector.shape_cast %65 : vector<1x16x1xf32> to vector<16x1xf32>
    %67 = vector.broadcast %66 : vector<16x1xf32> to vector<16x512xf32>
    %68 = arith.addf %64, %67 : vector<16x512xf32>
    %69 = arith.addf %68, %33 : vector<16x512xf32>
    %70 = arith.addf %34, %69 : vector<16x512xf32>
    %c2 = arith.constant 2 : index
    %c0_45 = arith.constant 0 : index
    %c0_46 = arith.constant 0 : index
    %71 = vector.load %arg15[%c2, %c0_45, %c0_46] : memref<9x16x128xf32, #tpu.memory_space<vmem>>, vector<1x16x128xf32>
    %72 = vector.shape_cast %71 : vector<1x16x128xf32> to vector<16x128xf32>
    %73 = vector.extract_strided_slice %69 {offsets = [0, 384], sizes = [16, 128], strides = [1, 1]} : vector<16x512xf32> to vector<16x128xf32>
    %c2_47 = arith.constant 2 : index
    %c0_48 = arith.constant 0 : index
    %c0_49 = arith.constant 0 : index
    %74 = vector.load %arg15[%c2_47, %c0_48, %c0_49] : memref<9x16x128xf32, #tpu.memory_space<vmem>>, vector<1x16x128xf32>
    %75 = vector.shape_cast %74 : vector<1x16x128xf32> to vector<16x128xf32>
    %76 = vector.shape_cast %73 : vector<16x128xf32> to vector<1x16x128xf32>
    tpu.vector_store %arg15[%c2_47, %c0_48, %c0_49], %76 {strides = array<i32>} : memref<9x16x128xf32, #tpu.memory_space<vmem>>, vector<1x16x128xf32>,
    %77 = tpu.concatenate %72, %69 in 1 : vector<16x128xf32>, vector<16x512xf32> -> vector<16x640xf32>
    %78 = vector.extract_strided_slice %77 {offsets = [0, 126], sizes = [16, 512], strides = [1, 1]} : vector<16x640xf32> to vector<16x512xf32>
    %79 = tpu.concatenate %69, %78 in 0 : vector<16x512xf32>, vector<16x512xf32> -> vector<32x512xf32>
    %c1_50 = arith.constant 1 : index
    %c0_51 = arith.constant 0 : index
    %c0_52 = arith.constant 0 : index
    %80 = vector.load %arg6[%c1_50, %c0_51, %c0_52] : memref<8x32x32xf32, #tpu.memory_space<vmem>>, vector<1x32x32xf32>
    %81 = vector.shape_cast %80 : vector<1x32x32xf32> to vector<32x32xf32>
    %cst_53 = arith.constant dense<0.000000e+00> : vector<32x512xf32>
    %82 = tpu.matmul %81, %79, %cst_53 {dimension_numbers = #tpu.dot_dimension_numbers<[1], [0], [0], [1], [0, 0, 1, 1], [], []>} : vector<32x32xf32>, vector<32x512xf32>, vector<32x512xf32> -> vector<32x512xf32>
    %c1_54 = arith.constant 1 : index
    %c0_55 = arith.constant 0 : index
    %c0_56 = arith.constant 0 : index
    %83 = vector.load %arg7[%c1_54, %c0_55, %c0_56] : memref<8x32x1xf32, #tpu.memory_space<vmem>>, vector<1x32x1xf32>
    %84 = vector.shape_cast %83 : vector<1x32x1xf32> to vector<32x1xf32>
    %85 = vector.broadcast %84 : vector<32x1xf32> to vector<32x512xf32>
    %86 = arith.addf %82, %85 : vector<32x512xf32>
    %87 = vector.extract_strided_slice %86 {offsets = [0, 0], sizes = [16, 512], strides = [1, 1]} : vector<32x512xf32> to vector<16x512xf32>
    %88 = math.tanh %87 : vector<16x512xf32>
    %89 = vector.extract_strided_slice %86 {offsets = [16, 0], sizes = [16, 512], strides = [1, 1]} : vector<32x512xf32> to vector<16x512xf32>
    %cst_57 = arith.constant 5.000000e-01 : f32
    %90 = vector.broadcast %cst_57 : f32 to vector<16x512xf32>
    %91 = arith.mulf %90, %89 : vector<16x512xf32>
    %92 = math.tanh %91 : vector<16x512xf32>
    %cst_58 = arith.constant 1.000000e+00 : f32
    %93 = vector.broadcast %cst_58 : f32 to vector<16x512xf32>
    %94 = arith.addf %92, %93 : vector<16x512xf32>
    %cst_59 = arith.constant 5.000000e-01 : f32
    %95 = vector.broadcast %cst_59 : f32 to vector<16x512xf32>
    %96 = arith.mulf %95, %94 : vector<16x512xf32>
    %97 = arith.mulf %88, %96 : vector<16x512xf32>
    %c1_60 = arith.constant 1 : index
    %c0_61 = arith.constant 0 : index
    %c0_62 = arith.constant 0 : index
    %98 = vector.load %arg8[%c1_60, %c0_61, %c0_62] : memref<8x16x16xf32, #tpu.memory_space<vmem>>, vector<1x16x16xf32>
    %99 = vector.shape_cast %98 : vector<1x16x16xf32> to vector<16x16xf32>
    %cst_63 = arith.constant dense<0.000000e+00> : vector<16x512xf32>
    %100 = tpu.matmul %99, %97, %cst_63 {dimension_numbers = #tpu.dot_dimension_numbers<[1], [0], [0], [1], [0, 0, 1, 1], [], []>} : vector<16x16xf32>, vector<16x512xf32>, vector<16x512xf32> -> vector<16x512xf32>
    %c1_64 = arith.constant 1 : index
    %c0_65 = arith.constant 0 : index
    %c0_66 = arith.constant 0 : index
    %101 = vector.load %arg9[%c1_64, %c0_65, %c0_66] : memref<8x16x1xf32, #tpu.memory_space<vmem>>, vector<1x16x1xf32>
    %102 = vector.shape_cast %101 : vector<1x16x1xf32> to vector<16x1xf32>
    %103 = vector.broadcast %102 : vector<16x1xf32> to vector<16x512xf32>
    %104 = arith.addf %100, %103 : vector<16x512xf32>
    %105 = arith.addf %104, %69 : vector<16x512xf32>
    %106 = arith.addf %70, %105 : vector<16x512xf32>
    %c3 = arith.constant 3 : index
    %c0_67 = arith.constant 0 : index
    %c0_68 = arith.constant 0 : index
    %107 = vector.load %arg15[%c3, %c0_67, %c0_68] : memref<9x16x128xf32, #tpu.memory_space<vmem>>, vector<1x16x128xf32>
    %108 = vector.shape_cast %107 : vector<1x16x128xf32> to vector<16x128xf32>
    %109 = vector.extract_strided_slice %105 {offsets = [0, 384], sizes = [16, 128], strides = [1, 1]} : vector<16x512xf32> to vector<16x128xf32>
    %c3_69 = arith.constant 3 : index
    %c0_70 = arith.constant 0 : index
    %c0_71 = arith.constant 0 : index
    %110 = vector.load %arg15[%c3_69, %c0_70, %c0_71] : memref<9x16x128xf32, #tpu.memory_space<vmem>>, vector<1x16x128xf32>
    %111 = vector.shape_cast %110 : vector<1x16x128xf32> to vector<16x128xf32>
    %112 = vector.shape_cast %109 : vector<16x128xf32> to vector<1x16x128xf32>
    tpu.vector_store %arg15[%c3_69, %c0_70, %c0_71], %112 {strides = array<i32>} : memref<9x16x128xf32, #tpu.memory_space<vmem>>, vector<1x16x128xf32>,
    %113 = tpu.concatenate %108, %105 in 1 : vector<16x128xf32>, vector<16x512xf32> -> vector<16x640xf32>
    %114 = vector.extract_strided_slice %113 {offsets = [0, 124], sizes = [16, 512], strides = [1, 1]} : vector<16x640xf32> to vector<16x512xf32>
    %115 = tpu.concatenate %105, %114 in 0 : vector<16x512xf32>, vector<16x512xf32> -> vector<32x512xf32>
    %c2_72 = arith.constant 2 : index
    %c0_73 = arith.constant 0 : index
    %c0_74 = arith.constant 0 : index
    %116 = vector.load %arg6[%c2_72, %c0_73, %c0_74] : memref<8x32x32xf32, #tpu.memory_space<vmem>>, vector<1x32x32xf32>
    %117 = vector.shape_cast %116 : vector<1x32x32xf32> to vector<32x32xf32>
    %cst_75 = arith.constant dense<0.000000e+00> : vector<32x512xf32>
    %118 = tpu.matmul %117, %115, %cst_75 {dimension_numbers = #tpu.dot_dimension_numbers<[1], [0], [0], [1], [0, 0, 1, 1], [], []>} : vector<32x32xf32>, vector<32x512xf32>, vector<32x512xf32> -> vector<32x512xf32>
    %c2_76 = arith.constant 2 : index
    %c0_77 = arith.constant 0 : index
    %c0_78 = arith.constant 0 : index
    %119 = vector.load %arg7[%c2_76, %c0_77, %c0_78] : memref<8x32x1xf32, #tpu.memory_space<vmem>>, vector<1x32x1xf32>
    %120 = vector.shape_cast %119 : vector<1x32x1xf32> to vector<32x1xf32>
    %121 = vector.broadcast %120 : vector<32x1xf32> to vector<32x512xf32>
    %122 = arith.addf %118, %121 : vector<32x512xf32>
    %123 = vector.extract_strided_slice %122 {offsets = [0, 0], sizes = [16, 512], strides = [1, 1]} : vector<32x512xf32> to vector<16x512xf32>
    %124 = math.tanh %123 : vector<16x512xf32>
    %125 = vector.extract_strided_slice %122 {offsets = [16, 0], sizes = [16, 512], strides = [1, 1]} : vector<32x512xf32> to vector<16x512xf32>
    %cst_79 = arith.constant 5.000000e-01 : f32
    %126 = vector.broadcast %cst_79 : f32 to vector<16x512xf32>
    %127 = arith.mulf %126, %125 : vector<16x512xf32>
    %128 = math.tanh %127 : vector<16x512xf32>
    %cst_80 = arith.constant 1.000000e+00 : f32
    %129 = vector.broadcast %cst_80 : f32 to vector<16x512xf32>
    %130 = arith.addf %128, %129 : vector<16x512xf32>
    %cst_81 = arith.constant 5.000000e-01 : f32
    %131 = vector.broadcast %cst_81 : f32 to vector<16x512xf32>
    %132 = arith.mulf %131, %130 : vector<16x512xf32>
    %133 = arith.mulf %124, %132 : vector<16x512xf32>
    %c2_82 = arith.constant 2 : index
    %c0_83 = arith.constant 0 : index
    %c0_84 = arith.constant 0 : index
    %134 = vector.load %arg8[%c2_82, %c0_83, %c0_84] : memref<8x16x16xf32, #tpu.memory_space<vmem>>, vector<1x16x16xf32>
    %135 = vector.shape_cast %134 : vector<1x16x16xf32> to vector<16x16xf32>
    %cst_85 = arith.constant dense<0.000000e+00> : vector<16x512xf32>
    %136 = tpu.matmul %135, %133, %cst_85 {dimension_numbers = #tpu.dot_dimension_numbers<[1], [0], [0], [1], [0, 0, 1, 1], [], []>} : vector<16x16xf32>, vector<16x512xf32>, vector<16x512xf32> -> vector<16x512xf32>
    %c2_86 = arith.constant 2 : index
    %c0_87 = arith.constant 0 : index
    %c0_88 = arith.constant 0 : index
    %137 = vector.load %arg9[%c2_86, %c0_87, %c0_88] : memref<8x16x1xf32, #tpu.memory_space<vmem>>, vector<1x16x1xf32>
    %138 = vector.shape_cast %137 : vector<1x16x1xf32> to vector<16x1xf32>
    %139 = vector.broadcast %138 : vector<16x1xf32> to vector<16x512xf32>
    %140 = arith.addf %136, %139 : vector<16x512xf32>
    %141 = arith.addf %140, %105 : vector<16x512xf32>
    %142 = arith.addf %106, %141 : vector<16x512xf32>
    %c4 = arith.constant 4 : index
    %c0_89 = arith.constant 0 : index
    %c0_90 = arith.constant 0 : index
    %143 = vector.load %arg15[%c4, %c0_89, %c0_90] : memref<9x16x128xf32, #tpu.memory_space<vmem>>, vector<1x16x128xf32>
    %144 = vector.shape_cast %143 : vector<1x16x128xf32> to vector<16x128xf32>
    %145 = vector.extract_strided_slice %141 {offsets = [0, 384], sizes = [16, 128], strides = [1, 1]} : vector<16x512xf32> to vector<16x128xf32>
    %c4_91 = arith.constant 4 : index
    %c0_92 = arith.constant 0 : index
    %c0_93 = arith.constant 0 : index
    %146 = vector.load %arg15[%c4_91, %c0_92, %c0_93] : memref<9x16x128xf32, #tpu.memory_space<vmem>>, vector<1x16x128xf32>
    %147 = vector.shape_cast %146 : vector<1x16x128xf32> to vector<16x128xf32>
    %148 = vector.shape_cast %145 : vector<16x128xf32> to vector<1x16x128xf32>
    tpu.vector_store %arg15[%c4_91, %c0_92, %c0_93], %148 {strides = array<i32>} : memref<9x16x128xf32, #tpu.memory_space<vmem>>, vector<1x16x128xf32>,
    %149 = tpu.concatenate %144, %141 in 1 : vector<16x128xf32>, vector<16x512xf32> -> vector<16x640xf32>
    %150 = vector.extract_strided_slice %149 {offsets = [0, 120], sizes = [16, 512], strides = [1, 1]} : vector<16x640xf32> to vector<16x512xf32>
    %151 = tpu.concatenate %141, %150 in 0 : vector<16x512xf32>, vector<16x512xf32> -> vector<32x512xf32>
    %c3_94 = arith.constant 3 : index
    %c0_95 = arith.constant 0 : index
    %c0_96 = arith.constant 0 : index
    %152 = vector.load %arg6[%c3_94, %c0_95, %c0_96] : memref<8x32x32xf32, #tpu.memory_space<vmem>>, vector<1x32x32xf32>
    %153 = vector.shape_cast %152 : vector<1x32x32xf32> to vector<32x32xf32>
    %cst_97 = arith.constant dense<0.000000e+00> : vector<32x512xf32>
    %154 = tpu.matmul %153, %151, %cst_97 {dimension_numbers = #tpu.dot_dimension_numbers<[1], [0], [0], [1], [0, 0, 1, 1], [], []>} : vector<32x32xf32>, vector<32x512xf32>, vector<32x512xf32> -> vector<32x512xf32>
    %c3_98 = arith.constant 3 : index
    %c0_99 = arith.constant 0 : index
    %c0_100 = arith.constant 0 : index
    %155 = vector.load %arg7[%c3_98, %c0_99, %c0_100] : memref<8x32x1xf32, #tpu.memory_space<vmem>>, vector<1x32x1xf32>
    %156 = vector.shape_cast %155 : vector<1x32x1xf32> to vector<32x1xf32>
    %157 = vector.broadcast %156 : vector<32x1xf32> to vector<32x512xf32>
    %158 = arith.addf %154, %157 : vector<32x512xf32>
    %159 = vector.extract_strided_slice %158 {offsets = [0, 0], sizes = [16, 512], strides = [1, 1]} : vector<32x512xf32> to vector<16x512xf32>
    %160 = math.tanh %159 : vector<16x512xf32>
    %161 = vector.extract_strided_slice %158 {offsets = [16, 0], sizes = [16, 512], strides = [1, 1]} : vector<32x512xf32> to vector<16x512xf32>
    %cst_101 = arith.constant 5.000000e-01 : f32
    %162 = vector.broadcast %cst_101 : f32 to vector<16x512xf32>
    %163 = arith.mulf %162, %161 : vector<16x512xf32>
    %164 = math.tanh %163 : vector<16x512xf32>
    %cst_102 = arith.constant 1.000000e+00 : f32
    %165 = vector.broadcast %cst_102 : f32 to vector<16x512xf32>
    %166 = arith.addf %164, %165 : vector<16x512xf32>
    %cst_103 = arith.constant 5.000000e-01 : f32
    %167 = vector.broadcast %cst_103 : f32 to vector<16x512xf32>
    %168 = arith.mulf %167, %166 : vector<16x512xf32>
    %169 = arith.mulf %160, %168 : vector<16x512xf32>
    %c3_104 = arith.constant 3 : index
    %c0_105 = arith.constant 0 : index
    %c0_106 = arith.constant 0 : index
    %170 = vector.load %arg8[%c3_104, %c0_105, %c0_106] : memref<8x16x16xf32, #tpu.memory_space<vmem>>, vector<1x16x16xf32>
    %171 = vector.shape_cast %170 : vector<1x16x16xf32> to vector<16x16xf32>
    %cst_107 = arith.constant dense<0.000000e+00> : vector<16x512xf32>
    %172 = tpu.matmul %171, %169, %cst_107 {dimension_numbers = #tpu.dot_dimension_numbers<[1], [0], [0], [1], [0, 0, 1, 1], [], []>} : vector<16x16xf32>, vector<16x512xf32>, vector<16x512xf32> -> vector<16x512xf32>
    %c3_108 = arith.constant 3 : index
    %c0_109 = arith.constant 0 : index
    %c0_110 = arith.constant 0 : index
    %173 = vector.load %arg9[%c3_108, %c0_109, %c0_110] : memref<8x16x1xf32, #tpu.memory_space<vmem>>, vector<1x16x1xf32>
    %174 = vector.shape_cast %173 : vector<1x16x1xf32> to vector<16x1xf32>
    %175 = vector.broadcast %174 : vector<16x1xf32> to vector<16x512xf32>
    %176 = arith.addf %172, %175 : vector<16x512xf32>
    %177 = arith.addf %176, %141 : vector<16x512xf32>
    %178 = arith.addf %142, %177 : vector<16x512xf32>
    %c5 = arith.constant 5 : index
    %c0_111 = arith.constant 0 : index
    %c0_112 = arith.constant 0 : index
    %179 = vector.load %arg15[%c5, %c0_111, %c0_112] : memref<9x16x128xf32, #tpu.memory_space<vmem>>, vector<1x16x128xf32>
    %180 = vector.shape_cast %179 : vector<1x16x128xf32> to vector<16x128xf32>
    %181 = vector.extract_strided_slice %177 {offsets = [0, 384], sizes = [16, 128], strides = [1, 1]} : vector<16x512xf32> to vector<16x128xf32>
    %c5_113 = arith.constant 5 : index
    %c0_114 = arith.constant 0 : index
    %c0_115 = arith.constant 0 : index
    %182 = vector.load %arg15[%c5_113, %c0_114, %c0_115] : memref<9x16x128xf32, #tpu.memory_space<vmem>>, vector<1x16x128xf32>
    %183 = vector.shape_cast %182 : vector<1x16x128xf32> to vector<16x128xf32>
    %184 = vector.shape_cast %181 : vector<16x128xf32> to vector<1x16x128xf32>
    tpu.vector_store %arg15[%c5_113, %c0_114, %c0_115], %184 {strides = array<i32>} : memref<9x16x128xf32, #tpu.memory_space<vmem>>, vector<1x16x128xf32>,
    %185 = tpu.concatenate %180, %177 in 1 : vector<16x128xf32>, vector<16x512xf32> -> vector<16x640xf32>
    %186 = vector.extract_strided_slice %185 {offsets = [0, 127], sizes = [16, 512], strides = [1, 1]} : vector<16x640xf32> to vector<16x512xf32>
    %187 = tpu.concatenate %177, %186 in 0 : vector<16x512xf32>, vector<16x512xf32> -> vector<32x512xf32>
    %c4_116 = arith.constant 4 : index
    %c0_117 = arith.constant 0 : index
    %c0_118 = arith.constant 0 : index
    %188 = vector.load %arg6[%c4_116, %c0_117, %c0_118] : memref<8x32x32xf32, #tpu.memory_space<vmem>>, vector<1x32x32xf32>
    %189 = vector.shape_cast %188 : vector<1x32x32xf32> to vector<32x32xf32>
    %cst_119 = arith.constant dense<0.000000e+00> : vector<32x512xf32>
    %190 = tpu.matmul %189, %187, %cst_119 {dimension_numbers = #tpu.dot_dimension_numbers<[1], [0], [0], [1], [0, 0, 1, 1], [], []>} : vector<32x32xf32>, vector<32x512xf32>, vector<32x512xf32> -> vector<32x512xf32>
    %c4_120 = arith.constant 4 : index
    %c0_121 = arith.constant 0 : index
    %c0_122 = arith.constant 0 : index
    %191 = vector.load %arg7[%c4_120, %c0_121, %c0_122] : memref<8x32x1xf32, #tpu.memory_space<vmem>>, vector<1x32x1xf32>
    %192 = vector.shape_cast %191 : vector<1x32x1xf32> to vector<32x1xf32>
    %193 = vector.broadcast %192 : vector<32x1xf32> to vector<32x512xf32>
    %194 = arith.addf %190, %193 : vector<32x512xf32>
    %195 = vector.extract_strided_slice %194 {offsets = [0, 0], sizes = [16, 512], strides = [1, 1]} : vector<32x512xf32> to vector<16x512xf32>
    %196 = math.tanh %195 : vector<16x512xf32>
    %197 = vector.extract_strided_slice %194 {offsets = [16, 0], sizes = [16, 512], strides = [1, 1]} : vector<32x512xf32> to vector<16x512xf32>
    %cst_123 = arith.constant 5.000000e-01 : f32
    %198 = vector.broadcast %cst_123 : f32 to vector<16x512xf32>
    %199 = arith.mulf %198, %197 : vector<16x512xf32>
    %200 = math.tanh %199 : vector<16x512xf32>
    %cst_124 = arith.constant 1.000000e+00 : f32
    %201 = vector.broadcast %cst_124 : f32 to vector<16x512xf32>
    %202 = arith.addf %200, %201 : vector<16x512xf32>
    %cst_125 = arith.constant 5.000000e-01 : f32
    %203 = vector.broadcast %cst_125 : f32 to vector<16x512xf32>
    %204 = arith.mulf %203, %202 : vector<16x512xf32>
    %205 = arith.mulf %196, %204 : vector<16x512xf32>
    %c4_126 = arith.constant 4 : index
    %c0_127 = arith.constant 0 : index
    %c0_128 = arith.constant 0 : index
    %206 = vector.load %arg8[%c4_126, %c0_127, %c0_128] : memref<8x16x16xf32, #tpu.memory_space<vmem>>, vector<1x16x16xf32>
    %207 = vector.shape_cast %206 : vector<1x16x16xf32> to vector<16x16xf32>
    %cst_129 = arith.constant dense<0.000000e+00> : vector<16x512xf32>
    %208 = tpu.matmul %207, %205, %cst_129 {dimension_numbers = #tpu.dot_dimension_numbers<[1], [0], [0], [1], [0, 0, 1, 1], [], []>} : vector<16x16xf32>, vector<16x512xf32>, vector<16x512xf32> -> vector<16x512xf32>
    %c4_130 = arith.constant 4 : index
    %c0_131 = arith.constant 0 : index
    %c0_132 = arith.constant 0 : index
    %209 = vector.load %arg9[%c4_130, %c0_131, %c0_132] : memref<8x16x1xf32, #tpu.memory_space<vmem>>, vector<1x16x1xf32>
    %210 = vector.shape_cast %209 : vector<1x16x1xf32> to vector<16x1xf32>
    %211 = vector.broadcast %210 : vector<16x1xf32> to vector<16x512xf32>
    %212 = arith.addf %208, %211 : vector<16x512xf32>
    %213 = arith.addf %212, %177 : vector<16x512xf32>
    %214 = arith.addf %178, %213 : vector<16x512xf32>
    %c6 = arith.constant 6 : index
    %c0_133 = arith.constant 0 : index
    %c0_134 = arith.constant 0 : index
    %215 = vector.load %arg15[%c6, %c0_133, %c0_134] : memref<9x16x128xf32, #tpu.memory_space<vmem>>, vector<1x16x128xf32>
    %216 = vector.shape_cast %215 : vector<1x16x128xf32> to vector<16x128xf32>
    %217 = vector.extract_strided_slice %213 {offsets = [0, 384], sizes = [16, 128], strides = [1, 1]} : vector<16x512xf32> to vector<16x128xf32>
    %c6_135 = arith.constant 6 : index
    %c0_136 = arith.constant 0 : index
    %c0_137 = arith.constant 0 : index
    %218 = vector.load %arg15[%c6_135, %c0_136, %c0_137] : memref<9x16x128xf32, #tpu.memory_space<vmem>>, vector<1x16x128xf32>
    %219 = vector.shape_cast %218 : vector<1x16x128xf32> to vector<16x128xf32>
    %220 = vector.shape_cast %217 : vector<16x128xf32> to vector<1x16x128xf32>
    tpu.vector_store %arg15[%c6_135, %c0_136, %c0_137], %220 {strides = array<i32>} : memref<9x16x128xf32, #tpu.memory_space<vmem>>, vector<1x16x128xf32>,
    %221 = tpu.concatenate %216, %213 in 1 : vector<16x128xf32>, vector<16x512xf32> -> vector<16x640xf32>
    %222 = vector.extract_strided_slice %221 {offsets = [0, 126], sizes = [16, 512], strides = [1, 1]} : vector<16x640xf32> to vector<16x512xf32>
    %223 = tpu.concatenate %213, %222 in 0 : vector<16x512xf32>, vector<16x512xf32> -> vector<32x512xf32>
    %c5_138 = arith.constant 5 : index
    %c0_139 = arith.constant 0 : index
    %c0_140 = arith.constant 0 : index
    %224 = vector.load %arg6[%c5_138, %c0_139, %c0_140] : memref<8x32x32xf32, #tpu.memory_space<vmem>>, vector<1x32x32xf32>
    %225 = vector.shape_cast %224 : vector<1x32x32xf32> to vector<32x32xf32>
    %cst_141 = arith.constant dense<0.000000e+00> : vector<32x512xf32>
    %226 = tpu.matmul %225, %223, %cst_141 {dimension_numbers = #tpu.dot_dimension_numbers<[1], [0], [0], [1], [0, 0, 1, 1], [], []>} : vector<32x32xf32>, vector<32x512xf32>, vector<32x512xf32> -> vector<32x512xf32>
    %c5_142 = arith.constant 5 : index
    %c0_143 = arith.constant 0 : index
    %c0_144 = arith.constant 0 : index
    %227 = vector.load %arg7[%c5_142, %c0_143, %c0_144] : memref<8x32x1xf32, #tpu.memory_space<vmem>>, vector<1x32x1xf32>
    %228 = vector.shape_cast %227 : vector<1x32x1xf32> to vector<32x1xf32>
    %229 = vector.broadcast %228 : vector<32x1xf32> to vector<32x512xf32>
    %230 = arith.addf %226, %229 : vector<32x512xf32>
    %231 = vector.extract_strided_slice %230 {offsets = [0, 0], sizes = [16, 512], strides = [1, 1]} : vector<32x512xf32> to vector<16x512xf32>
    %232 = math.tanh %231 : vector<16x512xf32>
    %233 = vector.extract_strided_slice %230 {offsets = [16, 0], sizes = [16, 512], strides = [1, 1]} : vector<32x512xf32> to vector<16x512xf32>
    %cst_145 = arith.constant 5.000000e-01 : f32
    %234 = vector.broadcast %cst_145 : f32 to vector<16x512xf32>
    %235 = arith.mulf %234, %233 : vector<16x512xf32>
    %236 = math.tanh %235 : vector<16x512xf32>
    %cst_146 = arith.constant 1.000000e+00 : f32
    %237 = vector.broadcast %cst_146 : f32 to vector<16x512xf32>
    %238 = arith.addf %236, %237 : vector<16x512xf32>
    %cst_147 = arith.constant 5.000000e-01 : f32
    %239 = vector.broadcast %cst_147 : f32 to vector<16x512xf32>
    %240 = arith.mulf %239, %238 : vector<16x512xf32>
    %241 = arith.mulf %232, %240 : vector<16x512xf32>
    %c5_148 = arith.constant 5 : index
    %c0_149 = arith.constant 0 : index
    %c0_150 = arith.constant 0 : index
    %242 = vector.load %arg8[%c5_148, %c0_149, %c0_150] : memref<8x16x16xf32, #tpu.memory_space<vmem>>, vector<1x16x16xf32>
    %243 = vector.shape_cast %242 : vector<1x16x16xf32> to vector<16x16xf32>
    %cst_151 = arith.constant dense<0.000000e+00> : vector<16x512xf32>
    %244 = tpu.matmul %243, %241, %cst_151 {dimension_numbers = #tpu.dot_dimension_numbers<[1], [0], [0], [1], [0, 0, 1, 1], [], []>} : vector<16x16xf32>, vector<16x512xf32>, vector<16x512xf32> -> vector<16x512xf32>
    %c5_152 = arith.constant 5 : index
    %c0_153 = arith.constant 0 : index
    %c0_154 = arith.constant 0 : index
    %245 = vector.load %arg9[%c5_152, %c0_153, %c0_154] : memref<8x16x1xf32, #tpu.memory_space<vmem>>, vector<1x16x1xf32>
    %246 = vector.shape_cast %245 : vector<1x16x1xf32> to vector<16x1xf32>
    %247 = vector.broadcast %246 : vector<16x1xf32> to vector<16x512xf32>
    %248 = arith.addf %244, %247 : vector<16x512xf32>
    %249 = arith.addf %248, %213 : vector<16x512xf32>
    %250 = arith.addf %214, %249 : vector<16x512xf32>
    %c7 = arith.constant 7 : index
    %c0_155 = arith.constant 0 : index
    %c0_156 = arith.constant 0 : index
    %251 = vector.load %arg15[%c7, %c0_155, %c0_156] : memref<9x16x128xf32, #tpu.memory_space<vmem>>, vector<1x16x128xf32>
    %252 = vector.shape_cast %251 : vector<1x16x128xf32> to vector<16x128xf32>
    %253 = vector.extract_strided_slice %249 {offsets = [0, 384], sizes = [16, 128], strides = [1, 1]} : vector<16x512xf32> to vector<16x128xf32>
    %c7_157 = arith.constant 7 : index
    %c0_158 = arith.constant 0 : index
    %c0_159 = arith.constant 0 : index
    %254 = vector.load %arg15[%c7_157, %c0_158, %c0_159] : memref<9x16x128xf32, #tpu.memory_space<vmem>>, vector<1x16x128xf32>
    %255 = vector.shape_cast %254 : vector<1x16x128xf32> to vector<16x128xf32>
    %256 = vector.shape_cast %253 : vector<16x128xf32> to vector<1x16x128xf32>
    tpu.vector_store %arg15[%c7_157, %c0_158, %c0_159], %256 {strides = array<i32>} : memref<9x16x128xf32, #tpu.memory_space<vmem>>, vector<1x16x128xf32>,
    %257 = tpu.concatenate %252, %249 in 1 : vector<16x128xf32>, vector<16x512xf32> -> vector<16x640xf32>
    %258 = vector.extract_strided_slice %257 {offsets = [0, 124], sizes = [16, 512], strides = [1, 1]} : vector<16x640xf32> to vector<16x512xf32>
    %259 = tpu.concatenate %249, %258 in 0 : vector<16x512xf32>, vector<16x512xf32> -> vector<32x512xf32>
    %c6_160 = arith.constant 6 : index
    %c0_161 = arith.constant 0 : index
    %c0_162 = arith.constant 0 : index
    %260 = vector.load %arg6[%c6_160, %c0_161, %c0_162] : memref<8x32x32xf32, #tpu.memory_space<vmem>>, vector<1x32x32xf32>
    %261 = vector.shape_cast %260 : vector<1x32x32xf32> to vector<32x32xf32>
    %cst_163 = arith.constant dense<0.000000e+00> : vector<32x512xf32>
    %262 = tpu.matmul %261, %259, %cst_163 {dimension_numbers = #tpu.dot_dimension_numbers<[1], [0], [0], [1], [0, 0, 1, 1], [], []>} : vector<32x32xf32>, vector<32x512xf32>, vector<32x512xf32> -> vector<32x512xf32>
    %c6_164 = arith.constant 6 : index
    %c0_165 = arith.constant 0 : index
    %c0_166 = arith.constant 0 : index
    %263 = vector.load %arg7[%c6_164, %c0_165, %c0_166] : memref<8x32x1xf32, #tpu.memory_space<vmem>>, vector<1x32x1xf32>
    %264 = vector.shape_cast %263 : vector<1x32x1xf32> to vector<32x1xf32>
    %265 = vector.broadcast %264 : vector<32x1xf32> to vector<32x512xf32>
    %266 = arith.addf %262, %265 : vector<32x512xf32>
    %267 = vector.extract_strided_slice %266 {offsets = [0, 0], sizes = [16, 512], strides = [1, 1]} : vector<32x512xf32> to vector<16x512xf32>
    %268 = math.tanh %267 : vector<16x512xf32>
    %269 = vector.extract_strided_slice %266 {offsets = [16, 0], sizes = [16, 512], strides = [1, 1]} : vector<32x512xf32> to vector<16x512xf32>
    %cst_167 = arith.constant 5.000000e-01 : f32
    %270 = vector.broadcast %cst_167 : f32 to vector<16x512xf32>
    %271 = arith.mulf %270, %269 : vector<16x512xf32>
    %272 = math.tanh %271 : vector<16x512xf32>
    %cst_168 = arith.constant 1.000000e+00 : f32
    %273 = vector.broadcast %cst_168 : f32 to vector<16x512xf32>
    %274 = arith.addf %272, %273 : vector<16x512xf32>
    %cst_169 = arith.constant 5.000000e-01 : f32
    %275 = vector.broadcast %cst_169 : f32 to vector<16x512xf32>
    %276 = arith.mulf %275, %274 : vector<16x512xf32>
    %277 = arith.mulf %268, %276 : vector<16x512xf32>
    %c6_170 = arith.constant 6 : index
    %c0_171 = arith.constant 0 : index
    %c0_172 = arith.constant 0 : index
    %278 = vector.load %arg8[%c6_170, %c0_171, %c0_172] : memref<8x16x16xf32, #tpu.memory_space<vmem>>, vector<1x16x16xf32>
    %279 = vector.shape_cast %278 : vector<1x16x16xf32> to vector<16x16xf32>
    %cst_173 = arith.constant dense<0.000000e+00> : vector<16x512xf32>
    %280 = tpu.matmul %279, %277, %cst_173 {dimension_numbers = #tpu.dot_dimension_numbers<[1], [0], [0], [1], [0, 0, 1, 1], [], []>} : vector<16x16xf32>, vector<16x512xf32>, vector<16x512xf32> -> vector<16x512xf32>
    %c6_174 = arith.constant 6 : index
    %c0_175 = arith.constant 0 : index
    %c0_176 = arith.constant 0 : index
    %281 = vector.load %arg9[%c6_174, %c0_175, %c0_176] : memref<8x16x1xf32, #tpu.memory_space<vmem>>, vector<1x16x1xf32>
    %282 = vector.shape_cast %281 : vector<1x16x1xf32> to vector<16x1xf32>
    %283 = vector.broadcast %282 : vector<16x1xf32> to vector<16x512xf32>
    %284 = arith.addf %280, %283 : vector<16x512xf32>
    %285 = arith.addf %284, %249 : vector<16x512xf32>
    %286 = arith.addf %250, %285 : vector<16x512xf32>
    %c8 = arith.constant 8 : index
    %c0_177 = arith.constant 0 : index
    %c0_178 = arith.constant 0 : index
    %287 = vector.load %arg15[%c8, %c0_177, %c0_178] : memref<9x16x128xf32, #tpu.memory_space<vmem>>, vector<1x16x128xf32>
    %288 = vector.shape_cast %287 : vector<1x16x128xf32> to vector<16x128xf32>
    %289 = vector.extract_strided_slice %285 {offsets = [0, 384], sizes = [16, 128], strides = [1, 1]} : vector<16x512xf32> to vector<16x128xf32>
    %c8_179 = arith.constant 8 : index
    %c0_180 = arith.constant 0 : index
    %c0_181 = arith.constant 0 : index
    %290 = vector.load %arg15[%c8_179, %c0_180, %c0_181] : memref<9x16x128xf32, #tpu.memory_space<vmem>>, vector<1x16x128xf32>
    %291 = vector.shape_cast %290 : vector<1x16x128xf32> to vector<16x128xf32>
    %292 = vector.shape_cast %289 : vector<16x128xf32> to vector<1x16x128xf32>
    tpu.vector_store %arg15[%c8_179, %c0_180, %c0_181], %292 {strides = array<i32>} : memref<9x16x128xf32, #tpu.memory_space<vmem>>, vector<1x16x128xf32>,
    %293 = tpu.concatenate %288, %285 in 1 : vector<16x128xf32>, vector<16x512xf32> -> vector<16x640xf32>
    %294 = vector.extract_strided_slice %293 {offsets = [0, 120], sizes = [16, 512], strides = [1, 1]} : vector<16x640xf32> to vector<16x512xf32>
    %295 = tpu.concatenate %285, %294 in 0 : vector<16x512xf32>, vector<16x512xf32> -> vector<32x512xf32>
    %c7_182 = arith.constant 7 : index
    %c0_183 = arith.constant 0 : index
    %c0_184 = arith.constant 0 : index
    %296 = vector.load %arg6[%c7_182, %c0_183, %c0_184] : memref<8x32x32xf32, #tpu.memory_space<vmem>>, vector<1x32x32xf32>
    %297 = vector.shape_cast %296 : vector<1x32x32xf32> to vector<32x32xf32>
    %cst_185 = arith.constant dense<0.000000e+00> : vector<32x512xf32>
    %298 = tpu.matmul %297, %295, %cst_185 {dimension_numbers = #tpu.dot_dimension_numbers<[1], [0], [0], [1], [0, 0, 1, 1], [], []>} : vector<32x32xf32>, vector<32x512xf32>, vector<32x512xf32> -> vector<32x512xf32>
    %c7_186 = arith.constant 7 : index
    %c0_187 = arith.constant 0 : index
    %c0_188 = arith.constant 0 : index
    %299 = vector.load %arg7[%c7_186, %c0_187, %c0_188] : memref<8x32x1xf32, #tpu.memory_space<vmem>>, vector<1x32x1xf32>
    %300 = vector.shape_cast %299 : vector<1x32x1xf32> to vector<32x1xf32>
    %301 = vector.broadcast %300 : vector<32x1xf32> to vector<32x512xf32>
    %302 = arith.addf %298, %301 : vector<32x512xf32>
    %303 = vector.extract_strided_slice %302 {offsets = [0, 0], sizes = [16, 512], strides = [1, 1]} : vector<32x512xf32> to vector<16x512xf32>
    %304 = math.tanh %303 : vector<16x512xf32>
    %305 = vector.extract_strided_slice %302 {offsets = [16, 0], sizes = [16, 512], strides = [1, 1]} : vector<32x512xf32> to vector<16x512xf32>
    %cst_189 = arith.constant 5.000000e-01 : f32
    %306 = vector.broadcast %cst_189 : f32 to vector<16x512xf32>
    %307 = arith.mulf %306, %305 : vector<16x512xf32>
    %308 = math.tanh %307 : vector<16x512xf32>
    %cst_190 = arith.constant 1.000000e+00 : f32
    %309 = vector.broadcast %cst_190 : f32 to vector<16x512xf32>
    %310 = arith.addf %308, %309 : vector<16x512xf32>
    %cst_191 = arith.constant 5.000000e-01 : f32
    %311 = vector.broadcast %cst_191 : f32 to vector<16x512xf32>
    %312 = arith.mulf %311, %310 : vector<16x512xf32>
    %313 = arith.mulf %304, %312 : vector<16x512xf32>
    %c7_192 = arith.constant 7 : index
    %c0_193 = arith.constant 0 : index
    %c0_194 = arith.constant 0 : index
    %314 = vector.load %arg8[%c7_192, %c0_193, %c0_194] : memref<8x16x16xf32, #tpu.memory_space<vmem>>, vector<1x16x16xf32>
    %315 = vector.shape_cast %314 : vector<1x16x16xf32> to vector<16x16xf32>
    %cst_195 = arith.constant dense<0.000000e+00> : vector<16x512xf32>
    %316 = tpu.matmul %315, %313, %cst_195 {dimension_numbers = #tpu.dot_dimension_numbers<[1], [0], [0], [1], [0, 0, 1, 1], [], []>} : vector<16x16xf32>, vector<16x512xf32>, vector<16x512xf32> -> vector<16x512xf32>
    %c7_196 = arith.constant 7 : index
    %c0_197 = arith.constant 0 : index
    %c0_198 = arith.constant 0 : index
    %317 = vector.load %arg9[%c7_196, %c0_197, %c0_198] : memref<8x16x1xf32, #tpu.memory_space<vmem>>, vector<1x16x1xf32>
    %318 = vector.shape_cast %317 : vector<1x16x1xf32> to vector<16x1xf32>
    %319 = vector.broadcast %318 : vector<16x1xf32> to vector<16x512xf32>
    %320 = arith.addf %316, %319 : vector<16x512xf32>
    %321 = arith.addf %320, %285 : vector<16x512xf32>
    %322 = arith.addf %286, %321 : vector<16x512xf32>
    %cst_199 = arith.constant 1.250000e-01 : f32
    %323 = vector.broadcast %cst_199 : f32 to vector<16x512xf32>
    %324 = arith.mulf %322, %323 : vector<16x512xf32>
    %cst_200 = arith.constant 0.000000e+00 : f32
    %325 = vector.broadcast %cst_200 : f32 to vector<16x512xf32>
    %326 = arith.maximumf %324, %325 : vector<16x512xf32>
    %c0_201 = arith.constant 0 : index
    %c0_202 = arith.constant 0 : index
    %327 = vector.load %arg10[%c0_201, %c0_202] : memref<16x16xf32, #tpu.memory_space<vmem>>, vector<16x16xf32>
    %cst_203 = arith.constant dense<0.000000e+00> : vector<16x512xf32>
    %328 = tpu.matmul %327, %326, %cst_203 {dimension_numbers = #tpu.dot_dimension_numbers<[1], [0], [0], [1], [0, 0, 1, 1], [], []>} : vector<16x16xf32>, vector<16x512xf32>, vector<16x512xf32> -> vector<16x512xf32>
    %c0_204 = arith.constant 0 : index
    %c0_205 = arith.constant 0 : index
    %329 = vector.load %arg11[%c0_204, %c0_205] : memref<16x1xf32, #tpu.memory_space<vmem>>, vector<16x1xf32>
    %330 = vector.broadcast %329 : vector<16x1xf32> to vector<16x512xf32>
    %331 = arith.addf %328, %330 : vector<16x512xf32>
    %cst_206 = arith.constant 0.000000e+00 : f32
    %332 = vector.broadcast %cst_206 : f32 to vector<16x512xf32>
    %333 = arith.maximumf %331, %332 : vector<16x512xf32>
    %c0_207 = arith.constant 0 : index
    %c0_208 = arith.constant 0 : index
    %334 = vector.load %arg12[%c0_207, %c0_208] : memref<64x16xf32, #tpu.memory_space<vmem>>, vector<64x16xf32>
    %cst_209 = arith.constant dense<0.000000e+00> : vector<64x512xf32>
    %335 = tpu.matmul %334, %333, %cst_209 {dimension_numbers = #tpu.dot_dimension_numbers<[1], [0], [0], [1], [0, 0, 1, 1], [], []>} : vector<64x16xf32>, vector<16x512xf32>, vector<64x512xf32> -> vector<64x512xf32>
    %c0_210 = arith.constant 0 : index
    %c0_211 = arith.constant 0 : index
    %336 = vector.load %arg13[%c0_210, %c0_211] : memref<64x1xf32, #tpu.memory_space<vmem>>, vector<64x1xf32>
    %337 = vector.broadcast %336 : vector<64x1xf32> to vector<64x512xf32>
    %338 = arith.addf %335, %337 : vector<64x512xf32>
    %c0_212 = arith.constant 0 : index
    %c0_213 = arith.constant 0 : index
    %339 = vector.load %arg14[%c0_212, %c0_213] : memref<64x512xf32, #tpu.memory_space<vmem>>, vector<64x512xf32>
    tpu.vector_store %arg14[%c0_212, %c0_213], %338 {strides = array<i32>} : memref<64x512xf32, #tpu.memory_space<vmem>>, vector<64x512xf32>,
    return
  }
  func.func @transform_0(%arg0: i32) -> (i32, i32) {
    %c0_i32 = arith.constant 0 : i32
    %c0_i32_0 = arith.constant 0 : i32
    return %c0_i32, %arg0 : i32, i32
  }
  func.func @transform_1(%arg0: i32) -> (i32, i32) {
    %c0_i32 = arith.constant 0 : i32
    %c0_i32_0 = arith.constant 0 : i32
    %c0_i32_1 = arith.constant 0 : i32
    return %c0_i32, %c0_i32_0 : i32, i32
  }
  func.func @transform_2(%arg0: i32) -> (i32, i32) {
    %c0_i32 = arith.constant 0 : i32
    %c0_i32_0 = arith.constant 0 : i32
    %c0_i32_1 = arith.constant 0 : i32
    return %c0_i32, %c0_i32_0 : i32, i32
  }
  func.func @transform_3(%arg0: i32) -> (i32, i32) {
    %c0_i32 = arith.constant 0 : i32
    %c0_i32_0 = arith.constant 0 : i32
    %c0_i32_1 = arith.constant 0 : i32
    return %c0_i32, %c0_i32_0 : i32, i32
  }
  func.func @transform_4(%arg0: i32) -> (i32, i32) {
    %c0_i32 = arith.constant 0 : i32
    %c0_i32_0 = arith.constant 0 : i32
    %c0_i32_1 = arith.constant 0 : i32
    return %c0_i32, %c0_i32_0 : i32, i32
  }
  func.func @transform_5(%arg0: i32) -> (i32, i32, i32) {
    %c0_i32 = arith.constant 0 : i32
    %c0_i32_0 = arith.constant 0 : i32
    %c0_i32_1 = arith.constant 0 : i32
    %c0_i32_2 = arith.constant 0 : i32
    return %c0_i32, %c0_i32_0, %c0_i32_1 : i32, i32, i32
  }
  func.func @transform_6(%arg0: i32) -> (i32, i32, i32) {
    %c0_i32 = arith.constant 0 : i32
    %c0_i32_0 = arith.constant 0 : i32
    %c0_i32_1 = arith.constant 0 : i32
    %c0_i32_2 = arith.constant 0 : i32
    return %c0_i32, %c0_i32_0, %c0_i32_1 : i32, i32, i32
  }
  func.func @transform_7(%arg0: i32) -> (i32, i32, i32) {
    %c0_i32 = arith.constant 0 : i32
    %c0_i32_0 = arith.constant 0 : i32
    %c0_i32_1 = arith.constant 0 : i32
    %c0_i32_2 = arith.constant 0 : i32
    return %c0_i32, %c0_i32_0, %c0_i32_1 : i32, i32, i32
  }
  func.func @transform_8(%arg0: i32) -> (i32, i32, i32) {
    %c0_i32 = arith.constant 0 : i32
    %c0_i32_0 = arith.constant 0 : i32
    %c0_i32_1 = arith.constant 0 : i32
    %c0_i32_2 = arith.constant 0 : i32
    return %c0_i32, %c0_i32_0, %c0_i32_1 : i32, i32, i32
  }
  func.func @transform_9(%arg0: i32) -> (i32, i32) {
    %c0_i32 = arith.constant 0 : i32
    %c0_i32_0 = arith.constant 0 : i32
    %c0_i32_1 = arith.constant 0 : i32
    return %c0_i32, %c0_i32_0 : i32, i32
  }
  func.func @transform_10(%arg0: i32) -> (i32, i32) {
    %c0_i32 = arith.constant 0 : i32
    %c0_i32_0 = arith.constant 0 : i32
    %c0_i32_1 = arith.constant 0 : i32
    return %c0_i32, %c0_i32_0 : i32, i32
  }
  func.func @transform_11(%arg0: i32) -> (i32, i32) {
    %c0_i32 = arith.constant 0 : i32
    %c0_i32_0 = arith.constant 0 : i32
    %c0_i32_1 = arith.constant 0 : i32
    return %c0_i32, %c0_i32_0 : i32, i32
  }
  func.func @transform_12(%arg0: i32) -> (i32, i32) {
    %c0_i32 = arith.constant 0 : i32
    %c0_i32_0 = arith.constant 0 : i32
    %c0_i32_1 = arith.constant 0 : i32
    return %c0_i32, %c0_i32_0 : i32, i32
  }
  func.func @transform_13(%arg0: i32) -> (i32, i32) {
    %c0_i32 = arith.constant 0 : i32
    %c0_i32_0 = arith.constant 0 : i32
    return %c0_i32, %arg0 : i32, i32
  }
}

</mosaic_0001>

<llo_original>
// kernel: _wavenet_forward_impl.1
$region0: #{_wavenet_forward_impl.1}
  #allocation0 [shape = 'u32[]', space=smem, size = 0x4, offset = 0x4, fixed_abs, tag = 'smem constant byte address 0x4 - core index']
  #allocation1 [shape = 'u32[144,128]{1,0:T(1,128)}', space=vmem, size = 0x12000, scoped, tag = 'internal scratch']
  #allocation2 [shape = 'f32[9,16,128]{2,1,0:T(8,128)}', space=vmem, size = 0x12000, scoped, tag = 'scratch operand']
  %s0 = inlined_call_operand.vmem [shape: f32[8,2048], index: 0, kind: input, shape index: {}]
  %s1 = inlined_call_operand.vmem [shape: f32[16,8], index: 1, kind: input, shape index: {}]
  %s2 = inlined_call_operand.vmem [shape: f32[16,1], index: 2, kind: input, shape index: {}]
  %s3 = inlined_call_operand.vmem [shape: f32[16,16], index: 3, kind: input, shape index: {}]
  %s4 = inlined_call_operand.vmem [shape: f32[16,1], index: 4, kind: input, shape index: {}]
  %s5 = inlined_call_operand.vmem [shape: f32[8,32,32], index: 5, kind: input, shape index: {}]
  %s6 = inlined_call_operand.vmem [shape: f32[8,32,1], index: 6, kind: input, shape index: {}]
  %s7 = inlined_call_operand.vmem [shape: f32[8,16,16], index: 7, kind: input, shape index: {}]
  %s8 = inlined_call_operand.vmem [shape: f32[8,16,1], index: 8, kind: input, shape index: {}]
  %s9 = inlined_call_operand.vmem [shape: f32[16,16], index: 9, kind: input, shape index: {}]
  %s10 = inlined_call_operand.vmem [shape: f32[16,1], index: 10, kind: input, shape index: {}]
  %s11 = inlined_call_operand.vmem [shape: f32[64,16], index: 11, kind: input, shape index: {}]
  %s12 = inlined_call_operand.vmem [shape: f32[64,1], index: 12, kind: input, shape index: {}]
  %s13 = inlined_call_operand.vmem [shape: f32[64,2048], index: 13, kind: output, shape index: {}]
  %s14 = sld [smem:[#allocation0]]
  $region108: #{_wavenet_forward_impl.1} parent=0
    _
  %s16 = ssub.s32 1, %s14
  %s17 = scalar_select 0, %s16, %s14
  $region1: #{_wavenet_forward_impl.1} parent=0
    #allocation3 [shape = 'u8[262144]{0}', space=vmem, size = 0x40000, scoped, tag = 'output window, operand 0']
    loop: start=0, step=1, limit=6
    $region2: #{_wavenet_forward_impl.1} parent=1 // loop_pre_header
      _
    $region3: #{_wavenet_forward_impl.1} parent=1 // loop_header
      %s19 = sphi 0, %s23
      %p20 = scmp.ge.s32.totalorder %s19, 6
      %s29 = sphi 0, %s31
      %s32 = sphi 0, %s29
      %s33 = sphi 0, %s32
      %s49 = sphi 0, %s33
      %s53 = sphi 0, %s53
      %s55 = sphi 0, %s53
      %s56 = sphi 0, %s55
      %s70 = sphi 0, %s56
      %s74 = sphi 0, %s74
      %s76 = sphi 0, %s74
      %s77 = sphi 0, %s76
      %s91 = sphi 0, %s77
      %s95 = sphi 0, %s95
      %s97 = sphi 0, %s95
      %s98 = sphi 0, %s97
      %s112 = sphi 0, %s98
      %s116 = sphi 0, %s116
      %s118 = sphi 0, %s116
      %s119 = sphi 0, %s118
      %s133 = sphi 0, %s119
      %s137 = sphi 0, %s137
      %s139 = sphi 0, %s137
      %s140 = sphi 0, %s139
      %s154 = sphi 0, %s140
      %s158 = sphi 0, %s158
      %s160 = sphi 0, %s158
      %s161 = sphi 0, %s160
      %s175 = sphi 0, %s161
      %s179 = sphi 0, %s179
      %s181 = sphi 0, %s179
      %s182 = sphi 0, %s181
      %s196 = sphi 0, %s182
      %s200 = sphi 0, %s200
      %s202 = sphi 0, %s200
      %s203 = sphi 0, %s202
      %s217 = sphi 0, %s203
      %s221 = sphi 0, %s221
      %s223 = sphi 0, %s221
      %s224 = sphi 0, %s223
      %s238 = sphi 0, %s224
      %s242 = sphi 0, %s242
      %s244 = sphi 0, %s242
      %s245 = sphi 0, %s244
      %s259 = sphi 0, %s245
      %s263 = sphi 0, %s263
      %s265 = sphi 0, %s263
      %s266 = sphi 0, %s265
      %s280 = sphi 0, %s266
      %s284 = sphi 0, %s284
      %s286 = sphi 0, %s284
      %s287 = sphi 0, %s286
      %s301 = sphi 0, %s287
      %s307 = sphi 0, %s309
      %s310 = sphi 0, %s307
      %s311 = sphi 0, %s310
      %s327 = sphi 0, %s311
    $region4: #{_wavenet_forward_impl.1} parent=1 // loop_header_branch
      %22 = sbr.rel (%p20) target = $region8
    $region5: #{_wavenet_forward_impl.1} parent=1 // loop_body
      %s24 = ssub.s32 %s19, 1
      %s25 = ssub.s32 %s19, 2
      %s26 = sadd.s32 %s19, 1
      %s27 = ssub.s32 %s19, %s26
      %p28 = scmp.eq.s32.totalorder %s27, 0
      %s30 = sadd.s32 %s29, 1
      %s31 = scalar_select %p28, %s29, %s30
      %p34 = pneg %p28
      %p35 = scmp.eq.s32.totalorder %s19, 3
      %p36 = por %p34, %p35
      %p37 = scmp.ne.s32.totalorder %s29, %s32
      %p38 = scmp.eq.s32.totalorder %s19, 0
      %p39 = por %p37, %p38
      %p40 = scmp.ne.s32.totalorder %s29, %s32
      %p41 = scmp.eq.s32.totalorder %s24, 3
      %p42 = por %p40, %p41
      %p43 = scmp.ne.s32.totalorder %s32, %s33
      %p44 = scmp.eq.s32.totalorder %s24, 0
      %p45 = por %p43, %p44
      %p46 = scmp.ne.s32.totalorder %s32, %s33
      %p47 = scmp.eq.s32.totalorder %s25, 3
      %p48 = por %p46, %p47
      %p50 = scmp.ne.s32.totalorder %s33, %s49
      %p51 = scmp.eq.s32.totalorder %s25, 0
      %p52 = por %p50, %p51
      %s54 = sadd.s32 %s53, 1
      %p57 = scmp.eq.s32.totalorder %s19, 3
      %p58 = scmp.ne.s32.totalorder %s53, %s55
      %p59 = scmp.eq.s32.totalorder %s19, 0
      %p60 = por %p58, %p59
      %p61 = scmp.ne.s32.totalorder %s53, %s55
      %p62 = scmp.eq.s32.totalorder %s24, 3
      %p63 = por %p61, %p62
      %p64 = scmp.ne.s32.totalorder %s55, %s56
      %p65 = scmp.eq.s32.totalorder %s24, 0
      %p66 = por %p64, %p65
      %p67 = scmp.ne.s32.totalorder %s55, %s56
      %p68 = scmp.eq.s32.totalorder %s25, 3
      %p69 = por %p67, %p68
      %p71 = scmp.ne.s32.totalorder %s56, %s70
      %p72 = scmp.eq.s32.totalorder %s25, 0
      %p73 = por %p71, %p72
      %s75 = sadd.s32 %s74, 1
      %p78 = scmp.eq.s32.totalorder %s19, 3
      %p79 = scmp.ne.s32.totalorder %s74, %s76
      %p80 = scmp.eq.s32.totalorder %s19, 0
      %p81 = por %p79, %p80
      %p82 = scmp.ne.s32.totalorder %s74, %s76
      %p83 = scmp.eq.s32.totalorder %s24, 3
      %p84 = por %p82, %p83
      %p85 = scmp.ne.s32.totalorder %s76, %s77
      %p86 = scmp.eq.s32.totalorder %s24, 0
      %p87 = por %p85, %p86
      %p88 = scmp.ne.s32.totalorder %s76, %s77
      %p89 = scmp.eq.s32.totalorder %s25, 3
      %p90 = por %p88, %p89
      %p92 = scmp.ne.s32.totalorder %s77, %s91
      %p93 = scmp.eq.s32.totalorder %s25, 0
      %p94 = por %p92, %p93
      %s96 = sadd.s32 %s95, 1
      %p99 = scmp.eq.s32.totalorder %s19, 3
      %p100 = scmp.ne.s32.totalorder %s95, %s97
      %p101 = scmp.eq.s32.totalorder %s19, 0
      %p102 = por %p100, %p101
      %p103 = scmp.ne.s32.totalorder %s95, %s97
      %p104 = scmp.eq.s32.totalorder %s24, 3
      %p105 = por %p103, %p104
      %p106 = scmp.ne.s32.totalorder %s97, %s98
      %p107 = scmp.eq.s32.totalorder %s24, 0
      %p108 = por %p106, %p107
      %p109 = scmp.ne.s32.totalorder %s97, %s98
      %p110 = scmp.eq.s32.totalorder %s25, 3
      %p111 = por %p109, %p110
      %p113 = scmp.ne.s32.totalorder %s98, %s112
      %p114 = scmp.eq.s32.totalorder %s25, 0
      %p115 = por %p113, %p114
      %s117 = sadd.s32 %s116, 1
      %p120 = scmp.eq.s32.totalorder %s19, 3
      %p121 = scmp.ne.s32.totalorder %s116, %s118
      %p122 = scmp.eq.s32.totalorder %s19, 0
      %p123 = por %p121, %p122
      %p124 = scmp.ne.s32.totalorder %s116, %s118
      %p125 = scmp.eq.s32.totalorder %s24, 3
      %p126 = por %p124, %p125
      %p127 = scmp.ne.s32.totalorder %s118, %s119
      %p128 = scmp.eq.s32.totalorder %s24, 0
      %p129 = por %p127, %p128
      %p130 = scmp.ne.s32.totalorder %s118, %s119
      %p131 = scmp.eq.s32.totalorder %s25, 3
      %p132 = por %p130, %p131
      %p134 = scmp.ne.s32.totalorder %s119, %s133
      %p135 = scmp.eq.s32.totalorder %s25, 0
      %p136 = por %p134, %p135
      %s138 = sadd.s32 %s137, 1
      %p141 = scmp.eq.s32.totalorder %s19, 3
      %p142 = scmp.ne.s32.totalorder %s137, %s139
      %p143 = scmp.eq.s32.totalorder %s19, 0
      %p144 = por %p142, %p143
      %p145 = scmp.ne.s32.totalorder %s137, %s139
      %p146 = scmp.eq.s32.totalorder %s24, 3
      %p147 = por %p145, %p146
      %p148 = scmp.ne.s32.totalorder %s139, %s140
      %p149 = scmp.eq.s32.totalorder %s24, 0
      %p150 = por %p148, %p149
      %p151 = scmp.ne.s32.totalorder %s139, %s140
      %p152 = scmp.eq.s32.totalorder %s25, 3
      %p153 = por %p151, %p152
      %p155 = scmp.ne.s32.totalorder %s140, %s154
      %p156 = scmp.eq.s32.totalorder %s25, 0
      %p157 = por %p155, %p156
      %s159 = sadd.s32 %s158, 1
      %p162 = scmp.eq.s32.totalorder %s19, 3
      %p163 = scmp.ne.s32.totalorder %s158, %s160
      %p164 = scmp.eq.s32.totalorder %s19, 0
      %p165 = por %p163, %p164
      %p166 = scmp.ne.s32.totalorder %s158, %s160
      %p167 = scmp.eq.s32.totalorder %s24, 3
      %p168 = por %p166, %p167
      %p169 = scmp.ne.s32.totalorder %s160, %s161
      %p170 = scmp.eq.s32.totalorder %s24, 0
      %p171 = por %p169, %p170
      %p172 = scmp.ne.s32.totalorder %s160, %s161
      %p173 = scmp.eq.s32.totalorder %s25, 3
      %p174 = por %p172, %p173
      %p176 = scmp.ne.s32.totalorder %s161, %s175
      %p177 = scmp.eq.s32.totalorder %s25, 0
      %p178 = por %p176, %p177
      %s180 = sadd.s32 %s179, 1
      %p183 = scmp.eq.s32.totalorder %s19, 3
      %p184 = scmp.ne.s32.totalorder %s179, %s181
      %p185 = scmp.eq.s32.totalorder %s19, 0
      %p186 = por %p184, %p185
      %p187 = scmp.ne.s32.totalorder %s179, %s181
      %p188 = scmp.eq.s32.totalorder %s24, 3
      %p189 = por %p187, %p188
      %p190 = scmp.ne.s32.totalorder %s181, %s182
      %p191 = scmp.eq.s32.totalorder %s24, 0
      %p192 = por %p190, %p191
      %p193 = scmp.ne.s32.totalorder %s181, %s182
      %p194 = scmp.eq.s32.totalorder %s25, 3
      %p195 = por %p193, %p194
      %p197 = scmp.ne.s32.totalorder %s182, %s196
      %p198 = scmp.eq.s32.totalorder %s25, 0
      %p199 = por %p197, %p198
      %s201 = sadd.s32 %s200, 1
      %p204 = scmp.eq.s32.totalorder %s19, 3
      %p205 = scmp.ne.s32.totalorder %s200, %s202
      %p206 = scmp.eq.s32.totalorder %s19, 0
      %p207 = por %p205, %p206
      %p208 = scmp.ne.s32.totalorder %s200, %s202
      %p209 = scmp.eq.s32.totalorder %s24, 3
      %p210 = por %p208, %p209
      %p211 = scmp.ne.s32.totalorder %s202, %s203
      %p212 = scmp.eq.s32.totalorder %s24, 0
      %p213 = por %p211, %p212
      %p214 = scmp.ne.s32.totalorder %s202, %s203
      %p215 = scmp.eq.s32.totalorder %s25, 3
      %p216 = por %p214, %p215
      %p218 = scmp.ne.s32.totalorder %s203, %s217
      %p219 = scmp.eq.s32.totalorder %s25, 0
      %p220 = por %p218, %p219
      %s222 = sadd.s32 %s221, 1
      %p225 = scmp.eq.s32.totalorder %s19, 3
      %p226 = scmp.ne.s32.totalorder %s221, %s223
      %p227 = scmp.eq.s32.totalorder %s19, 0
      %p228 = por %p226, %p227
      %p229 = scmp.ne.s32.totalorder %s221, %s223
      %p230 = scmp.eq.s32.totalorder %s24, 3
      %p231 = por %p229, %p230
      %p232 = scmp.ne.s32.totalorder %s223, %s224
      %p233 = scmp.eq.s32.totalorder %s24, 0
      %p234 = por %p232, %p233
      %p235 = scmp.ne.s32.totalorder %s223, %s224
      %p236 = scmp.eq.s32.totalorder %s25, 3
      %p237 = por %p235, %p236
      %p239 = scmp.ne.s32.totalorder %s224, %s238
      %p240 = scmp.eq.s32.totalorder %s25, 0
      %p241 = por %p239, %p240
      %s243 = sadd.s32 %s242, 1
      %p246 = scmp.eq.s32.totalorder %s19, 3
      %p247 = scmp.ne.s32.totalorder %s242, %s244
      %p248 = scmp.eq.s32.totalorder %s19, 0
      %p249 = por %p247, %p248
      %p250 = scmp.ne.s32.totalorder %s242, %s244
      %p251 = scmp.eq.s32.totalorder %s24, 3
      %p252 = por %p250, %p251
      %p253 = scmp.ne.s32.totalorder %s244, %s245
      %p254 = scmp.eq.s32.totalorder %s24, 0
      %p255 = por %p253, %p254
      %p256 = scmp.ne.s32.totalorder %s244, %s245
      %p257 = scmp.eq.s32.totalorder %s25, 3
      %p258 = por %p256, %p257
      %p260 = scmp.ne.s32.totalorder %s245, %s259
      %p261 = scmp.eq.s32.totalorder %s25, 0
      %p262 = por %p260, %p261
      %s264 = sadd.s32 %s263, 1
      %p267 = scmp.eq.s32.totalorder %s19, 3
      %p268 = scmp.ne.s32.totalorder %s263, %s265
      %p269 = scmp.eq.s32.totalorder %s19, 0
      %p270 = por %p268, %p269
      %p271 = scmp.ne.s32.totalorder %s263, %s265
      %p272 = scmp.eq.s32.totalorder %s24, 3
      %p273 = por %p271, %p272
      %p274 = scmp.ne.s32.totalorder %s265, %s266
      %p275 = scmp.eq.s32.totalorder %s24, 0
      %p276 = por %p274, %p275
      %p277 = scmp.ne.s32.totalorder %s265, %s266
      %p278 = scmp.eq.s32.totalorder %s25, 3
      %p279 = por %p277, %p278
      %p281 = scmp.ne.s32.totalorder %s266, %s280
      %p282 = scmp.eq.s32.totalorder %s25, 0
      %p283 = por %p281, %p282
      %s285 = sadd.s32 %s284, 1
      %p288 = scmp.eq.s32.totalorder %s19, 3
      %p289 = scmp.ne.s32.totalorder %s284, %s286
      %p290 = scmp.eq.s32.totalorder %s19, 0
      %p291 = por %p289, %p290
      %p292 = scmp.ne.s32.totalorder %s284, %s286
      %p293 = scmp.eq.s32.totalorder %s24, 3
      %p294 = por %p292, %p293
      %p295 = scmp.ne.s32.totalorder %s286, %s287
      %p296 = scmp.eq.s32.totalorder %s24, 0
      %p297 = por %p295, %p296
      %p298 = scmp.ne.s32.totalorder %s286, %s287
      %p299 = scmp.eq.s32.totalorder %s25, 3
      %p300 = por %p298, %p299
      %p302 = scmp.ne.s32.totalorder %s287, %s301
      %p303 = scmp.eq.s32.totalorder %s25, 0
      %p304 = por %p302, %p303
      %s305 = ssub.s32 %s19, %s26
      %p306 = scmp.eq.s32.totalorder %s305, 0
      %s308 = sadd.s32 %s307, 1
      %s309 = scalar_select %p306, %s307, %s308
      %p312 = pneg %p306
      %p313 = scmp.eq.s32.totalorder %s19, 3
      %p314 = por %p312, %p313
      %p315 = scmp.ne.s32.totalorder %s307, %s310
      %p316 = scmp.eq.s32.totalorder %s19, 0
      %p317 = por %p315, %p316
      %p318 = scmp.ne.s32.totalorder %s307, %s310
      %p319 = scmp.eq.s32.totalorder %s24, 3
      %p320 = por %p318, %p319
      %p321 = scmp.ne.s32.totalorder %s310, %s311
      %p322 = scmp.eq.s32.totalorder %s24, 0
      %p323 = por %p321, %p322
      %p324 = scmp.ne.s32.totalorder %s310, %s311
      %p325 = scmp.eq.s32.totalorder %s25, 3
      %p326 = por %p324, %p325
      %p328 = scmp.ne.s32.totalorder %s311, %s327
      %p329 = scmp.eq.s32.totalorder %s25, 0
      %p330 = por %p328, %p329
      %p331 = scmp.le.s32.totalorder 1, %s19
      %p332 = scmp.lt.s32.totalorder %s19, 5
      %p333 = pnand %p331, %p332
      %p334 = pneg %p333
      // Predicated region
      $region9: #{_wavenet_forward_impl.1} parent=5 // pred_check
        _
      $region10: #{_wavenet_forward_impl.1} parent=5 // pred_check_branch
        %336 = sbr.rel (%p333) target = $region12
      $region11: #{_wavenet_forward_impl.1} parent=5 // pred_region
        %s337 = ssub.s32 %s19, 1
        // Predicated region
        $region13: #{_wavenet_forward_impl.1} parent=11 // pred_check
          %p338 = pneg %p66
        $region14: #{_wavenet_forward_impl.1} parent=11 // pred_check_branch
          %340 = sbr.rel (%p338) target = $region16
        $region15: #{_wavenet_forward_impl.1} parent=11 // pred_region
          _
        $region16: #{_wavenet_forward_impl.1} parent=11 // pred_fallthru
          _
        // Predicated region
        $region17: #{_wavenet_forward_impl.1} parent=11 // pred_check
          %p341 = pneg %p87
        $region18: #{_wavenet_forward_impl.1} parent=11 // pred_check_branch
          %343 = sbr.rel (%p341) target = $region20
        $region19: #{_wavenet_forward_impl.1} parent=11 // pred_region
          _
        $region20: #{_wavenet_forward_impl.1} parent=11 // pred_fallthru
          _
        // Predicated region
        $region21: #{_wavenet_forward_impl.1} parent=11 // pred_check
          %p344 = pneg %p108
        $region22: #{_wavenet_forward_impl.1} parent=11 // pred_check_branch
          %346 = sbr.rel (%p344) target = $region24
        $region23: #{_wavenet_forward_impl.1} parent=11 // pred_region
          _
        $region24: #{_wavenet_forward_impl.1} parent=11 // pred_fallthru
          _
        // Predicated region
        $region25: #{_wavenet_forward_impl.1} parent=11 // pred_check
          %p347 = pneg %p129
        $region26: #{_wavenet_forward_impl.1} parent=11 // pred_check_branch
          %349 = sbr.rel (%p347) target = $region28
        $region27: #{_wavenet_forward_impl.1} parent=11 // pred_region
          _
        $region28: #{_wavenet_forward_impl.1} parent=11 // pred_fallthru
          _
        // Predicated region
        $region29: #{_wavenet_forward_impl.1} parent=11 // pred_check
          %p350 = pneg %p150
        $region30: #{_wavenet_forward_impl.1} parent=11 // pred_check_branch
          %352 = sbr.rel (%p350) target = $region32
        $region31: #{_wavenet_forward_impl.1} parent=11 // pred_region
          _
        $region32: #{_wavenet_forward_impl.1} parent=11 // pred_fallthru
          _
        // Predicated region
        $region33: #{_wavenet_forward_impl.1} parent=11 // pred_check
          %p353 = pneg %p171
        $region34: #{_wavenet_forward_impl.1} parent=11 // pred_check_branch
          %355 = sbr.rel (%p353) target = $region36
        $region35: #{_wavenet_forward_impl.1} parent=11 // pred_region
          _
        $region36: #{_wavenet_forward_impl.1} parent=11 // pred_fallthru
          _
        // Predicated region
        $region37: #{_wavenet_forward_impl.1} parent=11 // pred_check
          %p356 = pneg %p192
        $region38: #{_wavenet_forward_impl.1} parent=11 // pred_check_branch
          %358 = sbr.rel (%p356) target = $region40
        $region39: #{_wavenet_forward_impl.1} parent=11 // pred_region
          _
        $region40: #{_wavenet_forward_impl.1} parent=11 // pred_fallthru
          _
        // Predicated region
        $region41: #{_wavenet_forward_impl.1} parent=11 // pred_check
          %p359 = pneg %p213
        $region42: #{_wavenet_forward_impl.1} parent=11 // pred_check_branch
          %361 = sbr.rel (%p359) target = $region44
        $region43: #{_wavenet_forward_impl.1} parent=11 // pred_region
          _
        $region44: #{_wavenet_forward_impl.1} parent=11 // pred_fallthru
          _
        // Predicated region
        $region45: #{_wavenet_forward_impl.1} parent=11 // pred_check
          %p362 = pneg %p234
        $region46: #{_wavenet_forward_impl.1} parent=11 // pred_check_branch
          %364 = sbr.rel (%p362) target = $region48
        $region47: #{_wavenet_forward_impl.1} parent=11 // pred_region
          _
        $region48: #{_wavenet_forward_impl.1} parent=11 // pred_fallthru
          _
        // Predicated region
        $region49: #{_wavenet_forward_impl.1} parent=11 // pred_check
          %p365 = pneg %p255
        $region50: #{_wavenet_forward_impl.1} parent=11 // pred_check_branch
          %367 = sbr.rel (%p365) target = $region52
        $region51: #{_wavenet_forward_impl.1} parent=11 // pred_region
          _
        $region52: #{_wavenet_forward_impl.1} parent=11 // pred_fallthru
          _
        // Predicated region
        $region53: #{_wavenet_forward_impl.1} parent=11 // pred_check
          %p368 = pneg %p276
        $region54: #{_wavenet_forward_impl.1} parent=11 // pred_check_branch
          %370 = sbr.rel (%p368) target = $region56
        $region55: #{_wavenet_forward_impl.1} parent=11 // pred_region
          _
        $region56: #{_wavenet_forward_impl.1} parent=11 // pred_fallthru
          _
        // Predicated region
        $region57: #{_wavenet_forward_impl.1} parent=11 // pred_check
          %p371 = pneg %p297
        $region58: #{_wavenet_forward_impl.1} parent=11 // pred_check_branch
          %373 = sbr.rel (%p371) target = $region60
        $region59: #{_wavenet_forward_impl.1} parent=11 // pred_region
          _
        $region60: #{_wavenet_forward_impl.1} parent=11 // pred_fallthru
          _
      $region12: #{_wavenet_forward_impl.1} parent=5 // pred_fallthru
        _
      %p374 = scmp.lt.s32.totalorder %s19, 4
      // Predicated region
      $region61: #{_wavenet_forward_impl.1} parent=5 // pred_check
        %p375 = pneg %p374
      $region62: #{_wavenet_forward_impl.1} parent=5 // pred_check_branch
        %377 = sbr.rel (%p375) target = $region64
      $region63: #{_wavenet_forward_impl.1} parent=5 // pred_region
        // Predicated region
        $region65: #{_wavenet_forward_impl.1} parent=63 // pred_check
          %p378 = pneg %p39
        $region66: #{_wavenet_forward_impl.1} parent=63 // pred_check_branch
          %380 = sbr.rel (%p378) target = $region68
        $region67: #{_wavenet_forward_impl.1} parent=63 // pred_region
          %s381 = smul.u32 4, %s19
          %p382 = scmp.lt.s32.totalorder %s381, 15
          %s383 = scalar_select %p382, %s381, 15
          %s384 = smul.addr %s383, 8
          %s385 = scalar_lea.vmem %s0, %s384
          %s386 = smul.u32 4, %s19
        $region68: #{_wavenet_forward_impl.1} parent=63 // pred_fallthru
          _
      $region64: #{_wavenet_forward_impl.1} parent=5 // pred_fallthru
        _
      %p387 = scmp.le.s32.totalorder 1, %s19
      %p388 = scmp.lt.s32.totalorder %s19, 5
      %p389 = pnand %p387, %p388
      %p390 = pneg %p389
      // Predicated region
      $region69: #{_wavenet_forward_impl.1} parent=5 // pred_check
        _
      $region70: #{_wavenet_forward_impl.1} parent=5 // pred_check_branch
        %392 = sbr.rel (%p389) target = $region72
      $region71: #{_wavenet_forward_impl.1} parent=5 // pred_region
        %s393 = ssub.s32 %s19, 1
        %s394 = smul.u32 4, %s24
        %p395 = scmp.lt.s32.totalorder %s394, 15
        %s396 = scalar_select %p395, %s394, 15
        %s397 = smul.addr %s396, 8
        %s398 = scalar_lea.vmem %s0, %s397
        %p399 = pneg %p45
        %p400 = pneg %p42
        %p401 = pneg %p66
        %p402 = pneg %p63
        %p403 = pneg %p87
        %p404 = pneg %p84
        %p405 = pneg %p108
        %p406 = pneg %p105
        %p407 = pneg %p129
        %p408 = pneg %p126
        %p409 = pneg %p150
        %p410 = pneg %p147
        %p411 = pneg %p171
        %p412 = pneg %p168
        %p413 = pneg %p192
        %p414 = pneg %p189
        %p415 = pneg %p213
        %p416 = pneg %p210
        %p417 = pneg %p234
        %p418 = pneg %p231
        %p419 = pneg %p255
        %p420 = pneg %p252
        %p421 = pneg %p276
        %p422 = pneg %p273
        %p423 = pneg %p297
        %p424 = pneg %p294
        %p425 = pneg %p323
        %p426 = pneg %p320
        %s427 = sand.u32 %s310, 1
        %s428 = sand.u32 %s310, 1
        %s429 = smul.addr %s428, 256
        %s430 = scalar_lea.vmem [#allocation3], %s429
        %s431 = smul.u32 4, %s24
        %p432 = scmp.lt.s32.totalorder %s431, 15
        %s433 = scalar_select %p432, %s431, 15
        %s434 = smul.addr %s433, 8
        %s435 = scalar_lea.vmem %s0, %s434
        %s436 = smul.u32 4, %s24
        %s437 = smul.u32 4, %s24
        %p438 = scmp.lt.s32.totalorder %s24, 0
        %s439 = ssub.s32 0, %s24
        %s440 = scalar_select %p438, %s439, %s24
        %s441 = sand.u32 %s440, 1
        %s442 = ssub.s32 0, %s441
        %s443 = scalar_select %p438, %s442, %s441
        %p444 = scmp.ne.s32.totalorder %s443, 0
        %p445 = scmp.lt.s32.totalorder %s443, 0
        %p446 = pnand %p445, %p444
        %p447 = pneg %p446
        %s448 = sadd.s32 %s443, 2
        %s449 = scalar_select %p447, %s448, %s443
        %p450 = scmp.eq.s32.totalorder %s449, 0
        // Predicated region
        $region73: #{_wavenet_forward_impl.1} parent=71 // pred_check
          %p451 = pneg %p450
        $region74: #{_wavenet_forward_impl.1} parent=71 // pred_check_branch
          %453 = sbr.rel (%p451) target = $region76
        $region75: #{_wavenet_forward_impl.1} parent=71 // pred_region
          %454 = vst [vmem:[#allocation2] sm:$0xff] 0.0
          %455 = vst [vmem:[#allocation2 + $0x8] sm:$0xff] 0.0
          %456 = vst [vmem:[#allocation2 + $0x10] sm:$0xff] 0.0
          %457 = vst [vmem:[#allocation2 + $0x18] sm:$0xff] 0.0
          %458 = vst [vmem:[#allocation2 + $0x20] sm:$0xff] 0.0
          %459 = vst [vmem:[#allocation2 + $0x28] sm:$0xff] 0.0
          %460 = vst [vmem:[#allocation2 + $0x30] sm:$0xff] 0.0
          %461 = vst [vmem:[#allocation2 + $0x38] sm:$0xff] 0.0
          %462 = vst [vmem:[#allocation2 + $0x40] sm:$0xff] 0.0
          %463 = vst [vmem:[#allocation2 + $0x48] sm:$0xff] 0.0
          %464 = vst [vmem:[#allocation2 + $0x50] sm:$0xff] 0.0
          %465 = vst [vmem:[#allocation2 + $0x58] sm:$0xff] 0.0
          %466 = vst [vmem:[#allocation2 + $0x60] sm:$0xff] 0.0
          %467 = vst [vmem:[#allocation2 + $0x68] sm:$0xff] 0.0
          %468 = vst [vmem:[#allocation2 + $0x70] sm:$0xff] 0.0
          %469 = vst [vmem:[#allocation2 + $0x78] sm:$0xff] 0.0
          %470 = vst [vmem:[#allocation2 + $0x80] sm:$0xff] 0.0
          %471 = vst [vmem:[#allocation2 + $0x88] sm:$0xff] 0.0
        $region76: #{_wavenet_forward_impl.1} parent=71 // pred_fallthru
          _
        %v472 = vld [vmem:[%s1] sm:$0xff]
        %v473 = vld [vmem:[%s1 + $0x8] sm:$0xff]
        %v474 = vld [vmem:[%s435] sm:$0xff]
        %v475 = vld [vmem:[%s435 + $0x8] sm:$0xff]
        %v476 = vld [vmem:[%s435 + $0x10] sm:$0xff]
        %v477 = vld [vmem:[%s435 + $0x18] sm:$0xff]
        %v478 = vld [vmem:[%s2] sm:$0xff]
        %v479 = vld [vmem:[%s2 + $0x8] sm:$0xff]
        %481 = vset.pattern.permute.xlu0 0
        %482 = vperm.xlu0 %481, %v478
        %v483 = vpop.permute.xlu0 %482
        %486 = vset.pattern.permute.xlu0 0
        %487 = vperm.xlu0 %486, %v479
        %v488 = vpop.permute.xlu0 %487
        %vm490 = vcmask 64512
        %v492 = vsel %vm490, %v472, 0
        %v495 = vsel %vm490, %v473, 0
        %497 = vmatprep.subr.mxu0 %v475
        %498 = vmatpush1.msra.mxu0 %v474
        %499 = vmatprep.subr.mxu0 0.0
        %500 = vmatpush1.msra.mxu0 0.0
        %501 = vmatprep.subr.mxu0 0.0
        %502 = vmatpush1.msra.mxu0 0.0
        %503 = vmatprep.subr.mxu0 0.0
        %504 = vmatpush1.msra.mxu0 0.0
        %505 = vmatprep.subr.mxu0 0.0
        %506 = vmatpush1.msra.mxu0 0.0
        %507 = vmatprep.subr.mxu0 0.0
        %508 = vmatpush1.msra.mxu0 0.0
        %509 = vmatprep.subr.mxu0 0.0
        %510 = vmatpush1.msra.mxu0 0.0
        %511 = vmatprep.subr.mxu0 0.0
        %512 = vmatpush1.msra.mxu0 0.0
        %513 = vmatprep.subr.mxu0 0.0
        %514 = vmatpush1.msra.mxu0 0.0
        %515 = vmatprep.subr.mxu0 0.0
        %516 = vmatpush1.msra.mxu0 0.0
        %517 = vmatprep.subr.mxu0 0.0
        %518 = vmatpush1.msra.mxu0 0.0
        %519 = vmatprep.subr.mxu0 0.0
        %520 = vmatpush1.msra.mxu0 0.0
        %521 = vmatprep.subr.mxu0 0.0
        %522 = vmatpush1.msra.mxu0 0.0
        %523 = vmatprep.subr.mxu0 0.0
        %524 = vmatpush1.msra.mxu0 0.0
        %525 = vmatprep.subr.mxu0 0.0
        %526 = vmatpush1.msra.mxu0 0.0
        %527 = vmatprep.subr.mxu0 0.0
        %528 = vmatpush1.msra.mxu0 0.0
        %529 = vmatprep.subr.mxu0 0.0
        %530 = vmatpush1.msra.mxu0 0.0
        %531 = vmatprep.subr.mxu0 0.0
        %532 = vmatpush1.msra.mxu0 0.0
        %533 = vmatprep.subr.mxu0 0.0
        %534 = vmatpush1.msra.mxu0 0.0
        %535 = vmatprep.subr.mxu0 0.0
        %536 = vmatpush1.msra.mxu0 0.0
        %537 = vmatprep.subr.mxu0 0.0
        %538 = vmatpush1.msra.mxu0 0.0
        %539 = vmatprep.subr.mxu0 0.0
        %540 = vmatpush1.msra.mxu0 0.0
        %541 = vmatprep.subr.mxu0 0.0
        %542 = vmatpush1.msra.mxu0 0.0
        %543 = vmatprep.subr.mxu0 0.0
        %544 = vmatpush1.msra.mxu0 0.0
        %545 = vmatprep.subr.mxu0 0.0
        %546 = vmatpush1.msra.mxu0 0.0
        %547 = vmatprep.subr.mxu0 0.0
        %548 = vmatpush1.msra.mxu0 0.0
        %549 = vmatprep.subr.mxu0 0.0
        %550 = vmatpush1.msra.mxu0 0.0
        %551 = vmatprep.subr.mxu0 0.0
        %552 = vmatpush1.msra.mxu0 0.0
        %553 = vmatprep.subr.mxu0 0.0
        %554 = vmatpush1.msra.mxu0 0.0
        %555 = vmatprep.subr.mxu0 0.0
        %556 = vmatpush1.msra.mxu0 0.0
        %557 = vmatprep.subr.mxu0 0.0
        %558 = vmatpush1.msra.mxu0 0.0
        %559 = vmatprep.subr.mxu0 0.0
        %560 = vmatpush1.msra.mxu0 0.0
        %561 = vmatprep.mubr.f32.mxu0 0.0
        %562 = vmatmul.mubr.f32.gmra.mrb[0].mxu0 %v492
        %v563 = vpop.f32.mrb[0].mxu0
        %v564 = vadd.f32 %v483, %v563
        %v565 = vpop.f32.mrb[0].mxu0
        %v566 = vadd.f32 %v483, %v565
        %567 = vmatprep.mubr.f32.mxu0 0.0
        %568 = vmatmul.mubr.f32.gmra.mrb[0].mxu0 %v495
        %v569 = vpop.f32.mrb[0].mxu0
        %v570 = vadd.f32 %v488, %v569
        %v571 = vpop.f32.mrb[0].mxu0
        %v572 = vadd.f32 %v488, %v571
        %573 = vdwg.mxu0
        %574 = vmatprep.subr.mxu0 %v477
        %575 = vmatpush1.msra.mxu0 %v476
        %576 = vmatprep.subr.mxu0 0.0
        %577 = vmatpush1.msra.mxu0 0.0
        %578 = vmatprep.subr.mxu0 0.0
        %579 = vmatpush1.msra.mxu0 0.0
        %580 = vmatprep.subr.mxu0 0.0
        %581 = vmatpush1.msra.mxu0 0.0
        %582 = vmatprep.subr.mxu0 0.0
        %583 = vmatpush1.msra.mxu0 0.0
        %584 = vmatprep.subr.mxu0 0.0
        %585 = vmatpush1.msra.mxu0 0.0
        %586 = vmatprep.subr.mxu0 0.0
        %587 = vmatpush1.msra.mxu0 0.0
        %588 = vmatprep.subr.mxu0 0.0
        %589 = vmatpush1.msra.mxu0 0.0
        %590 = vmatprep.subr.mxu0 0.0
        %591 = vmatpush1.msra.mxu0 0.0
        %592 = vmatprep.subr.mxu0 0.0
        %593 = vmatpush1.msra.mxu0 0.0
        %594 = vmatprep.subr.mxu0 0.0
        %595 = vmatpush1.msra.mxu0 0.0
        %596 = vmatprep.subr.mxu0 0.0
        %597 = vmatpush1.msra.mxu0 0.0
        %598 = vmatprep.subr.mxu0 0.0
        %599 = vmatpush1.msra.mxu0 0.0
        %600 = vmatprep.subr.mxu0 0.0
        %601 = vmatpush1.msra.mxu0 0.0
        %602 = vmatprep.subr.mxu0 0.0
        %603 = vmatpush1.msra.mxu0 0.0
        %604 = vmatprep.subr.mxu0 0.0
        %605 = vmatpush1.msra.mxu0 0.0
        %606 = vmatprep.subr.mxu0 0.0
        %607 = vmatpush1.msra.mxu0 0.0
        %608 = vmatprep.subr.mxu0 0.0
        %609 = vmatpush1.msra.mxu0 0.0
        %610 = vmatprep.subr.mxu0 0.0
        %611 = vmatpush1.msra.mxu0 0.0
        %612 = vmatprep.subr.mxu0 0.0
        %613 = vmatpush1.msra.mxu0 0.0
        %614 = vmatprep.subr.mxu0 0.0
        %615 = vmatpush1.msra.mxu0 0.0
        %616 = vmatprep.subr.mxu0 0.0
        %617 = vmatpush1.msra.mxu0 0.0
        %618 = vmatprep.subr.mxu0 0.0
        %619 = vmatpush1.msra.mxu0 0.0
        %620 = vmatprep.subr.mxu0 0.0
        %621 = vmatpush1.msra.mxu0 0.0
        %622 = vmatprep.subr.mxu0 0.0
        %623 = vmatpush1.msra.mxu0 0.0
        %624 = vmatprep.subr.mxu0 0.0
        %625 = vmatpush1.msra.mxu0 0.0
        %626 = vmatprep.subr.mxu0 0.0
        %627 = vmatpush1.msra.mxu0 0.0
        %628 = vmatprep.subr.mxu0 0.0
        %629 = vmatpush1.msra.mxu0 0.0
        %630 = vmatprep.subr.mxu0 0.0
        %631 = vmatpush1.msra.mxu0 0.0
        %632 = vmatprep.subr.mxu0 0.0
        %633 = vmatpush1.msra.mxu0 0.0
        %634 = vmatprep.subr.mxu0 0.0
        %635 = vmatpush1.msra.mxu0 0.0
        %636 = vmatprep.subr.mxu0 0.0
        %637 = vmatpush1.msra.mxu0 0.0
        %638 = vmatprep.mubr.f32.mxu0 0.0
        %639 = vmatmul.mubr.f32.gmra.mrb[0].mxu0 %v492
        %v640 = vpop.f32.mrb[0].mxu0
        %v641 = vadd.f32 %v483, %v640
        %v642 = vpop.f32.mrb[0].mxu0
        %v643 = vadd.f32 %v483, %v642
        %644 = vmatprep.mubr.f32.mxu0 0.0
        %645 = vmatmul.mubr.f32.gmra.mrb[0].mxu0 %v495
        %v646 = vpop.f32.mrb[0].mxu0
        %v647 = vadd.f32 %v488, %v646
        %v648 = vpop.f32.mrb[0].mxu0
        %v649 = vadd.f32 %v488, %v648
        %650 = vdwg.mxu0
        %v651 = vld [vmem:[#allocation2] sm:$0xff]
        %v652 = vld [vmem:[#allocation2 + $0x8] sm:$0xff]
        %653 = vst [vmem:[#allocation2] sm:$0xff] %v643
        %654 = vst [vmem:[#allocation2 + $0x8] sm:$0xff] %v649
        %v655 = vld [vmem:[%s3] sm:$0xff]
        %v656 = vld [vmem:[%s3 + $0x8] sm:$0xff]
        %v657 = vld [vmem:[%s4] sm:$0xff]
        %v658 = vld [vmem:[%s4 + $0x8] sm:$0xff]
        %660 = vset.pattern.permute.xlu0 0
        %661 = vperm.xlu0 %660, %v657
        %v662 = vpop.permute.xlu0 %661
        %665 = vset.pattern.permute.xlu0 0
        %666 = vperm.xlu0 %665, %v658
        %v667 = vpop.permute.xlu0 %666
        %679 = vrot.lane.b32.xlu0 %v651, 1
        %v680 = vpop.permute.xlu0 %679
        %681 = vrot.lane.b32.xlu0 %v564, 1
        %v682 = vpop.permute.xlu0 %681
        %683 = vrot.lane.b32.xlu0 %v566, 1
        %v684 = vpop.permute.xlu0 %683
        %685 = vrot.lane.b32.xlu0 %v641, 1
        %v686 = vpop.permute.xlu0 %685
        %687 = vrot.lane.b32.xlu0 %v643, 1
        %v688 = vpop.permute.xlu0 %687
        %689 = vrot.lane.b32.xlu0 %v652, 1
        %v690 = vpop.permute.xlu0 %689
        %691 = vrot.lane.b32.xlu0 %v570, 1
        %v692 = vpop.permute.xlu0 %691
        %693 = vrot.lane.b32.xlu0 %v572, 1
        %v694 = vpop.permute.xlu0 %693
        %695 = vrot.lane.b32.xlu0 %v647, 1
        %v696 = vpop.permute.xlu0 %695
        %697 = vrot.lane.b32.xlu0 %v649, 1
        %v698 = vpop.permute.xlu0 %697
        %vm699 = vcmask 7168
        %v700 = vsel %vm699, %v680, %v682
        %v701 = vsel %vm699, %v682, %v684
        %v702 = vsel %vm699, %v684, %v686
        %v703 = vsel %vm699, %v686, %v688
        %v704 = vsel %vm699, %v690, %v692
        %v705 = vsel %vm699, %v692, %v694
        %v706 = vsel %vm699, %v694, %v696
        %v707 = vsel %vm699, %v696, %v698
        %vm716 = vcmask 130048
        %v718 = vsel %vm716, %v655, 0
        %v721 = vsel %vm716, %v656, 0
        %723 = vmatprep.subr.mxu0 %v701
        %724 = vmatpush1.msra.mxu0 %v700
        %725 = vmatprep.subr.mxu0 %v705
        %726 = vmatpush1.msra.mxu0 %v704
        %727 = vmatprep.subr.mxu0 0.0
        %728 = vmatpush1.msra.mxu0 0.0
        %729 = vmatprep.subr.mxu0 0.0
        %730 = vmatpush1.msra.mxu0 0.0
        %731 = vmatprep.subr.mxu0 0.0
        %732 = vmatpush1.msra.mxu0 0.0
        %733 = vmatprep.subr.mxu0 0.0
        %734 = vmatpush1.msra.mxu0 0.0
        %735 = vmatprep.subr.mxu0 0.0
        %736 = vmatpush1.msra.mxu0 0.0
        %737 = vmatprep.subr.mxu0 0.0
        %738 = vmatpush1.msra.mxu0 0.0
        %739 = vmatprep.subr.mxu0 0.0
        %740 = vmatpush1.msra.mxu0 0.0
        %741 = vmatprep.subr.mxu0 0.0
        %742 = vmatpush1.msra.mxu0 0.0
        %743 = vmatprep.subr.mxu0 0.0
        %744 = vmatpush1.msra.mxu0 0.0
        %745 = vmatprep.subr.mxu0 0.0
        %746 = vmatpush1.msra.mxu0 0.0
        %747 = vmatprep.subr.mxu0 0.0
        %748 = vmatpush1.msra.mxu0 0.0
        %749 = vmatprep.subr.mxu0 0.0
        %750 = vmatpush1.msra.mxu0 0.0
        %751 = vmatprep.subr.mxu0 0.0
        %752 = vmatpush1.msra.mxu0 0.0
        %753 = vmatprep.subr.mxu0 0.0
        %754 = vmatpush1.msra.mxu0 0.0
        %755 = vmatprep.subr.mxu0 0.0
        %756 = vmatpush1.msra.mxu0 0.0
        %757 = vmatprep.subr.mxu0 0.0
        %758 = vmatpush1.msra.mxu0 0.0
        %759 = vmatprep.subr.mxu0 0.0
        %760 = vmatpush1.msra.mxu0 0.0
        %761 = vmatprep.subr.mxu0 0.0
        %762 = vmatpush1.msra.mxu0 0.0
        %763 = vmatprep.subr.mxu0 0.0
        %764 = vmatpush1.msra.mxu0 0.0
        %765 = vmatprep.subr.mxu0 0.0
        %766 = vmatpush1.msra.mxu0 0.0
        %767 = vmatprep.subr.mxu0 0.0
        %768 = vmatpush1.msra.mxu0 0.0
        %769 = vmatprep.subr.mxu0 0.0
        %770 = vmatpush1.msra.mxu0 0.0
        %771 = vmatprep.subr.mxu0 0.0
        %772 = vmatpush1.msra.mxu0 0.0
        %773 = vmatprep.subr.mxu0 0.0
        %774 = vmatpush1.msra.mxu0 0.0
        %775 = vmatprep.subr.mxu0 0.0
        %776 = vmatpush1.msra.mxu0 0.0
        %777 = vmatprep.subr.mxu0 0.0
        %778 = vmatpush1.msra.mxu0 0.0
        %779 = vmatprep.subr.mxu0 0.0
        %780 = vmatpush1.msra.mxu0 0.0
        %781 = vmatprep.subr.mxu0 0.0
        %782 = vmatpush1.msra.mxu0 0.0
        %783 = vmatprep.subr.mxu0 0.0
        %784 = vmatpush1.msra.mxu0 0.0
        %785 = vmatprep.subr.mxu0 0.0
        %786 = vmatpush1.msra.mxu0 0.0
        %787 = vmatprep.mubr.f32.mxu0 0.0
        %788 = vmatmul.mubr.f32.gmra.mrb[0].mxu0 %v718
        %v789 = vpop.f32.mrb[0].mxu0
        %v790 = vadd.f32 %v662, %v789
        %v791 = vpop.f32.mrb[0].mxu0
        %v792 = vadd.f32 %v662, %v791
        %793 = vmatprep.mubr.f32.mxu0 0.0
        %794 = vmatmul.mubr.f32.gmra.mrb[0].mxu0 %v721
        %v795 = vpop.f32.mrb[0].mxu0
        %v796 = vadd.f32 %v667, %v795
        %v797 = vpop.f32.mrb[0].mxu0
        %v798 = vadd.f32 %v667, %v797
        %799 = vdwg.mxu0
        %800 = vmatprep.subr.mxu0 %v703
        %801 = vmatpush1.msra.mxu0 %v702
        %802 = vmatprep.subr.mxu0 %v707
        %803 = vmatpush1.msra.mxu0 %v706
        %804 = vmatprep.subr.mxu0 0.0
        %805 = vmatpush1.msra.mxu0 0.0
        %806 = vmatprep.subr.mxu0 0.0
        %807 = vmatpush1.msra.mxu0 0.0
        %808 = vmatprep.subr.mxu0 0.0
        %809 = vmatpush1.msra.mxu0 0.0
        %810 = vmatprep.subr.mxu0 0.0
        %811 = vmatpush1.msra.mxu0 0.0
        %812 = vmatprep.subr.mxu0 0.0
        %813 = vmatpush1.msra.mxu0 0.0
        %814 = vmatprep.subr.mxu0 0.0
        %815 = vmatpush1.msra.mxu0 0.0
        %816 = vmatprep.subr.mxu0 0.0
        %817 = vmatpush1.msra.mxu0 0.0
        %818 = vmatprep.subr.mxu0 0.0
        %819 = vmatpush1.msra.mxu0 0.0
        %820 = vmatprep.subr.mxu0 0.0
        %821 = vmatpush1.msra.mxu0 0.0
        %822 = vmatprep.subr.mxu0 0.0
        %823 = vmatpush1.msra.mxu0 0.0
        %824 = vmatprep.subr.mxu0 0.0
        %825 = vmatpush1.msra.mxu0 0.0
        %826 = vmatprep.subr.mxu0 0.0
        %827 = vmatpush1.msra.mxu0 0.0
        %828 = vmatprep.subr.mxu0 0.0
        %829 = vmatpush1.msra.mxu0 0.0
        %830 = vmatprep.subr.mxu0 0.0
        %831 = vmatpush1.msra.mxu0 0.0
        %832 = vmatprep.subr.mxu0 0.0
        %833 = vmatpush1.msra.mxu0 0.0
        %834 = vmatprep.subr.mxu0 0.0
        %835 = vmatpush1.msra.mxu0 0.0
        %836 = vmatprep.subr.mxu0 0.0
        %837 = vmatpush1.msra.mxu0 0.0
        %838 = vmatprep.subr.mxu0 0.0
        %839 = vmatpush1.msra.mxu0 0.0
        %840 = vmatprep.subr.mxu0 0.0
        %841 = vmatpush1.msra.mxu0 0.0
        %842 = vmatprep.subr.mxu0 0.0
        %843 = vmatpush1.msra.mxu0 0.0
        %844 = vmatprep.subr.mxu0 0.0
        %845 = vmatpush1.msra.mxu0 0.0
        %846 = vmatprep.subr.mxu0 0.0
        %847 = vmatpush1.msra.mxu0 0.0
        %848 = vmatprep.subr.mxu0 0.0
        %849 = vmatpush1.msra.mxu0 0.0
        %850 = vmatprep.subr.mxu0 0.0
        %851 = vmatpush1.msra.mxu0 0.0
        %852 = vmatprep.subr.mxu0 0.0
        %853 = vmatpush1.msra.mxu0 0.0
        %854 = vmatprep.subr.mxu0 0.0
        %855 = vmatpush1.msra.mxu0 0.0
        %856 = vmatprep.subr.mxu0 0.0
        %857 = vmatpush1.msra.mxu0 0.0
        %858 = vmatprep.subr.mxu0 0.0
        %859 = vmatpush1.msra.mxu0 0.0
        %860 = vmatprep.subr.mxu0 0.0
        %861 = vmatpush1.msra.mxu0 0.0
        %862 = vmatprep.subr.mxu0 0.0
        %863 = vmatpush1.msra.mxu0 0.0
        %864 = vmatprep.mubr.f32.mxu0 0.0
        %865 = vmatmul.mubr.f32.gmra.mrb[0].mxu0 %v718
        %v866 = vpop.f32.mrb[0].mxu0
        %v867 = vadd.f32 %v662, %v866
        %v868 = vpop.f32.mrb[0].mxu0
        %v869 = vadd.f32 %v662, %v868
        %870 = vmatprep.mubr.f32.mxu0 0.0
        %871 = vmatmul.mubr.f32.gmra.mrb[0].mxu0 %v721
        %v872 = vpop.f32.mrb[0].mxu0
        %v873 = vadd.f32 %v667, %v872
        %v874 = vpop.f32.mrb[0].mxu0
        %v875 = vadd.f32 %v667, %v874
        %876 = vdwg.mxu0
        %v877 = vmax.f32 %v790, 0.0
        %v878 = vmax.f32 %v792, 0.0
        %v879 = vmax.f32 %v867, 0.0
        %v880 = vmax.f32 %v869, 0.0
        %v881 = vmax.f32 %v796, 0.0
        %v882 = vmax.f32 %v798, 0.0
        %v883 = vmax.f32 %v873, 0.0
        %v884 = vmax.f32 %v875, 0.0
        %s885 = scalar_lea.vmem [#allocation2], 16
        %v886 = vld [vmem:[%s885] sm:$0xff]
        %v887 = vld [vmem:[%s885 + $0x8] sm:$0xff]
        %888 = vst [vmem:[%s885] sm:$0xff] %v880
        %889 = vst [vmem:[%s885 + $0x8] sm:$0xff] %v884
        %900 = vrot.lane.b32.xlu0 %v886, 1
        %v901 = vpop.permute.xlu0 %900
        %902 = vrot.lane.b32.xlu0 %v877, 1
        %v903 = vpop.permute.xlu0 %902
        %904 = vrot.lane.b32.xlu0 %v878, 1
        %v905 = vpop.permute.xlu0 %904
        %906 = vrot.lane.b32.xlu0 %v879, 1
        %v907 = vpop.permute.xlu0 %906
        %908 = vrot.lane.b32.xlu0 %v880, 1
        %v909 = vpop.permute.xlu0 %908
        %910 = vrot.lane.b32.xlu0 %v887, 1
        %v911 = vpop.permute.xlu0 %910
        %912 = vrot.lane.b32.xlu0 %v881, 1
        %v913 = vpop.permute.xlu0 %912
        %914 = vrot.lane.b32.xlu0 %v882, 1
        %v915 = vpop.permute.xlu0 %914
        %916 = vrot.lane.b32.xlu0 %v883, 1
        %v917 = vpop.permute.xlu0 %916
        %918 = vrot.lane.b32.xlu0 %v884, 1
        %v919 = vpop.permute.xlu0 %918
        %v920 = vsel %vm699, %v901, %v903
        %v921 = vsel %vm699, %v903, %v905
        %v922 = vsel %vm699, %v905, %v907
        %v923 = vsel %vm699, %v907, %v909
        %v924 = vsel %vm699, %v911, %v913
        %v925 = vsel %vm699, %v913, %v915
        %v926 = vsel %vm699, %v915, %v917
        %v927 = vsel %vm699, %v917, %v919
        %v936 = vld [vmem:[%s5] sm:$0xff]
        %v937 = vld [vmem:[%s5 + $0x8] sm:$0xff]
        %v938 = vld [vmem:[%s5 + $0x10] sm:$0xff]
        %v939 = vld [vmem:[%s5 + $0x18] sm:$0xff]
        %v940 = vld [vmem:[%s6] sm:$0xff]
        %v941 = vld [vmem:[%s6 + $0x8] sm:$0xff]
        %v942 = vld [vmem:[%s6 + $0x10] sm:$0xff]
        %v943 = vld [vmem:[%s6 + $0x18] sm:$0xff]
        %945 = vset.pattern.permute.xlu0 0
        %946 = vperm.xlu0 %945, %v940
        %v947 = vpop.permute.xlu0 %946
        %950 = vset.pattern.permute.xlu0 0
        %951 = vperm.xlu0 %950, %v941
        %v952 = vpop.permute.xlu0 %951
        %955 = vset.pattern.permute.xlu0 0
        %956 = vperm.xlu0 %955, %v942
        %v957 = vpop.permute.xlu0 %956
        %960 = vset.pattern.permute.xlu0 0
        %961 = vperm.xlu0 %960, %v943
        %v962 = vpop.permute.xlu0 %961
        %vm964 = vcmask 261120
        %v966 = vsel %vm964, %v936, 0
        %v969 = vsel %vm964, %v937, 0
        %v972 = vsel %vm964, %v938, 0
        %v975 = vsel %vm964, %v939, 0
        %977 = vmatprep.subr.mxu0 %v878
        %978 = vmatpush1.msra.mxu0 %v877
        %979 = vmatprep.subr.mxu0 %v882
        %980 = vmatpush1.msra.mxu0 %v881
        %981 = vmatprep.subr.mxu0 %v921
        %982 = vmatpush1.msra.mxu0 %v920
        %983 = vmatprep.subr.mxu0 %v925
        %984 = vmatpush1.msra.mxu0 %v924
        %985 = vmatprep.subr.mxu0 0.0
        %986 = vmatpush1.msra.mxu0 0.0
        %987 = vmatprep.subr.mxu0 0.0
        %988 = vmatpush1.msra.mxu0 0.0
        %989 = vmatprep.subr.mxu0 0.0
        %990 = vmatpush1.msra.mxu0 0.0
        %991 = vmatprep.subr.mxu0 0.0
        %992 = vmatpush1.msra.mxu0 0.0
        %993 = vmatprep.subr.mxu0 0.0
        %994 = vmatpush1.msra.mxu0 0.0
        %995 = vmatprep.subr.mxu0 0.0
        %996 = vmatpush1.msra.mxu0 0.0
        %997 = vmatprep.subr.mxu0 0.0
        %998 = vmatpush1.msra.mxu0 0.0
        %999 = vmatprep.subr.mxu0 0.0
        %1000 = vmatpush1.msra.mxu0 0.0
        %1001 = vmatprep.subr.mxu0 0.0
        %1002 = vmatpush1.msra.mxu0 0.0
        %1003 = vmatprep.subr.mxu0 0.0
        %1004 = vmatpush1.msra.mxu0 0.0
        %1005 = vmatprep.subr.mxu0 0.0
        %1006 = vmatpush1.msra.mxu0 0.0
        %1007 = vmatprep.subr.mxu0 0.0
        %1008 = vmatpush1.msra.mxu0 0.0
        %1009 = vmatprep.subr.mxu0 0.0
        %1010 = vmatpush1.msra.mxu0 0.0
        %1011 = vmatprep.subr.mxu0 0.0
        %1012 = vmatpush1.msra.mxu0 0.0
        %1013 = vmatprep.subr.mxu0 0.0
        %1014 = vmatpush1.msra.mxu0 0.0
        %1015 = vmatprep.subr.mxu0 0.0
        %1016 = vmatpush1.msra.mxu0 0.0
        %1017 = vmatprep.subr.mxu0 0.0
        %1018 = vmatpush1.msra.mxu0 0.0
        %1019 = vmatprep.subr.mxu0 0.0
        %1020 = vmatpush1.msra.mxu0 0.0
        %1021 = vmatprep.subr.mxu0 0.0
        %1022 = vmatpush1.msra.mxu0 0.0
        %1023 = vmatprep.subr.mxu0 0.0
        %1024 = vmatpush1.msra.mxu0 0.0
        %1025 = vmatprep.subr.mxu0 0.0
        %1026 = vmatpush1.msra.mxu0 0.0
        %1027 = vmatprep.subr.mxu0 0.0
        %1028 = vmatpush1.msra.mxu0 0.0
        %1029 = vmatprep.subr.mxu0 0.0
        %1030 = vmatpush1.msra.mxu0 0.0
        %1031 = vmatprep.subr.mxu0 0.0
        %1032 = vmatpush1.msra.mxu0 0.0
        %1033 = vmatprep.subr.mxu0 0.0
        %1034 = vmatpush1.msra.mxu0 0.0
        %1035 = vmatprep.subr.mxu0 0.0
        %1036 = vmatpush1.msra.mxu0 0.0
        %1037 = vmatprep.subr.mxu0 0.0
        %1038 = vmatpush1.msra.mxu0 0.0
        %1039 = vmatprep.subr.mxu0 0.0
        %1040 = vmatpush1.msra.mxu0 0.0
        %1041 = vmatprep.mubr.f32.mxu0 0.0
        %1042 = vmatmul.mubr.f32.gmra.mrb[0].mxu0 %v966
        %v1043 = vpop.f32.mrb[0].mxu0
        %v1044 = vadd.f32 %v947, %v1043
        %v1045 = vpop.f32.mrb[0].mxu0
        %v1046 = vadd.f32 %v947, %v1045
        %1047 = vmatprep.mubr.f32.mxu0 0.0
        %1048 = vmatmul.mubr.f32.gmra.mrb[0].mxu0 %v969
        %v1049 = vpop.f32.mrb[0].mxu0
        %v1050 = vadd.f32 %v952, %v1049
        %v1051 = vpop.f32.mrb[0].mxu0
        %v1052 = vadd.f32 %v952, %v1051
        %1053 = vmatprep.mubr.f32.mxu0 0.0
        %1054 = vmatmul.mubr.f32.gmra.mrb[0].mxu0 %v972
        %v1055 = vpop.f32.mrb[0].mxu0
        %v1056 = vadd.f32 %v957, %v1055
        %v1057 = vpop.f32.mrb[0].mxu0
        %v1058 = vadd.f32 %v957, %v1057
        %1059 = vmatprep.mubr.f32.mxu0 0.0
        %1060 = vmatmul.mubr.f32.gmra.mrb[0].mxu0 %v975
        %v1061 = vpop.f32.mrb[0].mxu0
        %v1062 = vadd.f32 %v962, %v1061
        %v1063 = vpop.f32.mrb[0].mxu0
        %v1064 = vadd.f32 %v962, %v1063
        %1065 = vdwg.mxu0
        %1066 = vmatprep.subr.mxu0 %v880
        %1067 = vmatpush1.msra.mxu0 %v879
        %1068 = vmatprep.subr.mxu0 %v884
        %1069 = vmatpush1.msra.mxu0 %v883
        %1070 = vmatprep.subr.mxu0 %v923
        %1071 = vmatpush1.msra.mxu0 %v922
        %1072 = vmatprep.subr.mxu0 %v927
        %1073 = vmatpush1.msra.mxu0 %v926
        %1074 = vmatprep.subr.mxu0 0.0
        %1075 = vmatpush1.msra.mxu0 0.0
        %1076 = vmatprep.subr.mxu0 0.0
        %1077 = vmatpush1.msra.mxu0 0.0
        %1078 = vmatprep.subr.mxu0 0.0
        %1079 = vmatpush1.msra.mxu0 0.0
        %1080 = vmatprep.subr.mxu0 0.0
        %1081 = vmatpush1.msra.mxu0 0.0
        %1082 = vmatprep.subr.mxu0 0.0
        %1083 = vmatpush1.msra.mxu0 0.0
        %1084 = vmatprep.subr.mxu0 0.0
        %1085 = vmatpush1.msra.mxu0 0.0
        %1086 = vmatprep.subr.mxu0 0.0
        %1087 = vmatpush1.msra.mxu0 0.0
        %1088 = vmatprep.subr.mxu0 0.0
        %1089 = vmatpush1.msra.mxu0 0.0
        %1090 = vmatprep.subr.mxu0 0.0
        %1091 = vmatpush1.msra.mxu0 0.0
        %1092 = vmatprep.subr.mxu0 0.0
        %1093 = vmatpush1.msra.mxu0 0.0
        %1094 = vmatprep.subr.mxu0 0.0
        %1095 = vmatpush1.msra.mxu0 0.0
        %1096 = vmatprep.subr.mxu0 0.0
        %1097 = vmatpush1.msra.mxu0 0.0
        %1098 = vmatprep.subr.mxu0 0.0
        %1099 = vmatpush1.msra.mxu0 0.0
        %1100 = vmatprep.subr.mxu0 0.0
        %1101 = vmatpush1.msra.mxu0 0.0
        %1102 = vmatprep.subr.mxu0 0.0
        %1103 = vmatpush1.msra.mxu0 0.0
        %1104 = vmatprep.subr.mxu0 0.0
        %1105 = vmatpush1.msra.mxu0 0.0
        %1106 = vmatprep.subr.mxu0 0.0
        %1107 = vmatpush1.msra.mxu0 0.0
        %1108 = vmatprep.subr.mxu0 0.0
        %1109 = vmatpush1.msra.mxu0 0.0
        %1110 = vmatprep.subr.mxu0 0.0
        %1111 = vmatpush1.msra.mxu0 0.0
        %1112 = vmatprep.subr.mxu0 0.0
        %1113 = vmatpush1.msra.mxu0 0.0
        %1114 = vmatprep.subr.mxu0 0.0
        %1115 = vmatpush1.msra.mxu0 0.0
        %1116 = vmatprep.subr.mxu0 0.0
        %1117 = vmatpush1.msra.mxu0 0.0
        %1118 = vmatprep.subr.mxu0 0.0
        %1119 = vmatpush1.msra.mxu0 0.0
        %1120 = vmatprep.subr.mxu0 0.0
        %1121 = vmatpush1.msra.mxu0 0.0
        %1122 = vmatprep.subr.mxu0 0.0
        %1123 = vmatpush1.msra.mxu0 0.0
        %1124 = vmatprep.subr.mxu0 0.0
        %1125 = vmatpush1.msra.mxu0 0.0
        %1126 = vmatprep.subr.mxu0 0.0
        %1127 = vmatpush1.msra.mxu0 0.0
        %1128 = vmatprep.subr.mxu0 0.0
        %1129 = vmatpush1.msra.mxu0 0.0
        %1130 = vmatprep.mubr.f32.mxu0 0.0
        %1131 = vmatmul.mubr.f32.gmra.mrb[0].mxu0 %v966
        %v1132 = vpop.f32.mrb[0].mxu0
        %v1133 = vadd.f32 %v947, %v1132
        %v1134 = vpop.f32.mrb[0].mxu0
        %v1135 = vadd.f32 %v947, %v1134
        %1136 = vmatprep.mubr.f32.mxu0 0.0
        %1137 = vmatmul.mubr.f32.gmra.mrb[0].mxu0 %v969
        %v1138 = vpop.f32.mrb[0].mxu0
        %v1139 = vadd.f32 %v952, %v1138
        %v1140 = vpop.f32.mrb[0].mxu0
        %v1141 = vadd.f32 %v952, %v1140
        %1142 = vmatprep.mubr.f32.mxu0 0.0
        %1143 = vmatmul.mubr.f32.gmra.mrb[0].mxu0 %v972
        %v1144 = vpop.f32.mrb[0].mxu0
        %v1145 = vadd.f32 %v957, %v1144
        %v1146 = vpop.f32.mrb[0].mxu0
        %v1147 = vadd.f32 %v957, %v1146
        %1148 = vmatprep.mubr.f32.mxu0 0.0
        %1149 = vmatmul.mubr.f32.gmra.mrb[0].mxu0 %v975
        %v1150 = vpop.f32.mrb[0].mxu0
        %v1151 = vadd.f32 %v962, %v1150
        %v1152 = vpop.f32.mrb[0].mxu0
        %v1153 = vadd.f32 %v962, %v1152
        %1154 = vdwg.mxu0
        %v1155 = vtanh.pop %v1044
        %v1156 = vtanh.pop %v1046
        %v1157 = vtanh.pop %v1133
        %v1158 = vtanh.pop %v1135
        %v1159 = vtanh.pop %v1050
        %v1160 = vtanh.pop %v1052
        %v1161 = vtanh.pop %v1139
        %v1162 = vtanh.pop %v1141
        %v1163 = vmul.f32 %v1056, 0.5
        %v1164 = vmul.f32 %v1058, 0.5
        %v1165 = vmul.f32 %v1145, 0.5
        %v1166 = vmul.f32 %v1147, 0.5
        %v1167 = vmul.f32 %v1062, 0.5
        %v1168 = vmul.f32 %v1064, 0.5
        %v1169 = vmul.f32 %v1151, 0.5
        %v1170 = vmul.f32 %v1153, 0.5
        %v1171 = vtanh.pop %v1163
        %v1172 = vtanh.pop %v1164
        %v1173 = vtanh.pop %v1165
        %v1174 = vtanh.pop %v1166
        %v1175 = vtanh.pop %v1167
        %v1176 = vtanh.pop %v1168
        %v1177 = vtanh.pop %v1169
        %v1178 = vtanh.pop %v1170
        %v1179 = vadd.f32 %v1171, 1.0
        %v1180 = vadd.f32 %v1172, 1.0
        %v1181 = vadd.f32 %v1173, 1.0
        %v1182 = vadd.f32 %v1174, 1.0
        %v1183 = vadd.f32 %v1175, 1.0
        %v1184 = vadd.f32 %v1176, 1.0
        %v1185 = vadd.f32 %v1177, 1.0
        %v1186 = vadd.f32 %v1178, 1.0
        %v1187 = vmul.f32 %v1179, 0.5
        %v1188 = vmul.f32 %v1180, 0.5
        %v1189 = vmul.f32 %v1181, 0.5
        %v1190 = vmul.f32 %v1182, 0.5
        %v1191 = vmul.f32 %v1183, 0.5
        %v1192 = vmul.f32 %v1184, 0.5
        %v1193 = vmul.f32 %v1185, 0.5
        %v1194 = vmul.f32 %v1186, 0.5
        %v1195 = vmul.f32 %v1155, %v1187
        %v1196 = vmul.f32 %v1156, %v1188
        %v1197 = vmul.f32 %v1157, %v1189
        %v1198 = vmul.f32 %v1158, %v1190
        %v1199 = vmul.f32 %v1159, %v1191
        %v1200 = vmul.f32 %v1160, %v1192
        %v1201 = vmul.f32 %v1161, %v1193
        %v1202 = vmul.f32 %v1162, %v1194
        %v1203 = vld [vmem:[%s7] sm:$0xff]
        %v1204 = vld [vmem:[%s7 + $0x8] sm:$0xff]
        %v1205 = vld [vmem:[%s8] sm:$0xff]
        %v1206 = vld [vmem:[%s8 + $0x8] sm:$0xff]
        %1208 = vset.pattern.permute.xlu0 0
        %1209 = vperm.xlu0 %1208, %v1205
        %v1210 = vpop.permute.xlu0 %1209
        %1213 = vset.pattern.permute.xlu0 0
        %1214 = vperm.xlu0 %1213, %v1206
        %v1215 = vpop.permute.xlu0 %1214
        %v1218 = vsel %vm716, %v1203, 0
        %v1221 = vsel %vm716, %v1204, 0
        %1223 = vmatprep.subr.mxu0 %v1196
        %1224 = vmatpush1.msra.mxu0 %v1195
        %1225 = vmatprep.subr.mxu0 %v1200
        %1226 = vmatpush1.msra.mxu0 %v1199
        %1227 = vmatprep.subr.mxu0 0.0
        %1228 = vmatpush1.msra.mxu0 0.0
        %1229 = vmatprep.subr.mxu0 0.0
        %1230 = vmatpush1.msra.mxu0 0.0
        %1231 = vmatprep.subr.mxu0 0.0
        %1232 = vmatpush1.msra.mxu0 0.0
        %1233 = vmatprep.subr.mxu0 0.0
        %1234 = vmatpush1.msra.mxu0 0.0
        %1235 = vmatprep.subr.mxu0 0.0
        %1236 = vmatpush1.msra.mxu0 0.0
        %1237 = vmatprep.subr.mxu0 0.0
        %1238 = vmatpush1.msra.mxu0 0.0
        %1239 = vmatprep.subr.mxu0 0.0
        %1240 = vmatpush1.msra.mxu0 0.0
        %1241 = vmatprep.subr.mxu0 0.0
        %1242 = vmatpush1.msra.mxu0 0.0
        %1243 = vmatprep.subr.mxu0 0.0
        %1244 = vmatpush1.msra.mxu0 0.0
        %1245 = vmatprep.subr.mxu0 0.0
        %1246 = vmatpush1.msra.mxu0 0.0
        %1247 = vmatprep.subr.mxu0 0.0
        %1248 = vmatpush1.msra.mxu0 0.0
        %1249 = vmatprep.subr.mxu0 0.0
        %1250 = vmatpush1.msra.mxu0 0.0
        %1251 = vmatprep.subr.mxu0 0.0
        %1252 = vmatpush1.msra.mxu0 0.0
        %1253 = vmatprep.subr.mxu0 0.0
        %1254 = vmatpush1.msra.mxu0 0.0
        %1255 = vmatprep.subr.mxu0 0.0
        %1256 = vmatpush1.msra.mxu0 0.0
        %1257 = vmatprep.subr.mxu0 0.0
        %1258 = vmatpush1.msra.mxu0 0.0
        %1259 = vmatprep.subr.mxu0 0.0
        %1260 = vmatpush1.msra.mxu0 0.0
        %1261 = vmatprep.subr.mxu0 0.0
        %1262 = vmatpush1.msra.mxu0 0.0
        %1263 = vmatprep.subr.mxu0 0.0
        %1264 = vmatpush1.msra.mxu0 0.0
        %1265 = vmatprep.subr.mxu0 0.0
        %1266 = vmatpush1.msra.mxu0 0.0
        %1267 = vmatprep.subr.mxu0 0.0
        %1268 = vmatpush1.msra.mxu0 0.0
        %1269 = vmatprep.subr.mxu0 0.0
        %1270 = vmatpush1.msra.mxu0 0.0
        %1271 = vmatprep.subr.mxu0 0.0
        %1272 = vmatpush1.msra.mxu0 0.0
        %1273 = vmatprep.subr.mxu0 0.0
        %1274 = vmatpush1.msra.mxu0 0.0
        %1275 = vmatprep.subr.mxu0 0.0
        %1276 = vmatpush1.msra.mxu0 0.0
        %1277 = vmatprep.subr.mxu0 0.0
        %1278 = vmatpush1.msra.mxu0 0.0
        %1279 = vmatprep.subr.mxu0 0.0
        %1280 = vmatpush1.msra.mxu0 0.0
        %1281 = vmatprep.subr.mxu0 0.0
        %1282 = vmatpush1.msra.mxu0 0.0
        %1283 = vmatprep.subr.mxu0 0.0
        %1284 = vmatpush1.msra.mxu0 0.0
        %1285 = vmatprep.subr.mxu0 0.0
        %1286 = vmatpush1.msra.mxu0 0.0
        %1287 = vmatprep.mubr.f32.mxu0 0.0
        %1288 = vmatmul.mubr.f32.gmra.mrb[0].mxu0 %v1218
        %v1289 = vpop.f32.mrb[0].mxu0
        %v1290 = vadd.f32 %v1210, %v1289
        %v1291 = vpop.f32.mrb[0].mxu0
        %v1292 = vadd.f32 %v1210, %v1291
        %1293 = vmatprep.mubr.f32.mxu0 0.0
        %1294 = vmatmul.mubr.f32.gmra.mrb[0].mxu0 %v1221
        %v1295 = vpop.f32.mrb[0].mxu0
        %v1296 = vadd.f32 %v1215, %v1295
        %v1297 = vpop.f32.mrb[0].mxu0
        %v1298 = vadd.f32 %v1215, %v1297
        %1299 = vdwg.mxu0
        %1300 = vmatprep.subr.mxu0 %v1198
        %1301 = vmatpush1.msra.mxu0 %v1197
        %1302 = vmatprep.subr.mxu0 %v1202
        %1303 = vmatpush1.msra.mxu0 %v1201
        %1304 = vmatprep.subr.mxu0 0.0
        %1305 = vmatpush1.msra.mxu0 0.0
        %1306 = vmatprep.subr.mxu0 0.0
        %1307 = vmatpush1.msra.mxu0 0.0
        %1308 = vmatprep.subr.mxu0 0.0
        %1309 = vmatpush1.msra.mxu0 0.0
        %1310 = vmatprep.subr.mxu0 0.0
        %1311 = vmatpush1.msra.mxu0 0.0
        %1312 = vmatprep.subr.mxu0 0.0
        %1313 = vmatpush1.msra.mxu0 0.0
        %1314 = vmatprep.subr.mxu0 0.0
        %1315 = vmatpush1.msra.mxu0 0.0
        %1316 = vmatprep.subr.mxu0 0.0
        %1317 = vmatpush1.msra.mxu0 0.0
        %1318 = vmatprep.subr.mxu0 0.0
        %1319 = vmatpush1.msra.mxu0 0.0
        %1320 = vmatprep.subr.mxu0 0.0
        %1321 = vmatpush1.msra.mxu0 0.0
        %1322 = vmatprep.subr.mxu0 0.0
        %1323 = vmatpush1.msra.mxu0 0.0
        %1324 = vmatprep.subr.mxu0 0.0
        %1325 = vmatpush1.msra.mxu0 0.0
        %1326 = vmatprep.subr.mxu0 0.0
        %1327 = vmatpush1.msra.mxu0 0.0
        %1328 = vmatprep.subr.mxu0 0.0
        %1329 = vmatpush1.msra.mxu0 0.0
        %1330 = vmatprep.subr.mxu0 0.0
        %1331 = vmatpush1.msra.mxu0 0.0
        %1332 = vmatprep.subr.mxu0 0.0
        %1333 = vmatpush1.msra.mxu0 0.0
        %1334 = vmatprep.subr.mxu0 0.0
        %1335 = vmatpush1.msra.mxu0 0.0
        %1336 = vmatprep.subr.mxu0 0.0
        %1337 = vmatpush1.msra.mxu0 0.0
        %1338 = vmatprep.subr.mxu0 0.0
        %1339 = vmatpush1.msra.mxu0 0.0
        %1340 = vmatprep.subr.mxu0 0.0
        %1341 = vmatpush1.msra.mxu0 0.0
        %1342 = vmatprep.subr.mxu0 0.0
        %1343 = vmatpush1.msra.mxu0 0.0
        %1344 = vmatprep.subr.mxu0 0.0
        %1345 = vmatpush1.msra.mxu0 0.0
        %1346 = vmatprep.subr.mxu0 0.0
        %1347 = vmatpush1.msra.mxu0 0.0
        %1348 = vmatprep.subr.mxu0 0.0
        %1349 = vmatpush1.msra.mxu0 0.0
        %1350 = vmatprep.subr.mxu0 0.0
        %1351 = vmatpush1.msra.mxu0 0.0
        %1352 = vmatprep.subr.mxu0 0.0
        %1353 = vmatpush1.msra.mxu0 0.0
        %1354 = vmatprep.subr.mxu0 0.0
        %1355 = vmatpush1.msra.mxu0 0.0
        %1356 = vmatprep.subr.mxu0 0.0
        %1357 = vmatpush1.msra.mxu0 0.0
        %1358 = vmatprep.subr.mxu0 0.0
        %1359 = vmatpush1.msra.mxu0 0.0
        %1360 = vmatprep.subr.mxu0 0.0
        %1361 = vmatpush1.msra.mxu0 0.0
        %1362 = vmatprep.subr.mxu0 0.0
        %1363 = vmatpush1.msra.mxu0 0.0
        %1364 = vmatprep.mubr.f32.mxu0 0.0
        %1365 = vmatmul.mubr.f32.gmra.mrb[0].mxu0 %v1218
        %v1366 = vpop.f32.mrb[0].mxu0
        %v1367 = vadd.f32 %v1210, %v1366
        %v1368 = vpop.f32.mrb[0].mxu0
        %v1369 = vadd.f32 %v1210, %v1368
        %1370 = vmatprep.mubr.f32.mxu0 0.0
        %1371 = vmatmul.mubr.f32.gmra.mrb[0].mxu0 %v1221
        %v1372 = vpop.f32.mrb[0].mxu0
        %v1373 = vadd.f32 %v1215, %v1372
        %v1374 = vpop.f32.mrb[0].mxu0
        %v1375 = vadd.f32 %v1215, %v1374
        %1376 = vdwg.mxu0
        %v1377 = vadd.f32 %v1290, %v877
        %v1378 = vadd.f32 %v1292, %v878
        %v1379 = vadd.f32 %v1367, %v879
        %v1380 = vadd.f32 %v1369, %v880
        %v1381 = vadd.f32 %v1296, %v881
        %v1382 = vadd.f32 %v1298, %v882
        %v1383 = vadd.f32 %v1373, %v883
        %v1384 = vadd.f32 %v1375, %v884
        %v1385 = vadd.f32 %v1377, 0.0
        %v1386 = vadd.f32 %v1378, 0.0
        %v1387 = vadd.f32 %v1379, 0.0
        %v1388 = vadd.f32 %v1380, 0.0
        %v1389 = vadd.f32 %v1381, 0.0
        %v1390 = vadd.f32 %v1382, 0.0
        %v1391 = vadd.f32 %v1383, 0.0
        %v1392 = vadd.f32 %v1384, 0.0
        %s1393 = scalar_lea.vmem [#allocation2], 32
        %v1394 = vld [vmem:[%s1393] sm:$0xff]
        %v1395 = vld [vmem:[%s1393 + $0x8] sm:$0xff]
        %1396 = vst [vmem:[%s1393] sm:$0xff] %v1380
        %1397 = vst [vmem:[%s1393 + $0x8] sm:$0xff] %v1384
        %1408 = vrot.lane.b32.xlu0 %v1394, 2
        %v1409 = vpop.permute.xlu0 %1408
        %1410 = vrot.lane.b32.xlu0 %v1377, 2
        %v1411 = vpop.permute.xlu0 %1410
        %1412 = vrot.lane.b32.xlu0 %v1378, 2
        %v1413 = vpop.permute.xlu0 %1412
        %1414 = vrot.lane.b32.xlu0 %v1379, 2
        %v1415 = vpop.permute.xlu0 %1414
        %1416 = vrot.lane.b32.xlu0 %v1380, 2
        %v1417 = vpop.permute.xlu0 %1416
        %1418 = vrot.lane.b32.xlu0 %v1395, 2
        %v1419 = vpop.permute.xlu0 %1418
        %1420 = vrot.lane.b32.xlu0 %v1381, 2
        %v1421 = vpop.permute.xlu0 %1420
        %1422 = vrot.lane.b32.xlu0 %v1382, 2
        %v1423 = vpop.permute.xlu0 %1422
        %1424 = vrot.lane.b32.xlu0 %v1383, 2
        %v1425 = vpop.permute.xlu0 %1424
        %1426 = vrot.lane.b32.xlu0 %v1384, 2
        %v1427 = vpop.permute.xlu0 %1426
        %vm1428 = vcmask 15360
        %v1429 = vsel %vm1428, %v1409, %v1411
        %v1430 = vsel %vm1428, %v1411, %v1413
        %v1431 = vsel %vm1428, %v1413, %v1415
        %v1432 = vsel %vm1428, %v1415, %v1417
        %v1433 = vsel %vm1428, %v1419, %v1421
        %v1434 = vsel %vm1428, %v1421, %v1423
        %v1435 = vsel %vm1428, %v1423, %v1425
        %v1436 = vsel %vm1428, %v1425, %v1427
        %s1445 = scalar_lea.vmem %s5, 32
        %v1446 = vld [vmem:[%s1445] sm:$0xff]
        %v1447 = vld [vmem:[%s1445 + $0x8] sm:$0xff]
        %v1448 = vld [vmem:[%s1445 + $0x10] sm:$0xff]
        %v1449 = vld [vmem:[%s1445 + $0x18] sm:$0xff]
        %s1450 = scalar_lea.vmem %s6, 32
        %v1451 = vld [vmem:[%s1450] sm:$0xff]
        %v1452 = vld [vmem:[%s1450 + $0x8] sm:$0xff]
        %v1453 = vld [vmem:[%s1450 + $0x10] sm:$0xff]
        %v1454 = vld [vmem:[%s1450 + $0x18] sm:$0xff]
        %1456 = vset.pattern.permute.xlu0 0
        %1457 = vperm.xlu0 %1456, %v1451
        %v1458 = vpop.permute.xlu0 %1457
        %1461 = vset.pattern.permute.xlu0 0
        %1462 = vperm.xlu0 %1461, %v1452
        %v1463 = vpop.permute.xlu0 %1462
        %1466 = vset.pattern.permute.xlu0 0
        %1467 = vperm.xlu0 %1466, %v1453
        %v1468 = vpop.permute.xlu0 %1467
        %1471 = vset.pattern.permute.xlu0 0
        %1472 = vperm.xlu0 %1471, %v1454
        %v1473 = vpop.permute.xlu0 %1472
        %v1476 = vsel %vm964, %v1446, 0
        %v1479 = vsel %vm964, %v1447, 0
        %v1482 = vsel %vm964, %v1448, 0
        %v1485 = vsel %vm964, %v1449, 0
        %1487 = vmatprep.subr.mxu0 %v1378
        %1488 = vmatpush1.msra.mxu0 %v1377
        %1489 = vmatprep.subr.mxu0 %v1382
        %1490 = vmatpush1.msra.mxu0 %v1381
        %1491 = vmatprep.subr.mxu0 %v1430
        %1492 = vmatpush1.msra.mxu0 %v1429
        %1493 = vmatprep.subr.mxu0 %v1434
        %1494 = vmatpush1.msra.mxu0 %v1433
        %1495 = vmatprep.subr.mxu0 0.0
        %1496 = vmatpush1.msra.mxu0 0.0
        %1497 = vmatprep.subr.mxu0 0.0
        %1498 = vmatpush1.msra.mxu0 0.0
        %1499 = vmatprep.subr.mxu0 0.0
        %1500 = vmatpush1.msra.mxu0 0.0
        %1501 = vmatprep.subr.mxu0 0.0
        %1502 = vmatpush1.msra.mxu0 0.0
        %1503 = vmatprep.subr.mxu0 0.0
        %1504 = vmatpush1.msra.mxu0 0.0
        %1505 = vmatprep.subr.mxu0 0.0
        %1506 = vmatpush1.msra.mxu0 0.0
        %1507 = vmatprep.subr.mxu0 0.0
        %1508 = vmatpush1.msra.mxu0 0.0
        %1509 = vmatprep.subr.mxu0 0.0
        %1510 = vmatpush1.msra.mxu0 0.0
        %1511 = vmatprep.subr.mxu0 0.0
        %1512 = vmatpush1.msra.mxu0 0.0
        %1513 = vmatprep.subr.mxu0 0.0
        %1514 = vmatpush1.msra.mxu0 0.0
        %1515 = vmatprep.subr.mxu0 0.0
        %1516 = vmatpush1.msra.mxu0 0.0
        %1517 = vmatprep.subr.mxu0 0.0
        %1518 = vmatpush1.msra.mxu0 0.0
        %1519 = vmatprep.subr.mxu0 0.0
        %1520 = vmatpush1.msra.mxu0 0.0
        %1521 = vmatprep.subr.mxu0 0.0
        %1522 = vmatpush1.msra.mxu0 0.0
        %1523 = vmatprep.subr.mxu0 0.0
        %1524 = vmatpush1.msra.mxu0 0.0
        %1525 = vmatprep.subr.mxu0 0.0
        %1526 = vmatpush1.msra.mxu0 0.0
        %1527 = vmatprep.subr.mxu0 0.0
        %1528 = vmatpush1.msra.mxu0 0.0
        %1529 = vmatprep.subr.mxu0 0.0
        %1530 = vmatpush1.msra.mxu0 0.0
        %1531 = vmatprep.subr.mxu0 0.0
        %1532 = vmatpush1.msra.mxu0 0.0
        %1533 = vmatprep.subr.mxu0 0.0
        %1534 = vmatpush1.msra.mxu0 0.0
        %1535 = vmatprep.subr.mxu0 0.0
        %1536 = vmatpush1.msra.mxu0 0.0
        %1537 = vmatprep.subr.mxu0 0.0
        %1538 = vmatpush1.msra.mxu0 0.0
        %1539 = vmatprep.subr.mxu0 0.0
        %1540 = vmatpush1.msra.mxu0 0.0
        %1541 = vmatprep.subr.mxu0 0.0
        %1542 = vmatpush1.msra.mxu0 0.0
        %1543 = vmatprep.subr.mxu0 0.0
        %1544 = vmatpush1.msra.mxu0 0.0
        %1545 = vmatprep.subr.mxu0 0.0
        %1546 = vmatpush1.msra.mxu0 0.0
        %1547 = vmatprep.subr.mxu0 0.0
        %1548 = vmatpush1.msra.mxu0 0.0
        %1549 = vmatprep.subr.mxu0 0.0
        %1550 = vmatpush1.msra.mxu0 0.0
        %1551 = vmatprep.mubr.f32.mxu0 0.0
        %1552 = vmatmul.mubr.f32.gmra.mrb[0].mxu0 %v1476
        %v1553 = vpop.f32.mrb[0].mxu0
        %v1554 = vadd.f32 %v1458, %v1553
        %v1555 = vpop.f32.mrb[0].mxu0
        %v1556 = vadd.f32 %v1458, %v1555
        %1557 = vmatprep.mubr.f32.mxu0 0.0
        %1558 = vmatmul.mubr.f32.gmra.mrb[0].mxu0 %v1479
        %v1559 = vpop.f32.mrb[0].mxu0
        %v1560 = vadd.f32 %v1463, %v1559
        %v1561 = vpop.f32.mrb[0].mxu0
        %v1562 = vadd.f32 %v1463, %v1561
        %1563 = vmatprep.mubr.f32.mxu0 0.0
        %1564 = vmatmul.mubr.f32.gmra.mrb[0].mxu0 %v1482
        %v1565 = vpop.f32.mrb[0].mxu0
        %v1566 = vadd.f32 %v1468, %v1565
        %v1567 = vpop.f32.mrb[0].mxu0
        %v1568 = vadd.f32 %v1468, %v1567
        %1569 = vmatprep.mubr.f32.mxu0 0.0
        %1570 = vmatmul.mubr.f32.gmra.mrb[0].mxu0 %v1485
        %v1571 = vpop.f32.mrb[0].mxu0
        %v1572 = vadd.f32 %v1473, %v1571
        %v1573 = vpop.f32.mrb[0].mxu0
        %v1574 = vadd.f32 %v1473, %v1573
        %1575 = vdwg.mxu0
        %1576 = vmatprep.subr.mxu0 %v1380
        %1577 = vmatpush1.msra.mxu0 %v1379
        %1578 = vmatprep.subr.mxu0 %v1384
        %1579 = vmatpush1.msra.mxu0 %v1383
        %1580 = vmatprep.subr.mxu0 %v1432
        %1581 = vmatpush1.msra.mxu0 %v1431
        %1582 = vmatprep.subr.mxu0 %v1436
        %1583 = vmatpush1.msra.mxu0 %v1435
        %1584 = vmatprep.subr.mxu0 0.0
        %1585 = vmatpush1.msra.mxu0 0.0
        %1586 = vmatprep.subr.mxu0 0.0
        %1587 = vmatpush1.msra.mxu0 0.0
        %1588 = vmatprep.subr.mxu0 0.0
        %1589 = vmatpush1.msra.mxu0 0.0
        %1590 = vmatprep.subr.mxu0 0.0
        %1591 = vmatpush1.msra.mxu0 0.0
        %1592 = vmatprep.subr.mxu0 0.0
        %1593 = vmatpush1.msra.mxu0 0.0
        %1594 = vmatprep.subr.mxu0 0.0
        %1595 = vmatpush1.msra.mxu0 0.0
        %1596 = vmatprep.subr.mxu0 0.0
        %1597 = vmatpush1.msra.mxu0 0.0
        %1598 = vmatprep.subr.mxu0 0.0
        %1599 = vmatpush1.msra.mxu0 0.0
        %1600 = vmatprep.subr.mxu0 0.0
        %1601 = vmatpush1.msra.mxu0 0.0
        %1602 = vmatprep.subr.mxu0 0.0
        %1603 = vmatpush1.msra.mxu0 0.0
        %1604 = vmatprep.subr.mxu0 0.0
        %1605 = vmatpush1.msra.mxu0 0.0
        %1606 = vmatprep.subr.mxu0 0.0
        %1607 = vmatpush1.msra.mxu0 0.0
        %1608 = vmatprep.subr.mxu0 0.0
        %1609 = vmatpush1.msra.mxu0 0.0
        %1610 = vmatprep.subr.mxu0 0.0
        %1611 = vmatpush1.msra.mxu0 0.0
        %1612 = vmatprep.subr.mxu0 0.0
        %1613 = vmatpush1.msra.mxu0 0.0
        %1614 = vmatprep.subr.mxu0 0.0
        %1615 = vmatpush1.msra.mxu0 0.0
        %1616 = vmatprep.subr.mxu0 0.0
        %1617 = vmatpush1.msra.mxu0 0.0
        %1618 = vmatprep.subr.mxu0 0.0
        %1619 = vmatpush1.msra.mxu0 0.0
        %1620 = vmatprep.subr.mxu0 0.0
        %1621 = vmatpush1.msra.mxu0 0.0
        %1622 = vmatprep.subr.mxu0 0.0
        %1623 = vmatpush1.msra.mxu0 0.0
        %1624 = vmatprep.subr.mxu0 0.0
        %1625 = vmatpush1.msra.mxu0 0.0
        %1626 = vmatprep.subr.mxu0 0.0
        %1627 = vmatpush1.msra.mxu0 0.0
        %1628 = vmatprep.subr.mxu0 0.0
        %1629 = vmatpush1.msra.mxu0 0.0
        %1630 = vmatprep.subr.mxu0 0.0
        %1631 = vmatpush1.msra.mxu0 0.0
        %1632 = vmatprep.subr.mxu0 0.0
        %1633 = vmatpush1.msra.mxu0 0.0
        %1634 = vmatprep.subr.mxu0 0.0
        %1635 = vmatpush1.msra.mxu0 0.0
        %1636 = vmatprep.subr.mxu0 0.0
        %1637 = vmatpush1.msra.mxu0 0.0
        %1638 = vmatprep.subr.mxu0 0.0
        %1639 = vmatpush1.msra.mxu0 0.0
        %1640 = vmatprep.mubr.f32.mxu0 0.0
        %1641 = vmatmul.mubr.f32.gmra.mrb[0].mxu0 %v1476
        %v1642 = vpop.f32.mrb[0].mxu0
        %v1643 = vadd.f32 %v1458, %v1642
        %v1644 = vpop.f32.mrb[0].mxu0
        %v1645 = vadd.f32 %v1458, %v1644
        %1646 = vmatprep.mubr.f32.mxu0 0.0
        %1647 = vmatmul.mubr.f32.gmra.mrb[0].mxu0 %v1479
        %v1648 = vpop.f32.mrb[0].mxu0
        %v1649 = vadd.f32 %v1463, %v1648
        %v1650 = vpop.f32.mrb[0].mxu0
        %v1651 = vadd.f32 %v1463, %v1650
        %1652 = vmatprep.mubr.f32.mxu0 0.0
        %1653 = vmatmul.mubr.f32.gmra.mrb[0].mxu0 %v1482
        %v1654 = vpop.f32.mrb[0].mxu0
        %v1655 = vadd.f32 %v1468, %v1654
        %v1656 = vpop.f32.mrb[0].mxu0
        %v1657 = vadd.f32 %v1468, %v1656
        %1658 = vmatprep.mubr.f32.mxu0 0.0
        %1659 = vmatmul.mubr.f32.gmra.mrb[0].mxu0 %v1485
        %v1660 = vpop.f32.mrb[0].mxu0
        %v1661 = vadd.f32 %v1473, %v1660
        %v1662 = vpop.f32.mrb[0].mxu0
        %v1663 = vadd.f32 %v1473, %v1662
        %1664 = vdwg.mxu0
        %v1665 = vtanh.pop %v1554
        %v1666 = vtanh.pop %v1556
        %v1667 = vtanh.pop %v1643
        %v1668 = vtanh.pop %v1645
        %v1669 = vtanh.pop %v1560
        %v1670 = vtanh.pop %v1562
        %v1671 = vtanh.pop %v1649
        %v1672 = vtanh.pop %v1651
        %v1673 = vmul.f32 %v1566, 0.5
        %v1674 = vmul.f32 %v1568, 0.5
        %v1675 = vmul.f32 %v1655, 0.5
        %v1676 = vmul.f32 %v1657, 0.5
        %v1677 = vmul.f32 %v1572, 0.5
        %v1678 = vmul.f32 %v1574, 0.5
        %v1679 = vmul.f32 %v1661, 0.5
        %v1680 = vmul.f32 %v1663, 0.5
        %v1681 = vtanh.pop %v1673
        %v1682 = vtanh.pop %v1674
        %v1683 = vtanh.pop %v1675
        %v1684 = vtanh.pop %v1676
        %v1685 = vtanh.pop %v1677
        %v1686 = vtanh.pop %v1678
        %v1687 = vtanh.pop %v1679
        %v1688 = vtanh.pop %v1680
        %v1689 = vadd.f32 %v1681, 1.0
        %v1690 = vadd.f32 %v1682, 1.0
        %v1691 = vadd.f32 %v1683, 1.0
        %v1692 = vadd.f32 %v1684, 1.0
        %v1693 = vadd.f32 %v1685, 1.0
        %v1694 = vadd.f32 %v1686, 1.0
        %v1695 = vadd.f32 %v1687, 1.0
        %v1696 = vadd.f32 %v1688, 1.0
        %v1697 = vmul.f32 %v1689, 0.5
        %v1698 = vmul.f32 %v1690, 0.5
        %v1699 = vmul.f32 %v1691, 0.5
        %v1700 = vmul.f32 %v1692, 0.5
        %v1701 = vmul.f32 %v1693, 0.5
        %v1702 = vmul.f32 %v1694, 0.5
        %v1703 = vmul.f32 %v1695, 0.5
        %v1704 = vmul.f32 %v1696, 0.5
        %v1705 = vmul.f32 %v1665, %v1697
        %v1706 = vmul.f32 %v1666, %v1698
        %v1707 = vmul.f32 %v1667, %v1699
        %v1708 = vmul.f32 %v1668, %v1700
        %v1709 = vmul.f32 %v1669, %v1701
        %v1710 = vmul.f32 %v1670, %v1702
        %v1711 = vmul.f32 %v1671, %v1703
        %v1712 = vmul.f32 %v1672, %v1704
        %s1713 = scalar_lea.vmem %s7, 16
        %v1714 = vld [vmem:[%s1713] sm:$0xff]
        %v1715 = vld [vmem:[%s1713 + $0x8] sm:$0xff]
        %s1716 = scalar_lea.vmem %s8, 16
        %v1717 = vld [vmem:[%s1716] sm:$0xff]
        %v1718 = vld [vmem:[%s1716 + $0x8] sm:$0xff]
        %1720 = vset.pattern.permute.xlu0 0
        %1721 = vperm.xlu0 %1720, %v1717
        %v1722 = vpop.permute.xlu0 %1721
        %1725 = vset.pattern.permute.xlu0 0
        %1726 = vperm.xlu0 %1725, %v1718
        %v1727 = vpop.permute.xlu0 %1726
        %v1730 = vsel %vm716, %v1714, 0
        %v1733 = vsel %vm716, %v1715, 0
        %1735 = vmatprep.subr.mxu0 %v1706
        %1736 = vmatpush1.msra.mxu0 %v1705
        %1737 = vmatprep.subr.mxu0 %v1710
        %1738 = vmatpush1.msra.mxu0 %v1709
        %1739 = vmatprep.subr.mxu0 0.0
        %1740 = vmatpush1.msra.mxu0 0.0
        %1741 = vmatprep.subr.mxu0 0.0
        %1742 = vmatpush1.msra.mxu0 0.0
        %1743 = vmatprep.subr.mxu0 0.0
        %1744 = vmatpush1.msra.mxu0 0.0
        %1745 = vmatprep.subr.mxu0 0.0
        %1746 = vmatpush1.msra.mxu0 0.0
        %1747 = vmatprep.subr.mxu0 0.0
        %1748 = vmatpush1.msra.mxu0 0.0
        %1749 = vmatprep.subr.mxu0 0.0
        %1750 = vmatpush1.msra.mxu0 0.0
        %1751 = vmatprep.subr.mxu0 0.0
        %1752 = vmatpush1.msra.mxu0 0.0
        %1753 = vmatprep.subr.mxu0 0.0
        %1754 = vmatpush1.msra.mxu0 0.0
        %1755 = vmatprep.subr.mxu0 0.0
        %1756 = vmatpush1.msra.mxu0 0.0
        %1757 = vmatprep.subr.mxu0 0.0
        %1758 = vmatpush1.msra.mxu0 0.0
        %1759 = vmatprep.subr.mxu0 0.0
        %1760 = vmatpush1.msra.mxu0 0.0
        %1761 = vmatprep.subr.mxu0 0.0
        %1762 = vmatpush1.msra.mxu0 0.0
        %1763 = vmatprep.subr.mxu0 0.0
        %1764 = vmatpush1.msra.mxu0 0.0
        %1765 = vmatprep.subr.mxu0 0.0
        %1766 = vmatpush1.msra.mxu0 0.0
        %1767 = vmatprep.subr.mxu0 0.0
        %1768 = vmatpush1.msra.mxu0 0.0
        %1769 = vmatprep.subr.mxu0 0.0
        %1770 = vmatpush1.msra.mxu0 0.0
        %1771 = vmatprep.subr.mxu0 0.0
        %1772 = vmatpush1.msra.mxu0 0.0
        %1773 = vmatprep.subr.mxu0 0.0
        %1774 = vmatpush1.msra.mxu0 0.0
        %1775 = vmatprep.subr.mxu0 0.0
        %1776 = vmatpush1.msra.mxu0 0.0
        %1777 = vmatprep.subr.mxu0 0.0
        %1778 = vmatpush1.msra.mxu0 0.0
        %1779 = vmatprep.subr.mxu0 0.0
        %1780 = vmatpush1.msra.mxu0 0.0
        %1781 = vmatprep.subr.mxu0 0.0
        %1782 = vmatpush1.msra.mxu0 0.0
        %1783 = vmatprep.subr.mxu0 0.0
        %1784 = vmatpush1.msra.mxu0 0.0
        %1785 = vmatprep.subr.mxu0 0.0
        %1786 = vmatpush1.msra.mxu0 0.0
        %1787 = vmatprep.subr.mxu0 0.0
        %1788 = vmatpush1.msra.mxu0 0.0
        %1789 = vmatprep.subr.mxu0 0.0
        %1790 = vmatpush1.msra.mxu0 0.0
        %1791 = vmatprep.subr.mxu0 0.0
        %1792 = vmatpush1.msra.mxu0 0.0
        %1793 = vmatprep.subr.mxu0 0.0
        %1794 = vmatpush1.msra.mxu0 0.0
        %1795 = vmatprep.subr.mxu0 0.0
        %1796 = vmatpush1.msra.mxu0 0.0
        %1797 = vmatprep.subr.mxu0 0.0
        %1798 = vmatpush1.msra.mxu0 0.0
        %1799 = vmatprep.mubr.f32.mxu0 0.0
        %1800 = vmatmul.mubr.f32.gmra.mrb[0].mxu0 %v1730
        %v1801 = vpop.f32.mrb[0].mxu0
        %v1802 = vadd.f32 %v1722, %v1801
        %v1803 = vpop.f32.mrb[0].mxu0
        %v1804 = vadd.f32 %v1722, %v1803
        %1805 = vmatprep.mubr.f32.mxu0 0.0
        %1806 = vmatmul.mubr.f32.gmra.mrb[0].mxu0 %v1733
        %v1807 = vpop.f32.mrb[0].mxu0
        %v1808 = vadd.f32 %v1727, %v1807
        %v1809 = vpop.f32.mrb[0].mxu0
        %v1810 = vadd.f32 %v1727, %v1809
        %1811 = vdwg.mxu0
        %1812 = vmatprep.subr.mxu0 %v1708
        %1813 = vmatpush1.msra.mxu0 %v1707
        %1814 = vmatprep.subr.mxu0 %v1712
        %1815 = vmatpush1.msra.mxu0 %v1711
        %1816 = vmatprep.subr.mxu0 0.0
        %1817 = vmatpush1.msra.mxu0 0.0
        %1818 = vmatprep.subr.mxu0 0.0
        %1819 = vmatpush1.msra.mxu0 0.0
        %1820 = vmatprep.subr.mxu0 0.0
        %1821 = vmatpush1.msra.mxu0 0.0
        %1822 = vmatprep.subr.mxu0 0.0
        %1823 = vmatpush1.msra.mxu0 0.0
        %1824 = vmatprep.subr.mxu0 0.0
        %1825 = vmatpush1.msra.mxu0 0.0
        %1826 = vmatprep.subr.mxu0 0.0
        %1827 = vmatpush1.msra.mxu0 0.0
        %1828 = vmatprep.subr.mxu0 0.0
        %1829 = vmatpush1.msra.mxu0 0.0
        %1830 = vmatprep.subr.mxu0 0.0
        %1831 = vmatpush1.msra.mxu0 0.0
        %1832 = vmatprep.subr.mxu0 0.0
        %1833 = vmatpush1.msra.mxu0 0.0
        %1834 = vmatprep.subr.mxu0 0.0
        %1835 = vmatpush1.msra.mxu0 0.0
        %1836 = vmatprep.subr.mxu0 0.0
        %1837 = vmatpush1.msra.mxu0 0.0
        %1838 = vmatprep.subr.mxu0 0.0
        %1839 = vmatpush1.msra.mxu0 0.0
        %1840 = vmatprep.subr.mxu0 0.0
        %1841 = vmatpush1.msra.mxu0 0.0
        %1842 = vmatprep.subr.mxu0 0.0
        %1843 = vmatpush1.msra.mxu0 0.0
        %1844 = vmatprep.subr.mxu0 0.0
        %1845 = vmatpush1.msra.mxu0 0.0
        %1846 = vmatprep.subr.mxu0 0.0
        %1847 = vmatpush1.msra.mxu0 0.0
        %1848 = vmatprep.subr.mxu0 0.0
        %1849 = vmatpush1.msra.mxu0 0.0
        %1850 = vmatprep.subr.mxu0 0.0
        %1851 = vmatpush1.msra.mxu0 0.0
        %1852 = vmatprep.subr.mxu0 0.0
        %1853 = vmatpush1.msra.mxu0 0.0
        %1854 = vmatprep.subr.mxu0 0.0
        %1855 = vmatpush1.msra.mxu0 0.0
        %1856 = vmatprep.subr.mxu0 0.0
        %1857 = vmatpush1.msra.mxu0 0.0
        %1858 = vmatprep.subr.mxu0 0.0
        %1859 = vmatpush1.msra.mxu0 0.0
        %1860 = vmatprep.subr.mxu0 0.0
        %1861 = vmatpush1.msra.mxu0 0.0
        %1862 = vmatprep.subr.mxu0 0.0
        %1863 = vmatpush1.msra.mxu0 0.0
        %1864 = vmatprep.subr.mxu0 0.0
        %1865 = vmatpush1.msra.mxu0 0.0
        %1866 = vmatprep.subr.mxu0 0.0
        %1867 = vmatpush1.msra.mxu0 0.0
        %1868 = vmatprep.subr.mxu0 0.0
        %1869 = vmatpush1.msra.mxu0 0.0
        %1870 = vmatprep.subr.mxu0 0.0
        %1871 = vmatpush1.msra.mxu0 0.0
        %1872 = vmatprep.subr.mxu0 0.0
        %1873 = vmatpush1.msra.mxu0 0.0
        %1874 = vmatprep.subr.mxu0 0.0
        %1875 = vmatpush1.msra.mxu0 0.0
        %1876 = vmatprep.mubr.f32.mxu0 0.0
        %1877 = vmatmul.mubr.f32.gmra.mrb[0].mxu0 %v1730
        %v1878 = vpop.f32.mrb[0].mxu0
        %v1879 = vadd.f32 %v1722, %v1878
        %v1880 = vpop.f32.mrb[0].mxu0
        %v1881 = vadd.f32 %v1722, %v1880
        %1882 = vmatprep.mubr.f32.mxu0 0.0
        %1883 = vmatmul.mubr.f32.gmra.mrb[0].mxu0 %v1733
        %v1884 = vpop.f32.mrb[0].mxu0
        %v1885 = vadd.f32 %v1727, %v1884
        %v1886 = vpop.f32.mrb[0].mxu0
        %v1887 = vadd.f32 %v1727, %v1886
        %1888 = vdwg.mxu0
        %v1889 = vadd.f32 %v1802, %v1377
        %v1890 = vadd.f32 %v1804, %v1378
        %v1891 = vadd.f32 %v1879, %v1379
        %v1892 = vadd.f32 %v1881, %v1380
        %v1893 = vadd.f32 %v1808, %v1381
        %v1894 = vadd.f32 %v1810, %v1382
        %v1895 = vadd.f32 %v1885, %v1383
        %v1896 = vadd.f32 %v1887, %v1384
        %v1897 = vadd.f32 %v1385, %v1889
        %v1898 = vadd.f32 %v1386, %v1890
        %v1899 = vadd.f32 %v1387, %v1891
        %v1900 = vadd.f32 %v1388, %v1892
        %v1901 = vadd.f32 %v1389, %v1893
        %v1902 = vadd.f32 %v1390, %v1894
        %v1903 = vadd.f32 %v1391, %v1895
        %v1904 = vadd.f32 %v1392, %v1896
        %s1905 = scalar_lea.vmem [#allocation2], 48
        %v1906 = vld [vmem:[%s1905] sm:$0xff]
        %v1907 = vld [vmem:[%s1905 + $0x8] sm:$0xff]
        %1908 = vst [vmem:[%s1905] sm:$0xff] %v1892
        %1909 = vst [vmem:[%s1905 + $0x8] sm:$0xff] %v1896
        %1920 = vrot.lane.b32.xlu0 %v1906, 4
        %v1921 = vpop.permute.xlu0 %1920
        %1922 = vrot.lane.b32.xlu0 %v1889, 4
        %v1923 = vpop.permute.xlu0 %1922
        %1924 = vrot.lane.b32.xlu0 %v1890, 4
        %v1925 = vpop.permute.xlu0 %1924
        %1926 = vrot.lane.b32.xlu0 %v1891, 4
        %v1927 = vpop.permute.xlu0 %1926
        %1928 = vrot.lane.b32.xlu0 %v1892, 4
        %v1929 = vpop.permute.xlu0 %1928
        %1930 = vrot.lane.b32.xlu0 %v1907, 4
        %v1931 = vpop.permute.xlu0 %1930
        %1932 = vrot.lane.b32.xlu0 %v1893, 4
        %v1933 = vpop.permute.xlu0 %1932
        %1934 = vrot.lane.b32.xlu0 %v1894, 4
        %v1935 = vpop.permute.xlu0 %1934
        %1936 = vrot.lane.b32.xlu0 %v1895, 4
        %v1937 = vpop.permute.xlu0 %1936
        %1938 = vrot.lane.b32.xlu0 %v1896, 4
        %v1939 = vpop.permute.xlu0 %1938
        %vm1940 = vcmask 31744
        %v1941 = vsel %vm1940, %v1921, %v1923
        %v1942 = vsel %vm1940, %v1923, %v1925
        %v1943 = vsel %vm1940, %v1925, %v1927
        %v1944 = vsel %vm1940, %v1927, %v1929
        %v1945 = vsel %vm1940, %v1931, %v1933
        %v1946 = vsel %vm1940, %v1933, %v1935
        %v1947 = vsel %vm1940, %v1935, %v1937
        %v1948 = vsel %vm1940, %v1937, %v1939
        %s1957 = scalar_lea.vmem %s5, 64
        %v1958 = vld [vmem:[%s1957] sm:$0xff]
        %v1959 = vld [vmem:[%s1957 + $0x8] sm:$0xff]
        %v1960 = vld [vmem:[%s1957 + $0x10] sm:$0xff]
        %v1961 = vld [vmem:[%s1957 + $0x18] sm:$0xff]
        %s1962 = scalar_lea.vmem %s6, 64
        %v1963 = vld [vmem:[%s1962] sm:$0xff]
        %v1964 = vld [vmem:[%s1962 + $0x8] sm:$0xff]
        %v1965 = vld [vmem:[%s1962 + $0x10] sm:$0xff]
        %v1966 = vld [vmem:[%s1962 + $0x18] sm:$0xff]
        %1968 = vset.pattern.permute.xlu0 0
        %1969 = vperm.xlu0 %1968, %v1963
        %v1970 = vpop.permute.xlu0 %1969
        %1973 = vset.pattern.permute.xlu0 0
        %1974 = vperm.xlu0 %1973, %v1964
        %v1975 = vpop.permute.xlu0 %1974
        %1978 = vset.pattern.permute.xlu0 0
        %1979 = vperm.xlu0 %1978, %v1965
        %v1980 = vpop.permute.xlu0 %1979
        %1983 = vset.pattern.permute.xlu0 0
        %1984 = vperm.xlu0 %1983, %v1966
        %v1985 = vpop.permute.xlu0 %1984
        %v1988 = vsel %vm964, %v1958, 0
        %v1991 = vsel %vm964, %v1959, 0
        %v1994 = vsel %vm964, %v1960, 0
        %v1997 = vsel %vm964, %v1961, 0
        %1999 = vmatprep.subr.mxu0 %v1890
        %2000 = vmatpush1.msra.mxu0 %v1889
        %2001 = vmatprep.subr.mxu0 %v1894
        %2002 = vmatpush1.msra.mxu0 %v1893
        %2003 = vmatprep.subr.mxu0 %v1942
        %2004 = vmatpush1.msra.mxu0 %v1941
        %2005 = vmatprep.subr.mxu0 %v1946
        %2006 = vmatpush1.msra.mxu0 %v1945
        %2007 = vmatprep.subr.mxu0 0.0
        %2008 = vmatpush1.msra.mxu0 0.0
        %2009 = vmatprep.subr.mxu0 0.0
        %2010 = vmatpush1.msra.mxu0 0.0
        %2011 = vmatprep.subr.mxu0 0.0
        %2012 = vmatpush1.msra.mxu0 0.0
        %2013 = vmatprep.subr.mxu0 0.0
        %2014 = vmatpush1.msra.mxu0 0.0
        %2015 = vmatprep.subr.mxu0 0.0
        %2016 = vmatpush1.msra.mxu0 0.0
        %2017 = vmatprep.subr.mxu0 0.0
        %2018 = vmatpush1.msra.mxu0 0.0
        %2019 = vmatprep.subr.mxu0 0.0
        %2020 = vmatpush1.msra.mxu0 0.0
        %2021 = vmatprep.subr.mxu0 0.0
        %2022 = vmatpush1.msra.mxu0 0.0
        %2023 = vmatprep.subr.mxu0 0.0
        %2024 = vmatpush1.msra.mxu0 0.0
        %2025 = vmatprep.subr.mxu0 0.0
        %2026 = vmatpush1.msra.mxu0 0.0
        %2027 = vmatprep.subr.mxu0 0.0
        %2028 = vmatpush1.msra.mxu0 0.0
        %2029 = vmatprep.subr.mxu0 0.0
        %2030 = vmatpush1.msra.mxu0 0.0
        %2031 = vmatprep.subr.mxu0 0.0
        %2032 = vmatpush1.msra.mxu0 0.0
        %2033 = vmatprep.subr.mxu0 0.0
        %2034 = vmatpush1.msra.mxu0 0.0
        %2035 = vmatprep.subr.mxu0 0.0
        %2036 = vmatpush1.msra.mxu0 0.0
        %2037 = vmatprep.subr.mxu0 0.0
        %2038 = vmatpush1.msra.mxu0 0.0
        %2039 = vmatprep.subr.mxu0 0.0
        %2040 = vmatpush1.msra.mxu0 0.0
        %2041 = vmatprep.subr.mxu0 0.0
        %2042 = vmatpush1.msra.mxu0 0.0
        %2043 = vmatprep.subr.mxu0 0.0
        %2044 = vmatpush1.msra.mxu0 0.0
        %2045 = vmatprep.subr.mxu0 0.0
        %2046 = vmatpush1.msra.mxu0 0.0
        %2047 = vmatprep.subr.mxu0 0.0
        %2048 = vmatpush1.msra.mxu0 0.0
        %2049 = vmatprep.subr.mxu0 0.0
        %2050 = vmatpush1.msra.mxu0 0.0
        %2051 = vmatprep.subr.mxu0 0.0
        %2052 = vmatpush1.msra.mxu0 0.0
        %2053 = vmatprep.subr.mxu0 0.0
        %2054 = vmatpush1.msra.mxu0 0.0
        %2055 = vmatprep.subr.mxu0 0.0
        %2056 = vmatpush1.msra.mxu0 0.0
        %2057 = vmatprep.subr.mxu0 0.0
        %2058 = vmatpush1.msra.mxu0 0.0
        %2059 = vmatprep.subr.mxu0 0.0
        %2060 = vmatpush1.msra.mxu0 0.0
        %2061 = vmatprep.subr.mxu0 0.0
        %2062 = vmatpush1.msra.mxu0 0.0
        %2063 = vmatprep.mubr.f32.mxu0 0.0
        %2064 = vmatmul.mubr.f32.gmra.mrb[0].mxu0 %v1988
        %v2065 = vpop.f32.mrb[0].mxu0
        %v2066 = vadd.f32 %v1970, %v2065
        %v2067 = vpop.f32.mrb[0].mxu0
        %v2068 = vadd.f32 %v1970, %v2067
        %2069 = vmatprep.mubr.f32.mxu0 0.0
        %2070 = vmatmul.mubr.f32.gmra.mrb[0].mxu0 %v1991
        %v2071 = vpop.f32.mrb[0].mxu0
        %v2072 = vadd.f32 %v1975, %v2071
        %v2073 = vpop.f32.mrb[0].mxu0
        %v2074 = vadd.f32 %v1975, %v2073
        %2075 = vmatprep.mubr.f32.mxu0 0.0
        %2076 = vmatmul.mubr.f32.gmra.mrb[0].mxu0 %v1994
        %v2077 = vpop.f32.mrb[0].mxu0
        %v2078 = vadd.f32 %v1980, %v2077
        %v2079 = vpop.f32.mrb[0].mxu0
        %v2080 = vadd.f32 %v1980, %v2079
        %2081 = vmatprep.mubr.f32.mxu0 0.0
        %2082 = vmatmul.mubr.f32.gmra.mrb[0].mxu0 %v1997
        %v2083 = vpop.f32.mrb[0].mxu0
        %v2084 = vadd.f32 %v1985, %v2083
        %v2085 = vpop.f32.mrb[0].mxu0
        %v2086 = vadd.f32 %v1985, %v2085
        %2087 = vdwg.mxu0
        %2088 = vmatprep.subr.mxu0 %v1892
        %2089 = vmatpush1.msra.mxu0 %v1891
        %2090 = vmatprep.subr.mxu0 %v1896
        %2091 = vmatpush1.msra.mxu0 %v1895
        %2092 = vmatprep.subr.mxu0 %v1944
        %2093 = vmatpush1.msra.mxu0 %v1943
        %2094 = vmatprep.subr.mxu0 %v1948
        %2095 = vmatpush1.msra.mxu0 %v1947
        %2096 = vmatprep.subr.mxu0 0.0
        %2097 = vmatpush1.msra.mxu0 0.0
        %2098 = vmatprep.subr.mxu0 0.0
        %2099 = vmatpush1.msra.mxu0 0.0
        %2100 = vmatprep.subr.mxu0 0.0
        %2101 = vmatpush1.msra.mxu0 0.0
        %2102 = vmatprep.subr.mxu0 0.0
        %2103 = vmatpush1.msra.mxu0 0.0
        %2104 = vmatprep.subr.mxu0 0.0
        %2105 = vmatpush1.msra.mxu0 0.0
        %2106 = vmatprep.subr.mxu0 0.0
        %2107 = vmatpush1.msra.mxu0 0.0
        %2108 = vmatprep.subr.mxu0 0.0
        %2109 = vmatpush1.msra.mxu0 0.0
        %2110 = vmatprep.subr.mxu0 0.0
        %2111 = vmatpush1.msra.mxu0 0.0
        %2112 = vmatprep.subr.mxu0 0.0
        %2113 = vmatpush1.msra.mxu0 0.0
        %2114 = vmatprep.subr.mxu0 0.0
        %2115 = vmatpush1.msra.mxu0 0.0
        %2116 = vmatprep.subr.mxu0 0.0
        %2117 = vmatpush1.msra.mxu0 0.0
        %2118 = vmatprep.subr.mxu0 0.0
        %2119 = vmatpush1.msra.mxu0 0.0
        %2120 = vmatprep.subr.mxu0 0.0
        %2121 = vmatpush1.msra.mxu0 0.0
        %2122 = vmatprep.subr.mxu0 0.0
        %2123 = vmatpush1.msra.mxu0 0.0
        %2124 = vmatprep.subr.mxu0 0.0
        %2125 = vmatpush1.msra.mxu0 0.0
        %2126 = vmatprep.subr.mxu0 0.0
        %2127 = vmatpush1.msra.mxu0 0.0
        %2128 = vmatprep.subr.mxu0 0.0
        %2129 = vmatpush1.msra.mxu0 0.0
        %2130 = vmatprep.subr.mxu0 0.0
        %2131 = vmatpush1.msra.mxu0 0.0
        %2132 = vmatprep.subr.mxu0 0.0
        %2133 = vmatpush1.msra.mxu0 0.0
        %2134 = vmatprep.subr.mxu0 0.0
        %2135 = vmatpush1.msra.mxu0 0.0
        %2136 = vmatprep.subr.mxu0 0.0
        %2137 = vmatpush1.msra.mxu0 0.0
        %2138 = vmatprep.subr.mxu0 0.0
        %2139 = vmatpush1.msra.mxu0 0.0
        %2140 = vmatprep.subr.mxu0 0.0
        %2141 = vmatpush1.msra.mxu0 0.0
        %2142 = vmatprep.subr.mxu0 0.0
        %2143 = vmatpush1.msra.mxu0 0.0
        %2144 = vmatprep.subr.mxu0 0.0
        %2145 = vmatpush1.msra.mxu0 0.0
        %2146 = vmatprep.subr.mxu0 0.0
        %2147 = vmatpush1.msra.mxu0 0.0
        %2148 = vmatprep.subr.mxu0 0.0
        %2149 = vmatpush1.msra.mxu0 0.0
        %2150 = vmatprep.subr.mxu0 0.0
        %2151 = vmatpush1.msra.mxu0 0.0
        %2152 = vmatprep.mubr.f32.mxu0 0.0
        %2153 = vmatmul.mubr.f32.gmra.mrb[0].mxu0 %v1988
        %v2154 = vpop.f32.mrb[0].mxu0
        %v2155 = vadd.f32 %v1970, %v2154
        %v2156 = vpop.f32.mrb[0].mxu0
        %v2157 = vadd.f32 %v1970, %v2156
        %2158 = vmatprep.mubr.f32.mxu0 0.0
        %2159 = vmatmul.mubr.f32.gmra.mrb[0].mxu0 %v1991
        %v2160 = vpop.f32.mrb[0].mxu0
        %v2161 = vadd.f32 %v1975, %v2160
        %v2162 = vpop.f32.mrb[0].mxu0
        %v2163 = vadd.f32 %v1975, %v2162
        %2164 = vmatprep.mubr.f32.mxu0 0.0
        %2165 = vmatmul.mubr.f32.gmra.mrb[0].mxu0 %v1994
        %v2166 = vpop.f32.mrb[0].mxu0
        %v2167 = vadd.f32 %v1980, %v2166
        %v2168 = vpop.f32.mrb[0].mxu0
        %v2169 = vadd.f32 %v1980, %v2168
        %2170 = vmatprep.mubr.f32.mxu0 0.0
        %2171 = vmatmul.mubr.f32.gmra.mrb[0].mxu0 %v1997
        %v2172 = vpop.f32.mrb[0].mxu0
        %v2173 = vadd.f32 %v1985, %v2172
        %v2174 = vpop.f32.mrb[0].mxu0
        %v2175 = vadd.f32 %v1985, %v2174
        %2176 = vdwg.mxu0
        %v2177 = vtanh.pop %v2066
        %v2178 = vtanh.pop %v2068
        %v2179 = vtanh.pop %v2155
        %v2180 = vtanh.pop %v2157
        %v2181 = vtanh.pop %v2072
        %v2182 = vtanh.pop %v2074
        %v2183 = vtanh.pop %v2161
        %v2184 = vtanh.pop %v2163
        %v2185 = vmul.f32 %v2078, 0.5
        %v2186 = vmul.f32 %v2080, 0.5
        %v2187 = vmul.f32 %v2167, 0.5
        %v2188 = vmul.f32 %v2169, 0.5
        %v2189 = vmul.f32 %v2084, 0.5
        %v2190 = vmul.f32 %v2086, 0.5
        %v2191 = vmul.f32 %v2173, 0.5
        %v2192 = vmul.f32 %v2175, 0.5
        %v2193 = vtanh.pop %v2185
        %v2194 = vtanh.pop %v2186
        %v2195 = vtanh.pop %v2187
        %v2196 = vtanh.pop %v2188
        %v2197 = vtanh.pop %v2189
        %v2198 = vtanh.pop %v2190
        %v2199 = vtanh.pop %v2191
        %v2200 = vtanh.pop %v2192
        %v2201 = vadd.f32 %v2193, 1.0
        %v2202 = vadd.f32 %v2194, 1.0
        %v2203 = vadd.f32 %v2195, 1.0
        %v2204 = vadd.f32 %v2196, 1.0
        %v2205 = vadd.f32 %v2197, 1.0
        %v2206 = vadd.f32 %v2198, 1.0
        %v2207 = vadd.f32 %v2199, 1.0
        %v2208 = vadd.f32 %v2200, 1.0
        %v2209 = vmul.f32 %v2201, 0.5
        %v2210 = vmul.f32 %v2202, 0.5
        %v2211 = vmul.f32 %v2203, 0.5
        %v2212 = vmul.f32 %v2204, 0.5
        %v2213 = vmul.f32 %v2205, 0.5
        %v2214 = vmul.f32 %v2206, 0.5
        %v2215 = vmul.f32 %v2207, 0.5
        %v2216 = vmul.f32 %v2208, 0.5
        %v2217 = vmul.f32 %v2177, %v2209
        %v2218 = vmul.f32 %v2178, %v2210
        %v2219 = vmul.f32 %v2179, %v2211
        %v2220 = vmul.f32 %v2180, %v2212
        %v2221 = vmul.f32 %v2181, %v2213
        %v2222 = vmul.f32 %v2182, %v2214
        %v2223 = vmul.f32 %v2183, %v2215
        %v2224 = vmul.f32 %v2184, %v2216
        %s2225 = scalar_lea.vmem %s7, 32
        %v2226 = vld [vmem:[%s2225] sm:$0xff]
        %v2227 = vld [vmem:[%s2225 + $0x8] sm:$0xff]
        %s2228 = scalar_lea.vmem %s8, 32
        %v2229 = vld [vmem:[%s2228] sm:$0xff]
        %v2230 = vld [vmem:[%s2228 + $0x8] sm:$0xff]
        %2232 = vset.pattern.permute.xlu0 0
        %2233 = vperm.xlu0 %2232, %v2229
        %v2234 = vpop.permute.xlu0 %2233
        %2237 = vset.pattern.permute.xlu0 0
        %2238 = vperm.xlu0 %2237, %v2230
        %v2239 = vpop.permute.xlu0 %2238
        %v2242 = vsel %vm716, %v2226, 0
        %v2245 = vsel %vm716, %v2227, 0
        %2247 = vmatprep.subr.mxu0 %v2218
        %2248 = vmatpush1.msra.mxu0 %v2217
        %2249 = vmatprep.subr.mxu0 %v2222
        %2250 = vmatpush1.msra.mxu0 %v2221
        %2251 = vmatprep.subr.mxu0 0.0
        %2252 = vmatpush1.msra.mxu0 0.0
        %2253 = vmatprep.subr.mxu0 0.0
        %2254 = vmatpush1.msra.mxu0 0.0
        %2255 = vmatprep.subr.mxu0 0.0
        %2256 = vmatpush1.msra.mxu0 0.0
        %2257 = vmatprep.subr.mxu0 0.0
        %2258 = vmatpush1.msra.mxu0 0.0
        %2259 = vmatprep.subr.mxu0 0.0
        %2260 = vmatpush1.msra.mxu0 0.0
        %2261 = vmatprep.subr.mxu0 0.0
        %2262 = vmatpush1.msra.mxu0 0.0
        %2263 = vmatprep.subr.mxu0 0.0
        %2264 = vmatpush1.msra.mxu0 0.0
        %2265 = vmatprep.subr.mxu0 0.0
        %2266 = vmatpush1.msra.mxu0 0.0
        %2267 = vmatprep.subr.mxu0 0.0
        %2268 = vmatpush1.msra.mxu0 0.0
        %2269 = vmatprep.subr.mxu0 0.0
        %2270 = vmatpush1.msra.mxu0 0.0
        %2271 = vmatprep.subr.mxu0 0.0
        %2272 = vmatpush1.msra.mxu0 0.0
        %2273 = vmatprep.subr.mxu0 0.0
        %2274 = vmatpush1.msra.mxu0 0.0
        %2275 = vmatprep.subr.mxu0 0.0
        %2276 = vmatpush1.msra.mxu0 0.0
        %2277 = vmatprep.subr.mxu0 0.0
        %2278 = vmatpush1.msra.mxu0 0.0
        %2279 = vmatprep.subr.mxu0 0.0
        %2280 = vmatpush1.msra.mxu0 0.0
        %2281 = vmatprep.subr.mxu0 0.0
        %2282 = vmatpush1.msra.mxu0 0.0
        %2283 = vmatprep.subr.mxu0 0.0
        %2284 = vmatpush1.msra.mxu0 0.0
        %2285 = vmatprep.subr.mxu0 0.0
        %2286 = vmatpush1.msra.mxu0 0.0
        %2287 = vmatprep.subr.mxu0 0.0
        %2288 = vmatpush1.msra.mxu0 0.0
        %2289 = vmatprep.subr.mxu0 0.0
        %2290 = vmatpush1.msra.mxu0 0.0
        %2291 = vmatprep.subr.mxu0 0.0
        %2292 = vmatpush1.msra.mxu0 0.0
        %2293 = vmatprep.subr.mxu0 0.0
        %2294 = vmatpush1.msra.mxu0 0.0
        %2295 = vmatprep.subr.mxu0 0.0
        %2296 = vmatpush1.msra.mxu0 0.0
        %2297 = vmatprep.subr.mxu0 0.0
        %2298 = vmatpush1.msra.mxu0 0.0
        %2299 = vmatprep.subr.mxu0 0.0
        %2300 = vmatpush1.msra.mxu0 0.0
        %2301 = vmatprep.subr.mxu0 0.0
        %2302 = vmatpush1.msra.mxu0 0.0
        %2303 = vmatprep.subr.mxu0 0.0
        %2304 = vmatpush1.msra.mxu0 0.0
        %2305 = vmatprep.subr.mxu0 0.0
        %2306 = vmatpush1.msra.mxu0 0.0
        %2307 = vmatprep.subr.mxu0 0.0
        %2308 = vmatpush1.msra.mxu0 0.0
        %2309 = vmatprep.subr.mxu0 0.0
        %2310 = vmatpush1.msra.mxu0 0.0
        %2311 = vmatprep.mubr.f32.mxu0 0.0
        %2312 = vmatmul.mubr.f32.gmra.mrb[0].mxu0 %v2242
        %v2313 = vpop.f32.mrb[0].mxu0
        %v2314 = vadd.f32 %v2234, %v2313
        %v2315 = vpop.f32.mrb[0].mxu0
        %v2316 = vadd.f32 %v2234, %v2315
        %2317 = vmatprep.mubr.f32.mxu0 0.0
        %2318 = vmatmul.mubr.f32.gmra.mrb[0].mxu0 %v2245
        %v2319 = vpop.f32.mrb[0].mxu0
        %v2320 = vadd.f32 %v2239, %v2319
        %v2321 = vpop.f32.mrb[0].mxu0
        %v2322 = vadd.f32 %v2239, %v2321
        %2323 = vdwg.mxu0
        %2324 = vmatprep.subr.mxu0 %v2220
        %2325 = vmatpush1.msra.mxu0 %v2219
        %2326 = vmatprep.subr.mxu0 %v2224
        %2327 = vmatpush1.msra.mxu0 %v2223
        %2328 = vmatprep.subr.mxu0 0.0
        %2329 = vmatpush1.msra.mxu0 0.0
        %2330 = vmatprep.subr.mxu0 0.0
        %2331 = vmatpush1.msra.mxu0 0.0
        %2332 = vmatprep.subr.mxu0 0.0
        %2333 = vmatpush1.msra.mxu0 0.0
        %2334 = vmatprep.subr.mxu0 0.0
        %2335 = vmatpush1.msra.mxu0 0.0
        %2336 = vmatprep.subr.mxu0 0.0
        %2337 = vmatpush1.msra.mxu0 0.0
        %2338 = vmatprep.subr.mxu0 0.0
        %2339 = vmatpush1.msra.mxu0 0.0
        %2340 = vmatprep.subr.mxu0 0.0
        %2341 = vmatpush1.msra.mxu0 0.0
        %2342 = vmatprep.subr.mxu0 0.0
        %2343 = vmatpush1.msra.mxu0 0.0
        %2344 = vmatprep.subr.mxu0 0.0
        %2345 = vmatpush1.msra.mxu0 0.0
        %2346 = vmatprep.subr.mxu0 0.0
        %2347 = vmatpush1.msra.mxu0 0.0
        %2348 = vmatprep.subr.mxu0 0.0
        %2349 = vmatpush1.msra.mxu0 0.0
        %2350 = vmatprep.subr.mxu0 0.0
        %2351 = vmatpush1.msra.mxu0 0.0
        %2352 = vmatprep.subr.mxu0 0.0
        %2353 = vmatpush1.msra.mxu0 0.0
        %2354 = vmatprep.subr.mxu0 0.0
        %2355 = vmatpush1.msra.mxu0 0.0
        %2356 = vmatprep.subr.mxu0 0.0
        %2357 = vmatpush1.msra.mxu0 0.0
        %2358 = vmatprep.subr.mxu0 0.0
        %2359 = vmatpush1.msra.mxu0 0.0
        %2360 = vmatprep.subr.mxu0 0.0
        %2361 = vmatpush1.msra.mxu0 0.0
        %2362 = vmatprep.subr.mxu0 0.0
        %2363 = vmatpush1.msra.mxu0 0.0
        %2364 = vmatprep.subr.mxu0 0.0
        %2365 = vmatpush1.msra.mxu0 0.0
        %2366 = vmatprep.subr.mxu0 0.0
        %2367 = vmatpush1.msra.mxu0 0.0
        %2368 = vmatprep.subr.mxu0 0.0
        %2369 = vmatpush1.msra.mxu0 0.0
        %2370 = vmatprep.subr.mxu0 0.0
        %2371 = vmatpush1.msra.mxu0 0.0
        %2372 = vmatprep.subr.mxu0 0.0
        %2373 = vmatpush1.msra.mxu0 0.0
        %2374 = vmatprep.subr.mxu0 0.0
        %2375 = vmatpush1.msra.mxu0 0.0
        %2376 = vmatprep.subr.mxu0 0.0
        %2377 = vmatpush1.msra.mxu0 0.0
        %2378 = vmatprep.subr.mxu0 0.0
        %2379 = vmatpush1.msra.mxu0 0.0
        %2380 = vmatprep.subr.mxu0 0.0
        %2381 = vmatpush1.msra.mxu0 0.0
        %2382 = vmatprep.subr.mxu0 0.0
        %2383 = vmatpush1.msra.mxu0 0.0
        %2384 = vmatprep.subr.mxu0 0.0
        %2385 = vmatpush1.msra.mxu0 0.0
        %2386 = vmatprep.subr.mxu0 0.0
        %2387 = vmatpush1.msra.mxu0 0.0
        %2388 = vmatprep.mubr.f32.mxu0 0.0
        %2389 = vmatmul.mubr.f32.gmra.mrb[0].mxu0 %v2242
        %v2390 = vpop.f32.mrb[0].mxu0
        %v2391 = vadd.f32 %v2234, %v2390
        %v2392 = vpop.f32.mrb[0].mxu0
        %v2393 = vadd.f32 %v2234, %v2392
        %2394 = vmatprep.mubr.f32.mxu0 0.0
        %2395 = vmatmul.mubr.f32.gmra.mrb[0].mxu0 %v2245
        %v2396 = vpop.f32.mrb[0].mxu0
        %v2397 = vadd.f32 %v2239, %v2396
        %v2398 = vpop.f32.mrb[0].mxu0
        %v2399 = vadd.f32 %v2239, %v2398
        %2400 = vdwg.mxu0
        %v2401 = vadd.f32 %v2314, %v1889
        %v2402 = vadd.f32 %v2316, %v1890
        %v2403 = vadd.f32 %v2391, %v1891
        %v2404 = vadd.f32 %v2393, %v1892
        %v2405 = vadd.f32 %v2320, %v1893
        %v2406 = vadd.f32 %v2322, %v1894
        %v2407 = vadd.f32 %v2397, %v1895
        %v2408 = vadd.f32 %v2399, %v1896
        %v2409 = vadd.f32 %v1897, %v2401
        %v2410 = vadd.f32 %v1898, %v2402
        %v2411 = vadd.f32 %v1899, %v2403
        %v2412 = vadd.f32 %v1900, %v2404
        %v2413 = vadd.f32 %v1901, %v2405
        %v2414 = vadd.f32 %v1902, %v2406
        %v2415 = vadd.f32 %v1903, %v2407
        %v2416 = vadd.f32 %v1904, %v2408
        %s2417 = scalar_lea.vmem [#allocation2], 64
        %v2418 = vld [vmem:[%s2417] sm:$0xff]
        %v2419 = vld [vmem:[%s2417 + $0x8] sm:$0xff]
        %2420 = vst [vmem:[%s2417] sm:$0xff] %v2404
        %2421 = vst [vmem:[%s2417 + $0x8] sm:$0xff] %v2408
        %2432 = vrot.lane.b32.xlu0 %v2418, 8
        %v2433 = vpop.permute.xlu0 %2432
        %2434 = vrot.lane.b32.xlu0 %v2401, 8
        %v2435 = vpop.permute.xlu0 %2434
        %2436 = vrot.lane.b32.xlu0 %v2402, 8
        %v2437 = vpop.permute.xlu0 %2436
        %2438 = vrot.lane.b32.xlu0 %v2403, 8
        %v2439 = vpop.permute.xlu0 %2438
        %2440 = vrot.lane.b32.xlu0 %v2404, 8
        %v2441 = vpop.permute.xlu0 %2440
        %2442 = vrot.lane.b32.xlu0 %v2419, 8
        %v2443 = vpop.permute.xlu0 %2442
        %2444 = vrot.lane.b32.xlu0 %v2405, 8
        %v2445 = vpop.permute.xlu0 %2444
        %2446 = vrot.lane.b32.xlu0 %v2406, 8
        %v2447 = vpop.permute.xlu0 %2446
        %2448 = vrot.lane.b32.xlu0 %v2407, 8
        %v2449 = vpop.permute.xlu0 %2448
        %2450 = vrot.lane.b32.xlu0 %v2408, 8
        %v2451 = vpop.permute.xlu0 %2450
        %v2452 = vsel %vm490, %v2433, %v2435
        %v2453 = vsel %vm490, %v2435, %v2437
        %v2454 = vsel %vm490, %v2437, %v2439
        %v2455 = vsel %vm490, %v2439, %v2441
        %v2456 = vsel %vm490, %v2443, %v2445
        %v2457 = vsel %vm490, %v2445, %v2447
        %v2458 = vsel %vm490, %v2447, %v2449
        %v2459 = vsel %vm490, %v2449, %v2451
        %s2468 = scalar_lea.vmem %s5, 96
        %v2469 = vld [vmem:[%s2468] sm:$0xff]
        %v2470 = vld [vmem:[%s2468 + $0x8] sm:$0xff]
        %v2471 = vld [vmem:[%s2468 + $0x10] sm:$0xff]
        %v2472 = vld [vmem:[%s2468 + $0x18] sm:$0xff]
        %s2473 = scalar_lea.vmem %s6, 96
        %v2474 = vld [vmem:[%s2473] sm:$0xff]
        %v2475 = vld [vmem:[%s2473 + $0x8] sm:$0xff]
        %v2476 = vld [vmem:[%s2473 + $0x10] sm:$0xff]
        %v2477 = vld [vmem:[%s2473 + $0x18] sm:$0xff]
        %2479 = vset.pattern.permute.xlu0 0
        %2480 = vperm.xlu0 %2479, %v2474
        %v2481 = vpop.permute.xlu0 %2480
        %2484 = vset.pattern.permute.xlu0 0
        %2485 = vperm.xlu0 %2484, %v2475
        %v2486 = vpop.permute.xlu0 %2485
        %2489 = vset.pattern.permute.xlu0 0
        %2490 = vperm.xlu0 %2489, %v2476
        %v2491 = vpop.permute.xlu0 %2490
        %2494 = vset.pattern.permute.xlu0 0
        %2495 = vperm.xlu0 %2494, %v2477
        %v2496 = vpop.permute.xlu0 %2495
        %v2499 = vsel %vm964, %v2469, 0
        %v2502 = vsel %vm964, %v2470, 0
        %v2505 = vsel %vm964, %v2471, 0
        %v2508 = vsel %vm964, %v2472, 0
        %2510 = vmatprep.subr.mxu0 %v2402
        %2511 = vmatpush1.msra.mxu0 %v2401
        %2512 = vmatprep.subr.mxu0 %v2406
        %2513 = vmatpush1.msra.mxu0 %v2405
        %2514 = vmatprep.subr.mxu0 %v2453
        %2515 = vmatpush1.msra.mxu0 %v2452
        %2516 = vmatprep.subr.mxu0 %v2457
        %2517 = vmatpush1.msra.mxu0 %v2456
        %2518 = vmatprep.subr.mxu0 0.0
        %2519 = vmatpush1.msra.mxu0 0.0
        %2520 = vmatprep.subr.mxu0 0.0
        %2521 = vmatpush1.msra.mxu0 0.0
        %2522 = vmatprep.subr.mxu0 0.0
        %2523 = vmatpush1.msra.mxu0 0.0
        %2524 = vmatprep.subr.mxu0 0.0
        %2525 = vmatpush1.msra.mxu0 0.0
        %2526 = vmatprep.subr.mxu0 0.0
        %2527 = vmatpush1.msra.mxu0 0.0
        %2528 = vmatprep.subr.mxu0 0.0
        %2529 = vmatpush1.msra.mxu0 0.0
        %2530 = vmatprep.subr.mxu0 0.0
        %2531 = vmatpush1.msra.mxu0 0.0
        %2532 = vmatprep.subr.mxu0 0.0
        %2533 = vmatpush1.msra.mxu0 0.0
        %2534 = vmatprep.subr.mxu0 0.0
        %2535 = vmatpush1.msra.mxu0 0.0
        %2536 = vmatprep.subr.mxu0 0.0
        %2537 = vmatpush1.msra.mxu0 0.0
        %2538 = vmatprep.subr.mxu0 0.0
        %2539 = vmatpush1.msra.mxu0 0.0
        %2540 = vmatprep.subr.mxu0 0.0
        %2541 = vmatpush1.msra.mxu0 0.0
        %2542 = vmatprep.subr.mxu0 0.0
        %2543 = vmatpush1.msra.mxu0 0.0
        %2544 = vmatprep.subr.mxu0 0.0
        %2545 = vmatpush1.msra.mxu0 0.0
        %2546 = vmatprep.subr.mxu0 0.0
        %2547 = vmatpush1.msra.mxu0 0.0
        %2548 = vmatprep.subr.mxu0 0.0
        %2549 = vmatpush1.msra.mxu0 0.0
        %2550 = vmatprep.subr.mxu0 0.0
        %2551 = vmatpush1.msra.mxu0 0.0
        %2552 = vmatprep.subr.mxu0 0.0
        %2553 = vmatpush1.msra.mxu0 0.0
        %2554 = vmatprep.subr.mxu0 0.0
        %2555 = vmatpush1.msra.mxu0 0.0
        %2556 = vmatprep.subr.mxu0 0.0
        %2557 = vmatpush1.msra.mxu0 0.0
        %2558 = vmatprep.subr.mxu0 0.0
        %2559 = vmatpush1.msra.mxu0 0.0
        %2560 = vmatprep.subr.mxu0 0.0
        %2561 = vmatpush1.msra.mxu0 0.0
        %2562 = vmatprep.subr.mxu0 0.0
        %2563 = vmatpush1.msra.mxu0 0.0
        %2564 = vmatprep.subr.mxu0 0.0
        %2565 = vmatpush1.msra.mxu0 0.0
        %2566 = vmatprep.subr.mxu0 0.0
        %2567 = vmatpush1.msra.mxu0 0.0
        %2568 = vmatprep.subr.mxu0 0.0
        %2569 = vmatpush1.msra.mxu0 0.0
        %2570 = vmatprep.subr.mxu0 0.0
        %2571 = vmatpush1.msra.mxu0 0.0
        %2572 = vmatprep.subr.mxu0 0.0
        %2573 = vmatpush1.msra.mxu0 0.0
        %2574 = vmatprep.mubr.f32.mxu0 0.0
        %2575 = vmatmul.mubr.f32.gmra.mrb[0].mxu0 %v2499
        %v2576 = vpop.f32.mrb[0].mxu0
        %v2577 = vadd.f32 %v2481, %v2576
        %v2578 = vpop.f32.mrb[0].mxu0
        %v2579 = vadd.f32 %v2481, %v2578
        %2580 = vmatprep.mubr.f32.mxu0 0.0
        %2581 = vmatmul.mubr.f32.gmra.mrb[0].mxu0 %v2502
        %v2582 = vpop.f32.mrb[0].mxu0
        %v2583 = vadd.f32 %v2486, %v2582
        %v2584 = vpop.f32.mrb[0].mxu0
        %v2585 = vadd.f32 %v2486, %v2584
        %2586 = vmatprep.mubr.f32.mxu0 0.0
        %2587 = vmatmul.mubr.f32.gmra.mrb[0].mxu0 %v2505
        %v2588 = vpop.f32.mrb[0].mxu0
        %v2589 = vadd.f32 %v2491, %v2588
        %v2590 = vpop.f32.mrb[0].mxu0
        %v2591 = vadd.f32 %v2491, %v2590
        %2592 = vmatprep.mubr.f32.mxu0 0.0
        %2593 = vmatmul.mubr.f32.gmra.mrb[0].mxu0 %v2508
        %v2594 = vpop.f32.mrb[0].mxu0
        %v2595 = vadd.f32 %v2496, %v2594
        %v2596 = vpop.f32.mrb[0].mxu0
        %v2597 = vadd.f32 %v2496, %v2596
        %2598 = vdwg.mxu0
        %2599 = vmatprep.subr.mxu0 %v2404
        %2600 = vmatpush1.msra.mxu0 %v2403
        %2601 = vmatprep.subr.mxu0 %v2408
        %2602 = vmatpush1.msra.mxu0 %v2407
        %2603 = vmatprep.subr.mxu0 %v2455
        %2604 = vmatpush1.msra.mxu0 %v2454
        %2605 = vmatprep.subr.mxu0 %v2459
        %2606 = vmatpush1.msra.mxu0 %v2458
        %2607 = vmatprep.subr.mxu0 0.0
        %2608 = vmatpush1.msra.mxu0 0.0
        %2609 = vmatprep.subr.mxu0 0.0
        %2610 = vmatpush1.msra.mxu0 0.0
        %2611 = vmatprep.subr.mxu0 0.0
        %2612 = vmatpush1.msra.mxu0 0.0
        %2613 = vmatprep.subr.mxu0 0.0
        %2614 = vmatpush1.msra.mxu0 0.0
        %2615 = vmatprep.subr.mxu0 0.0
        %2616 = vmatpush1.msra.mxu0 0.0
        %2617 = vmatprep.subr.mxu0 0.0
        %2618 = vmatpush1.msra.mxu0 0.0
        %2619 = vmatprep.subr.mxu0 0.0
        %2620 = vmatpush1.msra.mxu0 0.0
        %2621 = vmatprep.subr.mxu0 0.0
        %2622 = vmatpush1.msra.mxu0 0.0
        %2623 = vmatprep.subr.mxu0 0.0
        %2624 = vmatpush1.msra.mxu0 0.0
        %2625 = vmatprep.subr.mxu0 0.0
        %2626 = vmatpush1.msra.mxu0 0.0
        %2627 = vmatprep.subr.mxu0 0.0
        %2628 = vmatpush1.msra.mxu0 0.0
        %2629 = vmatprep.subr.mxu0 0.0
        %2630 = vmatpush1.msra.mxu0 0.0
        %2631 = vmatprep.subr.mxu0 0.0
        %2632 = vmatpush1.msra.mxu0 0.0
        %2633 = vmatprep.subr.mxu0 0.0
        %2634 = vmatpush1.msra.mxu0 0.0
        %2635 = vmatprep.subr.mxu0 0.0
        %2636 = vmatpush1.msra.mxu0 0.0
        %2637 = vmatprep.subr.mxu0 0.0
        %2638 = vmatpush1.msra.mxu0 0.0
        %2639 = vmatprep.subr.mxu0 0.0
        %2640 = vmatpush1.msra.mxu0 0.0
        %2641 = vmatprep.subr.mxu0 0.0
        %2642 = vmatpush1.msra.mxu0 0.0
        %2643 = vmatprep.subr.mxu0 0.0
        %2644 = vmatpush1.msra.mxu0 0.0
        %2645 = vmatprep.subr.mxu0 0.0
        %2646 = vmatpush1.msra.mxu0 0.0
        %2647 = vmatprep.subr.mxu0 0.0
        %2648 = vmatpush1.msra.mxu0 0.0
        %2649 = vmatprep.subr.mxu0 0.0
        %2650 = vmatpush1.msra.mxu0 0.0
        %2651 = vmatprep.subr.mxu0 0.0
        %2652 = vmatpush1.msra.mxu0 0.0
        %2653 = vmatprep.subr.mxu0 0.0
        %2654 = vmatpush1.msra.mxu0 0.0
        %2655 = vmatprep.subr.mxu0 0.0
        %2656 = vmatpush1.msra.mxu0 0.0
        %2657 = vmatprep.subr.mxu0 0.0
        %2658 = vmatpush1.msra.mxu0 0.0
        %2659 = vmatprep.subr.mxu0 0.0
        %2660 = vmatpush1.msra.mxu0 0.0
        %2661 = vmatprep.subr.mxu0 0.0
        %2662 = vmatpush1.msra.mxu0 0.0
        %2663 = vmatprep.mubr.f32.mxu0 0.0
        %2664 = vmatmul.mubr.f32.gmra.mrb[0].mxu0 %v2499
        %v2665 = vpop.f32.mrb[0].mxu0
        %v2666 = vadd.f32 %v2481, %v2665
        %v2667 = vpop.f32.mrb[0].mxu0
        %v2668 = vadd.f32 %v2481, %v2667
        %2669 = vmatprep.mubr.f32.mxu0 0.0
        %2670 = vmatmul.mubr.f32.gmra.mrb[0].mxu0 %v2502
        %v2671 = vpop.f32.mrb[0].mxu0
        %v2672 = vadd.f32 %v2486, %v2671
        %v2673 = vpop.f32.mrb[0].mxu0
        %v2674 = vadd.f32 %v2486, %v2673
        %2675 = vmatprep.mubr.f32.mxu0 0.0
        %2676 = vmatmul.mubr.f32.gmra.mrb[0].mxu0 %v2505
        %v2677 = vpop.f32.mrb[0].mxu0
        %v2678 = vadd.f32 %v2491, %v2677
        %v2679 = vpop.f32.mrb[0].mxu0
        %v2680 = vadd.f32 %v2491, %v2679
        %2681 = vmatprep.mubr.f32.mxu0 0.0
        %2682 = vmatmul.mubr.f32.gmra.mrb[0].mxu0 %v2508
        %v2683 = vpop.f32.mrb[0].mxu0
        %v2684 = vadd.f32 %v2496, %v2683
        %v2685 = vpop.f32.mrb[0].mxu0
        %v2686 = vadd.f32 %v2496, %v2685
        %2687 = vdwg.mxu0
        %v2688 = vtanh.pop %v2577
        %v2689 = vtanh.pop %v2579
        %v2690 = vtanh.pop %v2666
        %v2691 = vtanh.pop %v2668
        %v2692 = vtanh.pop %v2583
        %v2693 = vtanh.pop %v2585
        %v2694 = vtanh.pop %v2672
        %v2695 = vtanh.pop %v2674
        %v2696 = vmul.f32 %v2589, 0.5
        %v2697 = vmul.f32 %v2591, 0.5
        %v2698 = vmul.f32 %v2678, 0.5
        %v2699 = vmul.f32 %v2680, 0.5
        %v2700 = vmul.f32 %v2595, 0.5
        %v2701 = vmul.f32 %v2597, 0.5
        %v2702 = vmul.f32 %v2684, 0.5
        %v2703 = vmul.f32 %v2686, 0.5
        %v2704 = vtanh.pop %v2696
        %v2705 = vtanh.pop %v2697
        %v2706 = vtanh.pop %v2698
        %v2707 = vtanh.pop %v2699
        %v2708 = vtanh.pop %v2700
        %v2709 = vtanh.pop %v2701
        %v2710 = vtanh.pop %v2702
        %v2711 = vtanh.pop %v2703
        %v2712 = vadd.f32 %v2704, 1.0
        %v2713 = vadd.f32 %v2705, 1.0
        %v2714 = vadd.f32 %v2706, 1.0
        %v2715 = vadd.f32 %v2707, 1.0
        %v2716 = vadd.f32 %v2708, 1.0
        %v2717 = vadd.f32 %v2709, 1.0
        %v2718 = vadd.f32 %v2710, 1.0
        %v2719 = vadd.f32 %v2711, 1.0
        %v2720 = vmul.f32 %v2712, 0.5
        %v2721 = vmul.f32 %v2713, 0.5
        %v2722 = vmul.f32 %v2714, 0.5
        %v2723 = vmul.f32 %v2715, 0.5
        %v2724 = vmul.f32 %v2716, 0.5
        %v2725 = vmul.f32 %v2717, 0.5
        %v2726 = vmul.f32 %v2718, 0.5
        %v2727 = vmul.f32 %v2719, 0.5
        %v2728 = vmul.f32 %v2688, %v2720
        %v2729 = vmul.f32 %v2689, %v2721
        %v2730 = vmul.f32 %v2690, %v2722
        %v2731 = vmul.f32 %v2691, %v2723
        %v2732 = vmul.f32 %v2692, %v2724
        %v2733 = vmul.f32 %v2693, %v2725
        %v2734 = vmul.f32 %v2694, %v2726
        %v2735 = vmul.f32 %v2695, %v2727
        %s2736 = scalar_lea.vmem %s7, 48
        %v2737 = vld [vmem:[%s2736] sm:$0xff]
        %v2738 = vld [vmem:[%s2736 + $0x8] sm:$0xff]
        %s2739 = scalar_lea.vmem %s8, 48
        %v2740 = vld [vmem:[%s2739] sm:$0xff]
        %v2741 = vld [vmem:[%s2739 + $0x8] sm:$0xff]
        %2743 = vset.pattern.permute.xlu0 0
        %2744 = vperm.xlu0 %2743, %v2740
        %v2745 = vpop.permute.xlu0 %2744
        %2748 = vset.pattern.permute.xlu0 0
        %2749 = vperm.xlu0 %2748, %v2741
        %v2750 = vpop.permute.xlu0 %2749
        %v2753 = vsel %vm716, %v2737, 0
        %v2756 = vsel %vm716, %v2738, 0
        %2758 = vmatprep.subr.mxu0 %v2729
        %2759 = vmatpush1.msra.mxu0 %v2728
        %2760 = vmatprep.subr.mxu0 %v2733
        %2761 = vmatpush1.msra.mxu0 %v2732
        %2762 = vmatprep.subr.mxu0 0.0
        %2763 = vmatpush1.msra.mxu0 0.0
        %2764 = vmatprep.subr.mxu0 0.0
        %2765 = vmatpush1.msra.mxu0 0.0
        %2766 = vmatprep.subr.mxu0 0.0
        %2767 = vmatpush1.msra.mxu0 0.0
        %2768 = vmatprep.subr.mxu0 0.0
        %2769 = vmatpush1.msra.mxu0 0.0
        %2770 = vmatprep.subr.mxu0 0.0
        %2771 = vmatpush1.msra.mxu0 0.0
        %2772 = vmatprep.subr.mxu0 0.0
        %2773 = vmatpush1.msra.mxu0 0.0
        %2774 = vmatprep.subr.mxu0 0.0
        %2775 = vmatpush1.msra.mxu0 0.0
        %2776 = vmatprep.subr.mxu0 0.0
        %2777 = vmatpush1.msra.mxu0 0.0
        %2778 = vmatprep.subr.mxu0 0.0
        %2779 = vmatpush1.msra.mxu0 0.0
        %2780 = vmatprep.subr.mxu0 0.0
        %2781 = vmatpush1.msra.mxu0 0.0
        %2782 = vmatprep.subr.mxu0 0.0
        %2783 = vmatpush1.msra.mxu0 0.0
        %2784 = vmatprep.subr.mxu0 0.0
        %2785 = vmatpush1.msra.mxu0 0.0
        %2786 = vmatprep.subr.mxu0 0.0
        %2787 = vmatpush1.msra.mxu0 0.0
        %2788 = vmatprep.subr.mxu0 0.0
        %2789 = vmatpush1.msra.mxu0 0.0
        %2790 = vmatprep.subr.mxu0 0.0
        %2791 = vmatpush1.msra.mxu0 0.0
        %2792 = vmatprep.subr.mxu0 0.0
        %2793 = vmatpush1.msra.mxu0 0.0
        %2794 = vmatprep.subr.mxu0 0.0
        %2795 = vmatpush1.msra.mxu0 0.0
        %2796 = vmatprep.subr.mxu0 0.0
        %2797 = vmatpush1.msra.mxu0 0.0
        %2798 = vmatprep.subr.mxu0 0.0
        %2799 = vmatpush1.msra.mxu0 0.0
        %2800 = vmatprep.subr.mxu0 0.0
        %2801 = vmatpush1.msra.mxu0 0.0
        %2802 = vmatprep.subr.mxu0 0.0
        %2803 = vmatpush1.msra.mxu0 0.0
        %2804 = vmatprep.subr.mxu0 0.0
        %2805 = vmatpush1.msra.mxu0 0.0
        %2806 = vmatprep.subr.mxu0 0.0
        %2807 = vmatpush1.msra.mxu0 0.0
        %2808 = vmatprep.subr.mxu0 0.0
        %2809 = vmatpush1.msra.mxu0 0.0
        %2810 = vmatprep.subr.mxu0 0.0
        %2811 = vmatpush1.msra.mxu0 0.0
        %2812 = vmatprep.subr.mxu0 0.0
        %2813 = vmatpush1.msra.mxu0 0.0
        %2814 = vmatprep.subr.mxu0 0.0
        %2815 = vmatpush1.msra.mxu0 0.0
        %2816 = vmatprep.subr.mxu0 0.0
        %2817 = vmatpush1.msra.mxu0 0.0
        %2818 = vmatprep.subr.mxu0 0.0
        %2819 = vmatpush1.msra.mxu0 0.0
        %2820 = vmatprep.subr.mxu0 0.0
        %2821 = vmatpush1.msra.mxu0 0.0
        %2822 = vmatprep.mubr.f32.mxu0 0.0
        %2823 = vmatmul.mubr.f32.gmra.mrb[0].mxu0 %v2753
        %v2824 = vpop.f32.mrb[0].mxu0
        %v2825 = vadd.f32 %v2745, %v2824
        %v2826 = vpop.f32.mrb[0].mxu0
        %v2827 = vadd.f32 %v2745, %v2826
        %2828 = vmatprep.mubr.f32.mxu0 0.0
        %2829 = vmatmul.mubr.f32.gmra.mrb[0].mxu0 %v2756
        %v2830 = vpop.f32.mrb[0].mxu0
        %v2831 = vadd.f32 %v2750, %v2830
        %v2832 = vpop.f32.mrb[0].mxu0
        %v2833 = vadd.f32 %v2750, %v2832
        %2834 = vdwg.mxu0
        %2835 = vmatprep.subr.mxu0 %v2731
        %2836 = vmatpush1.msra.mxu0 %v2730
        %2837 = vmatprep.subr.mxu0 %v2735
        %2838 = vmatpush1.msra.mxu0 %v2734
        %2839 = vmatprep.subr.mxu0 0.0
        %2840 = vmatpush1.msra.mxu0 0.0
        %2841 = vmatprep.subr.mxu0 0.0
        %2842 = vmatpush1.msra.mxu0 0.0
        %2843 = vmatprep.subr.mxu0 0.0
        %2844 = vmatpush1.msra.mxu0 0.0
        %2845 = vmatprep.subr.mxu0 0.0
        %2846 = vmatpush1.msra.mxu0 0.0
        %2847 = vmatprep.subr.mxu0 0.0
        %2848 = vmatpush1.msra.mxu0 0.0
        %2849 = vmatprep.subr.mxu0 0.0
        %2850 = vmatpush1.msra.mxu0 0.0
        %2851 = vmatprep.subr.mxu0 0.0
        %2852 = vmatpush1.msra.mxu0 0.0
        %2853 = vmatprep.subr.mxu0 0.0
        %2854 = vmatpush1.msra.mxu0 0.0
        %2855 = vmatprep.subr.mxu0 0.0
        %2856 = vmatpush1.msra.mxu0 0.0
        %2857 = vmatprep.subr.mxu0 0.0
        %2858 = vmatpush1.msra.mxu0 0.0
        %2859 = vmatprep.subr.mxu0 0.0
        %2860 = vmatpush1.msra.mxu0 0.0
        %2861 = vmatprep.subr.mxu0 0.0
        %2862 = vmatpush1.msra.mxu0 0.0
        %2863 = vmatprep.subr.mxu0 0.0
        %2864 = vmatpush1.msra.mxu0 0.0
        %2865 = vmatprep.subr.mxu0 0.0
        %2866 = vmatpush1.msra.mxu0 0.0
        %2867 = vmatprep.subr.mxu0 0.0
        %2868 = vmatpush1.msra.mxu0 0.0
        %2869 = vmatprep.subr.mxu0 0.0
        %2870 = vmatpush1.msra.mxu0 0.0
        %2871 = vmatprep.subr.mxu0 0.0
        %2872 = vmatpush1.msra.mxu0 0.0
        %2873 = vmatprep.subr.mxu0 0.0
        %2874 = vmatpush1.msra.mxu0 0.0
        %2875 = vmatprep.subr.mxu0 0.0
        %2876 = vmatpush1.msra.mxu0 0.0
        %2877 = vmatprep.subr.mxu0 0.0
        %2878 = vmatpush1.msra.mxu0 0.0
        %2879 = vmatprep.subr.mxu0 0.0
        %2880 = vmatpush1.msra.mxu0 0.0
        %2881 = vmatprep.subr.mxu0 0.0
        %2882 = vmatpush1.msra.mxu0 0.0
        %2883 = vmatprep.subr.mxu0 0.0
        %2884 = vmatpush1.msra.mxu0 0.0
        %2885 = vmatprep.subr.mxu0 0.0
        %2886 = vmatpush1.msra.mxu0 0.0
        %2887 = vmatprep.subr.mxu0 0.0
        %2888 = vmatpush1.msra.mxu0 0.0
        %2889 = vmatprep.subr.mxu0 0.0
        %2890 = vmatpush1.msra.mxu0 0.0
        %2891 = vmatprep.subr.mxu0 0.0
        %2892 = vmatpush1.msra.mxu0 0.0
        %2893 = vmatprep.subr.mxu0 0.0
        %2894 = vmatpush1.msra.mxu0 0.0
        %2895 = vmatprep.subr.mxu0 0.0
        %2896 = vmatpush1.msra.mxu0 0.0
        %2897 = vmatprep.subr.mxu0 0.0
        %2898 = vmatpush1.msra.mxu0 0.0
        %2899 = vmatprep.mubr.f32.mxu0 0.0
        %2900 = vmatmul.mubr.f32.gmra.mrb[0].mxu0 %v2753
        %v2901 = vpop.f32.mrb[0].mxu0
        %v2902 = vadd.f32 %v2745, %v2901
        %v2903 = vpop.f32.mrb[0].mxu0
        %v2904 = vadd.f32 %v2745, %v2903
        %2905 = vmatprep.mubr.f32.mxu0 0.0
        %2906 = vmatmul.mubr.f32.gmra.mrb[0].mxu0 %v2756
        %v2907 = vpop.f32.mrb[0].mxu0
        %v2908 = vadd.f32 %v2750, %v2907
        %v2909 = vpop.f32.mrb[0].mxu0
        %v2910 = vadd.f32 %v2750, %v2909
        %2911 = vdwg.mxu0
        %v2912 = vadd.f32 %v2825, %v2401
        %v2913 = vadd.f32 %v2827, %v2402
        %v2914 = vadd.f32 %v2902, %v2403
        %v2915 = vadd.f32 %v2904, %v2404
        %v2916 = vadd.f32 %v2831, %v2405
        %v2917 = vadd.f32 %v2833, %v2406
        %v2918 = vadd.f32 %v2908, %v2407
        %v2919 = vadd.f32 %v2910, %v2408
        %v2920 = vadd.f32 %v2409, %v2912
        %v2921 = vadd.f32 %v2410, %v2913
        %v2922 = vadd.f32 %v2411, %v2914
        %v2923 = vadd.f32 %v2412, %v2915
        %v2924 = vadd.f32 %v2413, %v2916
        %v2925 = vadd.f32 %v2414, %v2917
        %v2926 = vadd.f32 %v2415, %v2918
        %v2927 = vadd.f32 %v2416, %v2919
        %s2928 = scalar_lea.vmem [#allocation2], 80
        %v2929 = vld [vmem:[%s2928] sm:$0xff]
        %v2930 = vld [vmem:[%s2928 + $0x8] sm:$0xff]
        %2931 = vst [vmem:[%s2928] sm:$0xff] %v2915
        %2932 = vst [vmem:[%s2928 + $0x8] sm:$0xff] %v2919
        %2943 = vrot.lane.b32.xlu0 %v2929, 1
        %v2944 = vpop.permute.xlu0 %2943
        %2945 = vrot.lane.b32.xlu0 %v2912, 1
        %v2946 = vpop.permute.xlu0 %2945
        %2947 = vrot.lane.b32.xlu0 %v2913, 1
        %v2948 = vpop.permute.xlu0 %2947
        %2949 = vrot.lane.b32.xlu0 %v2914, 1
        %v2950 = vpop.permute.xlu0 %2949
        %2951 = vrot.lane.b32.xlu0 %v2915, 1
        %v2952 = vpop.permute.xlu0 %2951
        %2953 = vrot.lane.b32.xlu0 %v2930, 1
        %v2954 = vpop.permute.xlu0 %2953
        %2955 = vrot.lane.b32.xlu0 %v2916, 1
        %v2956 = vpop.permute.xlu0 %2955
        %2957 = vrot.lane.b32.xlu0 %v2917, 1
        %v2958 = vpop.permute.xlu0 %2957
        %2959 = vrot.lane.b32.xlu0 %v2918, 1
        %v2960 = vpop.permute.xlu0 %2959
        %2961 = vrot.lane.b32.xlu0 %v2919, 1
        %v2962 = vpop.permute.xlu0 %2961
        %v2963 = vsel %vm699, %v2944, %v2946
        %v2964 = vsel %vm699, %v2946, %v2948
        %v2965 = vsel %vm699, %v2948, %v2950
        %v2966 = vsel %vm699, %v2950, %v2952
        %v2967 = vsel %vm699, %v2954, %v2956
        %v2968 = vsel %vm699, %v2956, %v2958
        %v2969 = vsel %vm699, %v2958, %v2960
        %v2970 = vsel %vm699, %v2960, %v2962
        %s2979 = scalar_lea.vmem %s5, 128
        %v2980 = vld [vmem:[%s2979] sm:$0xff]
        %v2981 = vld [vmem:[%s2979 + $0x8] sm:$0xff]
        %v2982 = vld [vmem:[%s2979 + $0x10] sm:$0xff]
        %v2983 = vld [vmem:[%s2979 + $0x18] sm:$0xff]
        %s2984 = scalar_lea.vmem %s6, 128
        %v2985 = vld [vmem:[%s2984] sm:$0xff]
        %v2986 = vld [vmem:[%s2984 + $0x8] sm:$0xff]
        %v2987 = vld [vmem:[%s2984 + $0x10] sm:$0xff]
        %v2988 = vld [vmem:[%s2984 + $0x18] sm:$0xff]
        %2990 = vset.pattern.permute.xlu0 0
        %2991 = vperm.xlu0 %2990, %v2985
        %v2992 = vpop.permute.xlu0 %2991
        %2995 = vset.pattern.permute.xlu0 0
        %2996 = vperm.xlu0 %2995, %v2986
        %v2997 = vpop.permute.xlu0 %2996
        %3000 = vset.pattern.permute.xlu0 0
        %3001 = vperm.xlu0 %3000, %v2987
        %v3002 = vpop.permute.xlu0 %3001
        %3005 = vset.pattern.permute.xlu0 0
        %3006 = vperm.xlu0 %3005, %v2988
        %v3007 = vpop.permute.xlu0 %3006
        %v3010 = vsel %vm964, %v2980, 0
        %v3013 = vsel %vm964, %v2981, 0
        %v3016 = vsel %vm964, %v2982, 0
        %v3019 = vsel %vm964, %v2983, 0
        %3021 = vmatprep.subr.mxu0 %v2913
        %3022 = vmatpush1.msra.mxu0 %v2912
        %3023 = vmatprep.subr.mxu0 %v2917
        %3024 = vmatpush1.msra.mxu0 %v2916
        %3025 = vmatprep.subr.mxu0 %v2964
        %3026 = vmatpush1.msra.mxu0 %v2963
        %3027 = vmatprep.subr.mxu0 %v2968
        %3028 = vmatpush1.msra.mxu0 %v2967
        %3029 = vmatprep.subr.mxu0 0.0
        %3030 = vmatpush1.msra.mxu0 0.0
        %3031 = vmatprep.subr.mxu0 0.0
        %3032 = vmatpush1.msra.mxu0 0.0
        %3033 = vmatprep.subr.mxu0 0.0
        %3034 = vmatpush1.msra.mxu0 0.0
        %3035 = vmatprep.subr.mxu0 0.0
        %3036 = vmatpush1.msra.mxu0 0.0
        %3037 = vmatprep.subr.mxu0 0.0
        %3038 = vmatpush1.msra.mxu0 0.0
        %3039 = vmatprep.subr.mxu0 0.0
        %3040 = vmatpush1.msra.mxu0 0.0
        %3041 = vmatprep.subr.mxu0 0.0
        %3042 = vmatpush1.msra.mxu0 0.0
        %3043 = vmatprep.subr.mxu0 0.0
        %3044 = vmatpush1.msra.mxu0 0.0
        %3045 = vmatprep.subr.mxu0 0.0
        %3046 = vmatpush1.msra.mxu0 0.0
        %3047 = vmatprep.subr.mxu0 0.0
        %3048 = vmatpush1.msra.mxu0 0.0
        %3049 = vmatprep.subr.mxu0 0.0
        %3050 = vmatpush1.msra.mxu0 0.0
        %3051 = vmatprep.subr.mxu0 0.0
        %3052 = vmatpush1.msra.mxu0 0.0
        %3053 = vmatprep.subr.mxu0 0.0
        %3054 = vmatpush1.msra.mxu0 0.0
        %3055 = vmatprep.subr.mxu0 0.0
        %3056 = vmatpush1.msra.mxu0 0.0
        %3057 = vmatprep.subr.mxu0 0.0
        %3058 = vmatpush1.msra.mxu0 0.0
        %3059 = vmatprep.subr.mxu0 0.0
        %3060 = vmatpush1.msra.mxu0 0.0
        %3061 = vmatprep.subr.mxu0 0.0
        %3062 = vmatpush1.msra.mxu0 0.0
        %3063 = vmatprep.subr.mxu0 0.0
        %3064 = vmatpush1.msra.mxu0 0.0
        %3065 = vmatprep.subr.mxu0 0.0
        %3066 = vmatpush1.msra.mxu0 0.0
        %3067 = vmatprep.subr.mxu0 0.0
        %3068 = vmatpush1.msra.mxu0 0.0
        %3069 = vmatprep.subr.mxu0 0.0
        %3070 = vmatpush1.msra.mxu0 0.0
        %3071 = vmatprep.subr.mxu0 0.0
        %3072 = vmatpush1.msra.mxu0 0.0
        %3073 = vmatprep.subr.mxu0 0.0
        %3074 = vmatpush1.msra.mxu0 0.0
        %3075 = vmatprep.subr.mxu0 0.0
        %3076 = vmatpush1.msra.mxu0 0.0
        %3077 = vmatprep.subr.mxu0 0.0
        %3078 = vmatpush1.msra.mxu0 0.0
        %3079 = vmatprep.subr.mxu0 0.0
        %3080 = vmatpush1.msra.mxu0 0.0
        %3081 = vmatprep.subr.mxu0 0.0
        %3082 = vmatpush1.msra.mxu0 0.0
        %3083 = vmatprep.subr.mxu0 0.0
        %3084 = vmatpush1.msra.mxu0 0.0
        %3085 = vmatprep.mubr.f32.mxu0 0.0
        %3086 = vmatmul.mubr.f32.gmra.mrb[0].mxu0 %v3010
        %v3087 = vpop.f32.mrb[0].mxu0
        %v3088 = vadd.f32 %v2992, %v3087
        %v3089 = vpop.f32.mrb[0].mxu0
        %v3090 = vadd.f32 %v2992, %v3089
        %3091 = vmatprep.mubr.f32.mxu0 0.0
        %3092 = vmatmul.mubr.f32.gmra.mrb[0].mxu0 %v3013
        %v3093 = vpop.f32.mrb[0].mxu0
        %v3094 = vadd.f32 %v2997, %v3093
        %v3095 = vpop.f32.mrb[0].mxu0
        %v3096 = vadd.f32 %v2997, %v3095
        %3097 = vmatprep.mubr.f32.mxu0 0.0
        %3098 = vmatmul.mubr.f32.gmra.mrb[0].mxu0 %v3016
        %v3099 = vpop.f32.mrb[0].mxu0
        %v3100 = vadd.f32 %v3002, %v3099
        %v3101 = vpop.f32.mrb[0].mxu0
        %v3102 = vadd.f32 %v3002, %v3101
        %3103 = vmatprep.mubr.f32.mxu0 0.0
        %3104 = vmatmul.mubr.f32.gmra.mrb[0].mxu0 %v3019
        %v3105 = vpop.f32.mrb[0].mxu0
        %v3106 = vadd.f32 %v3007, %v3105
        %v3107 = vpop.f32.mrb[0].mxu0
        %v3108 = vadd.f32 %v3007, %v3107
        %3109 = vdwg.mxu0
        %3110 = vmatprep.subr.mxu0 %v2915
        %3111 = vmatpush1.msra.mxu0 %v2914
        %3112 = vmatprep.subr.mxu0 %v2919
        %3113 = vmatpush1.msra.mxu0 %v2918
        %3114 = vmatprep.subr.mxu0 %v2966
        %3115 = vmatpush1.msra.mxu0 %v2965
        %3116 = vmatprep.subr.mxu0 %v2970
        %3117 = vmatpush1.msra.mxu0 %v2969
        %3118 = vmatprep.subr.mxu0 0.0
        %3119 = vmatpush1.msra.mxu0 0.0
        %3120 = vmatprep.subr.mxu0 0.0
        %3121 = vmatpush1.msra.mxu0 0.0
        %3122 = vmatprep.subr.mxu0 0.0
        %3123 = vmatpush1.msra.mxu0 0.0
        %3124 = vmatprep.subr.mxu0 0.0
        %3125 = vmatpush1.msra.mxu0 0.0
        %3126 = vmatprep.subr.mxu0 0.0
        %3127 = vmatpush1.msra.mxu0 0.0
        %3128 = vmatprep.subr.mxu0 0.0
        %3129 = vmatpush1.msra.mxu0 0.0
        %3130 = vmatprep.subr.mxu0 0.0
        %3131 = vmatpush1.msra.mxu0 0.0
        %3132 = vmatprep.subr.mxu0 0.0
        %3133 = vmatpush1.msra.mxu0 0.0
        %3134 = vmatprep.subr.mxu0 0.0
        %3135 = vmatpush1.msra.mxu0 0.0
        %3136 = vmatprep.subr.mxu0 0.0
        %3137 = vmatpush1.msra.mxu0 0.0
        %3138 = vmatprep.subr.mxu0 0.0
        %3139 = vmatpush1.msra.mxu0 0.0
        %3140 = vmatprep.subr.mxu0 0.0
        %3141 = vmatpush1.msra.mxu0 0.0
        %3142 = vmatprep.subr.mxu0 0.0
        %3143 = vmatpush1.msra.mxu0 0.0
        %3144 = vmatprep.subr.mxu0 0.0
        %3145 = vmatpush1.msra.mxu0 0.0
        %3146 = vmatprep.subr.mxu0 0.0
        %3147 = vmatpush1.msra.mxu0 0.0
        %3148 = vmatprep.subr.mxu0 0.0
        %3149 = vmatpush1.msra.mxu0 0.0
        %3150 = vmatprep.subr.mxu0 0.0
        %3151 = vmatpush1.msra.mxu0 0.0
        %3152 = vmatprep.subr.mxu0 0.0
        %3153 = vmatpush1.msra.mxu0 0.0
        %3154 = vmatprep.subr.mxu0 0.0
        %3155 = vmatpush1.msra.mxu0 0.0
        %3156 = vmatprep.subr.mxu0 0.0
        %3157 = vmatpush1.msra.mxu0 0.0
        %3158 = vmatprep.subr.mxu0 0.0
        %3159 = vmatpush1.msra.mxu0 0.0
        %3160 = vmatprep.subr.mxu0 0.0
        %3161 = vmatpush1.msra.mxu0 0.0
        %3162 = vmatprep.subr.mxu0 0.0
        %3163 = vmatpush1.msra.mxu0 0.0
        %3164 = vmatprep.subr.mxu0 0.0
        %3165 = vmatpush1.msra.mxu0 0.0
        %3166 = vmatprep.subr.mxu0 0.0
        %3167 = vmatpush1.msra.mxu0 0.0
        %3168 = vmatprep.subr.mxu0 0.0
        %3169 = vmatpush1.msra.mxu0 0.0
        %3170 = vmatprep.subr.mxu0 0.0
        %3171 = vmatpush1.msra.mxu0 0.0
        %3172 = vmatprep.subr.mxu0 0.0
        %3173 = vmatpush1.msra.mxu0 0.0
        %3174 = vmatprep.mubr.f32.mxu0 0.0
        %3175 = vmatmul.mubr.f32.gmra.mrb[0].mxu0 %v3010
        %v3176 = vpop.f32.mrb[0].mxu0
        %v3177 = vadd.f32 %v2992, %v3176
        %v3178 = vpop.f32.mrb[0].mxu0
        %v3179 = vadd.f32 %v2992, %v3178
        %3180 = vmatprep.mubr.f32.mxu0 0.0
        %3181 = vmatmul.mubr.f32.gmra.mrb[0].mxu0 %v3013
        %v3182 = vpop.f32.mrb[0].mxu0
        %v3183 = vadd.f32 %v2997, %v3182
        %v3184 = vpop.f32.mrb[0].mxu0
        %v3185 = vadd.f32 %v2997, %v3184
        %3186 = vmatprep.mubr.f32.mxu0 0.0
        %3187 = vmatmul.mubr.f32.gmra.mrb[0].mxu0 %v3016
        %v3188 = vpop.f32.mrb[0].mxu0
        %v3189 = vadd.f32 %v3002, %v3188
        %v3190 = vpop.f32.mrb[0].mxu0
        %v3191 = vadd.f32 %v3002, %v3190
        %3192 = vmatprep.mubr.f32.mxu0 0.0
        %3193 = vmatmul.mubr.f32.gmra.mrb[0].mxu0 %v3019
        %v3194 = vpop.f32.mrb[0].mxu0
        %v3195 = vadd.f32 %v3007, %v3194
        %v3196 = vpop.f32.mrb[0].mxu0
        %v3197 = vadd.f32 %v3007, %v3196
        %3198 = vdwg.mxu0
        %v3199 = vtanh.pop %v3088
        %v3200 = vtanh.pop %v3090
        %v3201 = vtanh.pop %v3177
        %v3202 = vtanh.pop %v3179
        %v3203 = vtanh.pop %v3094
        %v3204 = vtanh.pop %v3096
        %v3205 = vtanh.pop %v3183
        %v3206 = vtanh.pop %v3185
        %v3207 = vmul.f32 %v3100, 0.5
        %v3208 = vmul.f32 %v3102, 0.5
        %v3209 = vmul.f32 %v3189, 0.5
        %v3210 = vmul.f32 %v3191, 0.5
        %v3211 = vmul.f32 %v3106, 0.5
        %v3212 = vmul.f32 %v3108, 0.5
        %v3213 = vmul.f32 %v3195, 0.5
        %v3214 = vmul.f32 %v3197, 0.5
        %v3215 = vtanh.pop %v3207
        %v3216 = vtanh.pop %v3208
        %v3217 = vtanh.pop %v3209
        %v3218 = vtanh.pop %v3210
        %v3219 = vtanh.pop %v3211
        %v3220 = vtanh.pop %v3212
        %v3221 = vtanh.pop %v3213
        %v3222 = vtanh.pop %v3214
        %v3223 = vadd.f32 %v3215, 1.0
        %v3224 = vadd.f32 %v3216, 1.0
        %v3225 = vadd.f32 %v3217, 1.0
        %v3226 = vadd.f32 %v3218, 1.0
        %v3227 = vadd.f32 %v3219, 1.0
        %v3228 = vadd.f32 %v3220, 1.0
        %v3229 = vadd.f32 %v3221, 1.0
        %v3230 = vadd.f32 %v3222, 1.0
        %v3231 = vmul.f32 %v3223, 0.5
        %v3232 = vmul.f32 %v3224, 0.5
        %v3233 = vmul.f32 %v3225, 0.5
        %v3234 = vmul.f32 %v3226, 0.5
        %v3235 = vmul.f32 %v3227, 0.5
        %v3236 = vmul.f32 %v3228, 0.5
        %v3237 = vmul.f32 %v3229, 0.5
        %v3238 = vmul.f32 %v3230, 0.5
        %v3239 = vmul.f32 %v3199, %v3231
        %v3240 = vmul.f32 %v3200, %v3232
        %v3241 = vmul.f32 %v3201, %v3233
        %v3242 = vmul.f32 %v3202, %v3234
        %v3243 = vmul.f32 %v3203, %v3235
        %v3244 = vmul.f32 %v3204, %v3236
        %v3245 = vmul.f32 %v3205, %v3237
        %v3246 = vmul.f32 %v3206, %v3238
        %s3247 = scalar_lea.vmem %s7, 64
        %v3248 = vld [vmem:[%s3247] sm:$0xff]
        %v3249 = vld [vmem:[%s3247 + $0x8] sm:$0xff]
        %s3250 = scalar_lea.vmem %s8, 64
        %v3251 = vld [vmem:[%s3250] sm:$0xff]
        %v3252 = vld [vmem:[%s3250 + $0x8] sm:$0xff]
        %3254 = vset.pattern.permute.xlu0 0
        %3255 = vperm.xlu0 %3254, %v3251
        %v3256 = vpop.permute.xlu0 %3255
        %3259 = vset.pattern.permute.xlu0 0
        %3260 = vperm.xlu0 %3259, %v3252
        %v3261 = vpop.permute.xlu0 %3260
        %v3264 = vsel %vm716, %v3248, 0
        %v3267 = vsel %vm716, %v3249, 0
        %3269 = vmatprep.subr.mxu0 %v3240
        %3270 = vmatpush1.msra.mxu0 %v3239
        %3271 = vmatprep.subr.mxu0 %v3244
        %3272 = vmatpush1.msra.mxu0 %v3243
        %3273 = vmatprep.subr.mxu0 0.0
        %3274 = vmatpush1.msra.mxu0 0.0
        %3275 = vmatprep.subr.mxu0 0.0
        %3276 = vmatpush1.msra.mxu0 0.0
        %3277 = vmatprep.subr.mxu0 0.0
        %3278 = vmatpush1.msra.mxu0 0.0
        %3279 = vmatprep.subr.mxu0 0.0
        %3280 = vmatpush1.msra.mxu0 0.0
        %3281 = vmatprep.subr.mxu0 0.0
        %3282 = vmatpush1.msra.mxu0 0.0
        %3283 = vmatprep.subr.mxu0 0.0
        %3284 = vmatpush1.msra.mxu0 0.0
        %3285 = vmatprep.subr.mxu0 0.0
        %3286 = vmatpush1.msra.mxu0 0.0
        %3287 = vmatprep.subr.mxu0 0.0
        %3288 = vmatpush1.msra.mxu0 0.0
        %3289 = vmatprep.subr.mxu0 0.0
        %3290 = vmatpush1.msra.mxu0 0.0
        %3291 = vmatprep.subr.mxu0 0.0
        %3292 = vmatpush1.msra.mxu0 0.0
        %3293 = vmatprep.subr.mxu0 0.0
        %3294 = vmatpush1.msra.mxu0 0.0
        %3295 = vmatprep.subr.mxu0 0.0
        %3296 = vmatpush1.msra.mxu0 0.0
        %3297 = vmatprep.subr.mxu0 0.0
        %3298 = vmatpush1.msra.mxu0 0.0
        %3299 = vmatprep.subr.mxu0 0.0
        %3300 = vmatpush1.msra.mxu0 0.0
        %3301 = vmatprep.subr.mxu0 0.0
        %3302 = vmatpush1.msra.mxu0 0.0
        %3303 = vmatprep.subr.mxu0 0.0
        %3304 = vmatpush1.msra.mxu0 0.0
        %3305 = vmatprep.subr.mxu0 0.0
        %3306 = vmatpush1.msra.mxu0 0.0
        %3307 = vmatprep.subr.mxu0 0.0
        %3308 = vmatpush1.msra.mxu0 0.0
        %3309 = vmatprep.subr.mxu0 0.0
        %3310 = vmatpush1.msra.mxu0 0.0
        %3311 = vmatprep.subr.mxu0 0.0
        %3312 = vmatpush1.msra.mxu0 0.0
        %3313 = vmatprep.subr.mxu0 0.0
        %3314 = vmatpush1.msra.mxu0 0.0
        %3315 = vmatprep.subr.mxu0 0.0
        %3316 = vmatpush1.msra.mxu0 0.0
        %3317 = vmatprep.subr.mxu0 0.0
        %3318 = vmatpush1.msra.mxu0 0.0
        %3319 = vmatprep.subr.mxu0 0.0
        %3320 = vmatpush1.msra.mxu0 0.0
        %3321 = vmatprep.subr.mxu0 0.0
        %3322 = vmatpush1.msra.mxu0 0.0
        %3323 = vmatprep.subr.mxu0 0.0
        %3324 = vmatpush1.msra.mxu0 0.0
        %3325 = vmatprep.subr.mxu0 0.0
        %3326 = vmatpush1.msra.mxu0 0.0
        %3327 = vmatprep.subr.mxu0 0.0
        %3328 = vmatpush1.msra.mxu0 0.0
        %3329 = vmatprep.subr.mxu0 0.0
        %3330 = vmatpush1.msra.mxu0 0.0
        %3331 = vmatprep.subr.mxu0 0.0
        %3332 = vmatpush1.msra.mxu0 0.0
        %3333 = vmatprep.mubr.f32.mxu0 0.0
        %3334 = vmatmul.mubr.f32.gmra.mrb[0].mxu0 %v3264
        %v3335 = vpop.f32.mrb[0].mxu0
        %v3336 = vadd.f32 %v3256, %v3335
        %v3337 = vpop.f32.mrb[0].mxu0
        %v3338 = vadd.f32 %v3256, %v3337
        %3339 = vmatprep.mubr.f32.mxu0 0.0
        %3340 = vmatmul.mubr.f32.gmra.mrb[0].mxu0 %v3267
        %v3341 = vpop.f32.mrb[0].mxu0
        %v3342 = vadd.f32 %v3261, %v3341
        %v3343 = vpop.f32.mrb[0].mxu0
        %v3344 = vadd.f32 %v3261, %v3343
        %3345 = vdwg.mxu0
        %3346 = vmatprep.subr.mxu0 %v3242
        %3347 = vmatpush1.msra.mxu0 %v3241
        %3348 = vmatprep.subr.mxu0 %v3246
        %3349 = vmatpush1.msra.mxu0 %v3245
        %3350 = vmatprep.subr.mxu0 0.0
        %3351 = vmatpush1.msra.mxu0 0.0
        %3352 = vmatprep.subr.mxu0 0.0
        %3353 = vmatpush1.msra.mxu0 0.0
        %3354 = vmatprep.subr.mxu0 0.0
        %3355 = vmatpush1.msra.mxu0 0.0
        %3356 = vmatprep.subr.mxu0 0.0
        %3357 = vmatpush1.msra.mxu0 0.0
        %3358 = vmatprep.subr.mxu0 0.0
        %3359 = vmatpush1.msra.mxu0 0.0
        %3360 = vmatprep.subr.mxu0 0.0
        %3361 = vmatpush1.msra.mxu0 0.0
        %3362 = vmatprep.subr.mxu0 0.0
        %3363 = vmatpush1.msra.mxu0 0.0
        %3364 = vmatprep.subr.mxu0 0.0
        %3365 = vmatpush1.msra.mxu0 0.0
        %3366 = vmatprep.subr.mxu0 0.0
        %3367 = vmatpush1.msra.mxu0 0.0
        %3368 = vmatprep.subr.mxu0 0.0
        %3369 = vmatpush1.msra.mxu0 0.0
        %3370 = vmatprep.subr.mxu0 0.0
        %3371 = vmatpush1.msra.mxu0 0.0
        %3372 = vmatprep.subr.mxu0 0.0
        %3373 = vmatpush1.msra.mxu0 0.0
        %3374 = vmatprep.subr.mxu0 0.0
        %3375 = vmatpush1.msra.mxu0 0.0
        %3376 = vmatprep.subr.mxu0 0.0
        %3377 = vmatpush1.msra.mxu0 0.0
        %3378 = vmatprep.subr.mxu0 0.0
        %3379 = vmatpush1.msra.mxu0 0.0
        %3380 = vmatprep.subr.mxu0 0.0
        %3381 = vmatpush1.msra.mxu0 0.0
        %3382 = vmatprep.subr.mxu0 0.0
        %3383 = vmatpush1.msra.mxu0 0.0
        %3384 = vmatprep.subr.mxu0 0.0
        %3385 = vmatpush1.msra.mxu0 0.0
        %3386 = vmatprep.subr.mxu0 0.0
        %3387 = vmatpush1.msra.mxu0 0.0
        %3388 = vmatprep.subr.mxu0 0.0
        %3389 = vmatpush1.msra.mxu0 0.0
        %3390 = vmatprep.subr.mxu0 0.0
        %3391 = vmatpush1.msra.mxu0 0.0
        %3392 = vmatprep.subr.mxu0 0.0
        %3393 = vmatpush1.msra.mxu0 0.0
        %3394 = vmatprep.subr.mxu0 0.0
        %3395 = vmatpush1.msra.mxu0 0.0
        %3396 = vmatprep.subr.mxu0 0.0
        %3397 = vmatpush1.msra.mxu0 0.0
        %3398 = vmatprep.subr.mxu0 0.0
        %3399 = vmatpush1.msra.mxu0 0.0
        %3400 = vmatprep.subr.mxu0 0.0
        %3401 = vmatpush1.msra.mxu0 0.0
        %3402 = vmatprep.subr.mxu0 0.0
        %3403 = vmatpush1.msra.mxu0 0.0
        %3404 = vmatprep.subr.mxu0 0.0
        %3405 = vmatpush1.msra.mxu0 0.0
        %3406 = vmatprep.subr.mxu0 0.0
        %3407 = vmatpush1.msra.mxu0 0.0
        %3408 = vmatprep.subr.mxu0 0.0
        %3409 = vmatpush1.msra.mxu0 0.0
        %3410 = vmatprep.mubr.f32.mxu0 0.0
        %3411 = vmatmul.mubr.f32.gmra.mrb[0].mxu0 %v3264
        %v3412 = vpop.f32.mrb[0].mxu0
        %v3413 = vadd.f32 %v3256, %v3412
        %v3414 = vpop.f32.mrb[0].mxu0
        %v3415 = vadd.f32 %v3256, %v3414
        %3416 = vmatprep.mubr.f32.mxu0 0.0
        %3417 = vmatmul.mubr.f32.gmra.mrb[0].mxu0 %v3267
        %v3418 = vpop.f32.mrb[0].mxu0
        %v3419 = vadd.f32 %v3261, %v3418
        %v3420 = vpop.f32.mrb[0].mxu0
        %v3421 = vadd.f32 %v3261, %v3420
        %3422 = vdwg.mxu0
        %v3423 = vadd.f32 %v3336, %v2912
        %v3424 = vadd.f32 %v3338, %v2913
        %v3425 = vadd.f32 %v3413, %v2914
        %v3426 = vadd.f32 %v3415, %v2915
        %v3427 = vadd.f32 %v3342, %v2916
        %v3428 = vadd.f32 %v3344, %v2917
        %v3429 = vadd.f32 %v3419, %v2918
        %v3430 = vadd.f32 %v3421, %v2919
        %v3431 = vadd.f32 %v2920, %v3423
        %v3432 = vadd.f32 %v2921, %v3424
        %v3433 = vadd.f32 %v2922, %v3425
        %v3434 = vadd.f32 %v2923, %v3426
        %v3435 = vadd.f32 %v2924, %v3427
        %v3436 = vadd.f32 %v2925, %v3428
        %v3437 = vadd.f32 %v2926, %v3429
        %v3438 = vadd.f32 %v2927, %v3430
        %s3439 = scalar_lea.vmem [#allocation2], 96
        %v3440 = vld [vmem:[%s3439] sm:$0xff]
        %v3441 = vld [vmem:[%s3439 + $0x8] sm:$0xff]
        %3442 = vst [vmem:[%s3439] sm:$0xff] %v3426
        %3443 = vst [vmem:[%s3439 + $0x8] sm:$0xff] %v3430
        %3454 = vrot.lane.b32.xlu0 %v3440, 2
        %v3455 = vpop.permute.xlu0 %3454
        %3456 = vrot.lane.b32.xlu0 %v3423, 2
        %v3457 = vpop.permute.xlu0 %3456
        %3458 = vrot.lane.b32.xlu0 %v3424, 2
        %v3459 = vpop.permute.xlu0 %3458
        %3460 = vrot.lane.b32.xlu0 %v3425, 2
        %v3461 = vpop.permute.xlu0 %3460
        %3462 = vrot.lane.b32.xlu0 %v3426, 2
        %v3463 = vpop.permute.xlu0 %3462
        %3464 = vrot.lane.b32.xlu0 %v3441, 2
        %v3465 = vpop.permute.xlu0 %3464
        %3466 = vrot.lane.b32.xlu0 %v3427, 2
        %v3467 = vpop.permute.xlu0 %3466
        %3468 = vrot.lane.b32.xlu0 %v3428, 2
        %v3469 = vpop.permute.xlu0 %3468
        %3470 = vrot.lane.b32.xlu0 %v3429, 2
        %v3471 = vpop.permute.xlu0 %3470
        %3472 = vrot.lane.b32.xlu0 %v3430, 2
        %v3473 = vpop.permute.xlu0 %3472
        %v3474 = vsel %vm1428, %v3455, %v3457
        %v3475 = vsel %vm1428, %v3457, %v3459
        %v3476 = vsel %vm1428, %v3459, %v3461
        %v3477 = vsel %vm1428, %v3461, %v3463
        %v3478 = vsel %vm1428, %v3465, %v3467
        %v3479 = vsel %vm1428, %v3467, %v3469
        %v3480 = vsel %vm1428, %v3469, %v3471
        %v3481 = vsel %vm1428, %v3471, %v3473
        %s3490 = scalar_lea.vmem %s5, 160
        %v3491 = vld [vmem:[%s3490] sm:$0xff]
        %v3492 = vld [vmem:[%s3490 + $0x8] sm:$0xff]
        %v3493 = vld [vmem:[%s3490 + $0x10] sm:$0xff]
        %v3494 = vld [vmem:[%s3490 + $0x18] sm:$0xff]
        %s3495 = scalar_lea.vmem %s6, 160
        %v3496 = vld [vmem:[%s3495] sm:$0xff]
        %v3497 = vld [vmem:[%s3495 + $0x8] sm:$0xff]
        %v3498 = vld [vmem:[%s3495 + $0x10] sm:$0xff]
        %v3499 = vld [vmem:[%s3495 + $0x18] sm:$0xff]
        %3501 = vset.pattern.permute.xlu0 0
        %3502 = vperm.xlu0 %3501, %v3496
        %v3503 = vpop.permute.xlu0 %3502
        %3506 = vset.pattern.permute.xlu0 0
        %3507 = vperm.xlu0 %3506, %v3497
        %v3508 = vpop.permute.xlu0 %3507
        %3511 = vset.pattern.permute.xlu0 0
        %3512 = vperm.xlu0 %3511, %v3498
        %v3513 = vpop.permute.xlu0 %3512
        %3516 = vset.pattern.permute.xlu0 0
        %3517 = vperm.xlu0 %3516, %v3499
        %v3518 = vpop.permute.xlu0 %3517
        %v3521 = vsel %vm964, %v3491, 0
        %v3524 = vsel %vm964, %v3492, 0
        %v3527 = vsel %vm964, %v3493, 0
        %v3530 = vsel %vm964, %v3494, 0
        %3532 = vmatprep.subr.mxu0 %v3424
        %3533 = vmatpush1.msra.mxu0 %v3423
        %3534 = vmatprep.subr.mxu0 %v3428
        %3535 = vmatpush1.msra.mxu0 %v3427
        %3536 = vmatprep.subr.mxu0 %v3475
        %3537 = vmatpush1.msra.mxu0 %v3474
        %3538 = vmatprep.subr.mxu0 %v3479
        %3539 = vmatpush1.msra.mxu0 %v3478
        %3540 = vmatprep.subr.mxu0 0.0
        %3541 = vmatpush1.msra.mxu0 0.0
        %3542 = vmatprep.subr.mxu0 0.0
        %3543 = vmatpush1.msra.mxu0 0.0
        %3544 = vmatprep.subr.mxu0 0.0
        %3545 = vmatpush1.msra.mxu0 0.0
        %3546 = vmatprep.subr.mxu0 0.0
        %3547 = vmatpush1.msra.mxu0 0.0
        %3548 = vmatprep.subr.mxu0 0.0
        %3549 = vmatpush1.msra.mxu0 0.0
        %3550 = vmatprep.subr.mxu0 0.0
        %3551 = vmatpush1.msra.mxu0 0.0
        %3552 = vmatprep.subr.mxu0 0.0
        %3553 = vmatpush1.msra.mxu0 0.0
        %3554 = vmatprep.subr.mxu0 0.0
        %3555 = vmatpush1.msra.mxu0 0.0
        %3556 = vmatprep.subr.mxu0 0.0
        %3557 = vmatpush1.msra.mxu0 0.0
        %3558 = vmatprep.subr.mxu0 0.0
        %3559 = vmatpush1.msra.mxu0 0.0
        %3560 = vmatprep.subr.mxu0 0.0
        %3561 = vmatpush1.msra.mxu0 0.0
        %3562 = vmatprep.subr.mxu0 0.0
        %3563 = vmatpush1.msra.mxu0 0.0
        %3564 = vmatprep.subr.mxu0 0.0
        %3565 = vmatpush1.msra.mxu0 0.0
        %3566 = vmatprep.subr.mxu0 0.0
        %3567 = vmatpush1.msra.mxu0 0.0
        %3568 = vmatprep.subr.mxu0 0.0
        %3569 = vmatpush1.msra.mxu0 0.0
        %3570 = vmatprep.subr.mxu0 0.0
        %3571 = vmatpush1.msra.mxu0 0.0
        %3572 = vmatprep.subr.mxu0 0.0
        %3573 = vmatpush1.msra.mxu0 0.0
        %3574 = vmatprep.subr.mxu0 0.0
        %3575 = vmatpush1.msra.mxu0 0.0
        %3576 = vmatprep.subr.mxu0 0.0
        %3577 = vmatpush1.msra.mxu0 0.0
        %3578 = vmatprep.subr.mxu0 0.0
        %3579 = vmatpush1.msra.mxu0 0.0
        %3580 = vmatprep.subr.mxu0 0.0
        %3581 = vmatpush1.msra.mxu0 0.0
        %3582 = vmatprep.subr.mxu0 0.0
        %3583 = vmatpush1.msra.mxu0 0.0
        %3584 = vmatprep.subr.mxu0 0.0
        %3585 = vmatpush1.msra.mxu0 0.0
        %3586 = vmatprep.subr.mxu0 0.0
        %3587 = vmatpush1.msra.mxu0 0.0
        %3588 = vmatprep.subr.mxu0 0.0
        %3589 = vmatpush1.msra.mxu0 0.0
        %3590 = vmatprep.subr.mxu0 0.0
        %3591 = vmatpush1.msra.mxu0 0.0
        %3592 = vmatprep.subr.mxu0 0.0
        %3593 = vmatpush1.msra.mxu0 0.0
        %3594 = vmatprep.subr.mxu0 0.0
        %3595 = vmatpush1.msra.mxu0 0.0
        %3596 = vmatprep.mubr.f32.mxu0 0.0
        %3597 = vmatmul.mubr.f32.gmra.mrb[0].mxu0 %v3521
        %v3598 = vpop.f32.mrb[0].mxu0
        %v3599 = vadd.f32 %v3503, %v3598
        %v3600 = vpop.f32.mrb[0].mxu0
        %v3601 = vadd.f32 %v3503, %v3600
        %3602 = vmatprep.mubr.f32.mxu0 0.0
        %3603 = vmatmul.mubr.f32.gmra.mrb[0].mxu0 %v3524
        %v3604 = vpop.f32.mrb[0].mxu0
        %v3605 = vadd.f32 %v3508, %v3604
        %v3606 = vpop.f32.mrb[0].mxu0
        %v3607 = vadd.f32 %v3508, %v3606
        %3608 = vmatprep.mubr.f32.mxu0 0.0
        %3609 = vmatmul.mubr.f32.gmra.mrb[0].mxu0 %v3527
        %v3610 = vpop.f32.mrb[0].mxu0
        %v3611 = vadd.f32 %v3513, %v3610
        %v3612 = vpop.f32.mrb[0].mxu0
        %v3613 = vadd.f32 %v3513, %v3612
        %3614 = vmatprep.mubr.f32.mxu0 0.0
        %3615 = vmatmul.mubr.f32.gmra.mrb[0].mxu0 %v3530
        %v3616 = vpop.f32.mrb[0].mxu0
        %v3617 = vadd.f32 %v3518, %v3616
        %v3618 = vpop.f32.mrb[0].mxu0
        %v3619 = vadd.f32 %v3518, %v3618
        %3620 = vdwg.mxu0
        %3621 = vmatprep.subr.mxu0 %v3426
        %3622 = vmatpush1.msra.mxu0 %v3425
        %3623 = vmatprep.subr.mxu0 %v3430
        %3624 = vmatpush1.msra.mxu0 %v3429
        %3625 = vmatprep.subr.mxu0 %v3477
        %3626 = vmatpush1.msra.mxu0 %v3476
        %3627 = vmatprep.subr.mxu0 %v3481
        %3628 = vmatpush1.msra.mxu0 %v3480
        %3629 = vmatprep.subr.mxu0 0.0
        %3630 = vmatpush1.msra.mxu0 0.0
        %3631 = vmatprep.subr.mxu0 0.0
        %3632 = vmatpush1.msra.mxu0 0.0
        %3633 = vmatprep.subr.mxu0 0.0
        %3634 = vmatpush1.msra.mxu0 0.0
        %3635 = vmatprep.subr.mxu0 0.0
        %3636 = vmatpush1.msra.mxu0 0.0
        %3637 = vmatprep.subr.mxu0 0.0
        %3638 = vmatpush1.msra.mxu0 0.0
        %3639 = vmatprep.subr.mxu0 0.0
        %3640 = vmatpush1.msra.mxu0 0.0
        %3641 = vmatprep.subr.mxu0 0.0
        %3642 = vmatpush1.msra.mxu0 0.0
        %3643 = vmatprep.subr.mxu0 0.0
        %3644 = vmatpush1.msra.mxu0 0.0
        %3645 = vmatprep.subr.mxu0 0.0
        %3646 = vmatpush1.msra.mxu0 0.0
        %3647 = vmatprep.subr.mxu0 0.0
        %3648 = vmatpush1.msra.mxu0 0.0
        %3649 = vmatprep.subr.mxu0 0.0
        %3650 = vmatpush1.msra.mxu0 0.0
        %3651 = vmatprep.subr.mxu0 0.0
        %3652 = vmatpush1.msra.mxu0 0.0
        %3653 = vmatprep.subr.mxu0 0.0
        %3654 = vmatpush1.msra.mxu0 0.0
        %3655 = vmatprep.subr.mxu0 0.0
        %3656 = vmatpush1.msra.mxu0 0.0
        %3657 = vmatprep.subr.mxu0 0.0
        %3658 = vmatpush1.msra.mxu0 0.0
        %3659 = vmatprep.subr.mxu0 0.0
        %3660 = vmatpush1.msra.mxu0 0.0
        %3661 = vmatprep.subr.mxu0 0.0
        %3662 = vmatpush1.msra.mxu0 0.0
        %3663 = vmatprep.subr.mxu0 0.0
        %3664 = vmatpush1.msra.mxu0 0.0
        %3665 = vmatprep.subr.mxu0 0.0
        %3666 = vmatpush1.msra.mxu0 0.0
        %3667 = vmatprep.subr.mxu0 0.0
        %3668 = vmatpush1.msra.mxu0 0.0
        %3669 = vmatprep.subr.mxu0 0.0
        %3670 = vmatpush1.msra.mxu0 0.0
        %3671 = vmatprep.subr.mxu0 0.0
        %3672 = vmatpush1.msra.mxu0 0.0
        %3673 = vmatprep.subr.mxu0 0.0
        %3674 = vmatpush1.msra.mxu0 0.0
        %3675 = vmatprep.subr.mxu0 0.0
        %3676 = vmatpush1.msra.mxu0 0.0
        %3677 = vmatprep.subr.mxu0 0.0
        %3678 = vmatpush1.msra.mxu0 0.0
        %3679 = vmatprep.subr.mxu0 0.0
        %3680 = vmatpush1.msra.mxu0 0.0
        %3681 = vmatprep.subr.mxu0 0.0
        %3682 = vmatpush1.msra.mxu0 0.0
        %3683 = vmatprep.subr.mxu0 0.0
        %3684 = vmatpush1.msra.mxu0 0.0
        %3685 = vmatprep.mubr.f32.mxu0 0.0
        %3686 = vmatmul.mubr.f32.gmra.mrb[0].mxu0 %v3521
        %v3687 = vpop.f32.mrb[0].mxu0
        %v3688 = vadd.f32 %v3503, %v3687
        %v3689 = vpop.f32.mrb[0].mxu0
        %v3690 = vadd.f32 %v3503, %v3689
        %3691 = vmatprep.mubr.f32.mxu0 0.0
        %3692 = vmatmul.mubr.f32.gmra.mrb[0].mxu0 %v3524
        %v3693 = vpop.f32.mrb[0].mxu0
        %v3694 = vadd.f32 %v3508, %v3693
        %v3695 = vpop.f32.mrb[0].mxu0
        %v3696 = vadd.f32 %v3508, %v3695
        %3697 = vmatprep.mubr.f32.mxu0 0.0
        %3698 = vmatmul.mubr.f32.gmra.mrb[0].mxu0 %v3527
        %v3699 = vpop.f32.mrb[0].mxu0
        %v3700 = vadd.f32 %v3513, %v3699
        %v3701 = vpop.f32.mrb[0].mxu0
        %v3702 = vadd.f32 %v3513, %v3701
        %3703 = vmatprep.mubr.f32.mxu0 0.0
        %3704 = vmatmul.mubr.f32.gmra.mrb[0].mxu0 %v3530
        %v3705 = vpop.f32.mrb[0].mxu0
        %v3706 = vadd.f32 %v3518, %v3705
        %v3707 = vpop.f32.mrb[0].mxu0
        %v3708 = vadd.f32 %v3518, %v3707
        %3709 = vdwg.mxu0
        %v3710 = vtanh.pop %v3599
        %v3711 = vtanh.pop %v3601
        %v3712 = vtanh.pop %v3688
        %v3713 = vtanh.pop %v3690
        %v3714 = vtanh.pop %v3605
        %v3715 = vtanh.pop %v3607
        %v3716 = vtanh.pop %v3694
        %v3717 = vtanh.pop %v3696
        %v3718 = vmul.f32 %v3611, 0.5
        %v3719 = vmul.f32 %v3613, 0.5
        %v3720 = vmul.f32 %v3700, 0.5
        %v3721 = vmul.f32 %v3702, 0.5
        %v3722 = vmul.f32 %v3617, 0.5
        %v3723 = vmul.f32 %v3619, 0.5
        %v3724 = vmul.f32 %v3706, 0.5
        %v3725 = vmul.f32 %v3708, 0.5
        %v3726 = vtanh.pop %v3718
        %v3727 = vtanh.pop %v3719
        %v3728 = vtanh.pop %v3720
        %v3729 = vtanh.pop %v3721
        %v3730 = vtanh.pop %v3722
        %v3731 = vtanh.pop %v3723
        %v3732 = vtanh.pop %v3724
        %v3733 = vtanh.pop %v3725
        %v3734 = vadd.f32 %v3726, 1.0
        %v3735 = vadd.f32 %v3727, 1.0
        %v3736 = vadd.f32 %v3728, 1.0
        %v3737 = vadd.f32 %v3729, 1.0
        %v3738 = vadd.f32 %v3730, 1.0
        %v3739 = vadd.f32 %v3731, 1.0
        %v3740 = vadd.f32 %v3732, 1.0
        %v3741 = vadd.f32 %v3733, 1.0
        %v3742 = vmul.f32 %v3734, 0.5
        %v3743 = vmul.f32 %v3735, 0.5
        %v3744 = vmul.f32 %v3736, 0.5
        %v3745 = vmul.f32 %v3737, 0.5
        %v3746 = vmul.f32 %v3738, 0.5
        %v3747 = vmul.f32 %v3739, 0.5
        %v3748 = vmul.f32 %v3740, 0.5
        %v3749 = vmul.f32 %v3741, 0.5
        %v3750 = vmul.f32 %v3710, %v3742
        %v3751 = vmul.f32 %v3711, %v3743
        %v3752 = vmul.f32 %v3712, %v3744
        %v3753 = vmul.f32 %v3713, %v3745
        %v3754 = vmul.f32 %v3714, %v3746
        %v3755 = vmul.f32 %v3715, %v3747
        %v3756 = vmul.f32 %v3716, %v3748
        %v3757 = vmul.f32 %v3717, %v3749
        %s3758 = scalar_lea.vmem %s7, 80
        %v3759 = vld [vmem:[%s3758] sm:$0xff]
        %v3760 = vld [vmem:[%s3758 + $0x8] sm:$0xff]
        %s3761 = scalar_lea.vmem %s8, 80
        %v3762 = vld [vmem:[%s3761] sm:$0xff]
        %v3763 = vld [vmem:[%s3761 + $0x8] sm:$0xff]
        %3765 = vset.pattern.permute.xlu0 0
        %3766 = vperm.xlu0 %3765, %v3762
        %v3767 = vpop.permute.xlu0 %3766
        %3770 = vset.pattern.permute.xlu0 0
        %3771 = vperm.xlu0 %3770, %v3763
        %v3772 = vpop.permute.xlu0 %3771
        %v3775 = vsel %vm716, %v3759, 0
        %v3778 = vsel %vm716, %v3760, 0
        %3780 = vmatprep.subr.mxu0 %v3751
        %3781 = vmatpush1.msra.mxu0 %v3750
        %3782 = vmatprep.subr.mxu0 %v3755
        %3783 = vmatpush1.msra.mxu0 %v3754
        %3784 = vmatprep.subr.mxu0 0.0
        %3785 = vmatpush1.msra.mxu0 0.0
        %3786 = vmatprep.subr.mxu0 0.0
        %3787 = vmatpush1.msra.mxu0 0.0
        %3788 = vmatprep.subr.mxu0 0.0
        %3789 = vmatpush1.msra.mxu0 0.0
        %3790 = vmatprep.subr.mxu0 0.0
        %3791 = vmatpush1.msra.mxu0 0.0
        %3792 = vmatprep.subr.mxu0 0.0
        %3793 = vmatpush1.msra.mxu0 0.0
        %3794 = vmatprep.subr.mxu0 0.0
        %3795 = vmatpush1.msra.mxu0 0.0
        %3796 = vmatprep.subr.mxu0 0.0
        %3797 = vmatpush1.msra.mxu0 0.0
        %3798 = vmatprep.subr.mxu0 0.0
        %3799 = vmatpush1.msra.mxu0 0.0
        %3800 = vmatprep.subr.mxu0 0.0
        %3801 = vmatpush1.msra.mxu0 0.0
        %3802 = vmatprep.subr.mxu0 0.0
        %3803 = vmatpush1.msra.mxu0 0.0
        %3804 = vmatprep.subr.mxu0 0.0
        %3805 = vmatpush1.msra.mxu0 0.0
        %3806 = vmatprep.subr.mxu0 0.0
        %3807 = vmatpush1.msra.mxu0 0.0
        %3808 = vmatprep.subr.mxu0 0.0
        %3809 = vmatpush1.msra.mxu0 0.0
        %3810 = vmatprep.subr.mxu0 0.0
        %3811 = vmatpush1.msra.mxu0 0.0
        %3812 = vmatprep.subr.mxu0 0.0
        %3813 = vmatpush1.msra.mxu0 0.0
        %3814 = vmatprep.subr.mxu0 0.0
        %3815 = vmatpush1.msra.mxu0 0.0
        %3816 = vmatprep.subr.mxu0 0.0
        %3817 = vmatpush1.msra.mxu0 0.0
        %3818 = vmatprep.subr.mxu0 0.0
        %3819 = vmatpush1.msra.mxu0 0.0
        %3820 = vmatprep.subr.mxu0 0.0
        %3821 = vmatpush1.msra.mxu0 0.0
        %3822 = vmatprep.subr.mxu0 0.0
        %3823 = vmatpush1.msra.mxu0 0.0
        %3824 = vmatprep.subr.mxu0 0.0
        %3825 = vmatpush1.msra.mxu0 0.0
        %3826 = vmatprep.subr.mxu0 0.0
        %3827 = vmatpush1.msra.mxu0 0.0
        %3828 = vmatprep.subr.mxu0 0.0
        %3829 = vmatpush1.msra.mxu0 0.0
        %3830 = vmatprep.subr.mxu0 0.0
        %3831 = vmatpush1.msra.mxu0 0.0
        %3832 = vmatprep.subr.mxu0 0.0
        %3833 = vmatpush1.msra.mxu0 0.0
        %3834 = vmatprep.subr.mxu0 0.0
        %3835 = vmatpush1.msra.mxu0 0.0
        %3836 = vmatprep.subr.mxu0 0.0
        %3837 = vmatpush1.msra.mxu0 0.0
        %3838 = vmatprep.subr.mxu0 0.0
        %3839 = vmatpush1.msra.mxu0 0.0
        %3840 = vmatprep.subr.mxu0 0.0
        %3841 = vmatpush1.msra.mxu0 0.0
        %3842 = vmatprep.subr.mxu0 0.0
        %3843 = vmatpush1.msra.mxu0 0.0
        %3844 = vmatprep.mubr.f32.mxu0 0.0
        %3845 = vmatmul.mubr.f32.gmra.mrb[0].mxu0 %v3775
        %v3846 = vpop.f32.mrb[0].mxu0
        %v3847 = vadd.f32 %v3767, %v3846
        %v3848 = vpop.f32.mrb[0].mxu0
        %v3849 = vadd.f32 %v3767, %v3848
        %3850 = vmatprep.mubr.f32.mxu0 0.0
        %3851 = vmatmul.mubr.f32.gmra.mrb[0].mxu0 %v3778
        %v3852 = vpop.f32.mrb[0].mxu0
        %v3853 = vadd.f32 %v3772, %v3852
        %v3854 = vpop.f32.mrb[0].mxu0
        %v3855 = vadd.f32 %v3772, %v3854
        %3856 = vdwg.mxu0
        %3857 = vmatprep.subr.mxu0 %v3753
        %3858 = vmatpush1.msra.mxu0 %v3752
        %3859 = vmatprep.subr.mxu0 %v3757
        %3860 = vmatpush1.msra.mxu0 %v3756
        %3861 = vmatprep.subr.mxu0 0.0
        %3862 = vmatpush1.msra.mxu0 0.0
        %3863 = vmatprep.subr.mxu0 0.0
        %3864 = vmatpush1.msra.mxu0 0.0
        %3865 = vmatprep.subr.mxu0 0.0
        %3866 = vmatpush1.msra.mxu0 0.0
        %3867 = vmatprep.subr.mxu0 0.0
        %3868 = vmatpush1.msra.mxu0 0.0
        %3869 = vmatprep.subr.mxu0 0.0
        %3870 = vmatpush1.msra.mxu0 0.0
        %3871 = vmatprep.subr.mxu0 0.0
        %3872 = vmatpush1.msra.mxu0 0.0
        %3873 = vmatprep.subr.mxu0 0.0
        %3874 = vmatpush1.msra.mxu0 0.0
        %3875 = vmatprep.subr.mxu0 0.0
        %3876 = vmatpush1.msra.mxu0 0.0
        %3877 = vmatprep.subr.mxu0 0.0
        %3878 = vmatpush1.msra.mxu0 0.0
        %3879 = vmatprep.subr.mxu0 0.0
        %3880 = vmatpush1.msra.mxu0 0.0
        %3881 = vmatprep.subr.mxu0 0.0
        %3882 = vmatpush1.msra.mxu0 0.0
        %3883 = vmatprep.subr.mxu0 0.0
        %3884 = vmatpush1.msra.mxu0 0.0
        %3885 = vmatprep.subr.mxu0 0.0
        %3886 = vmatpush1.msra.mxu0 0.0
        %3887 = vmatprep.subr.mxu0 0.0
        %3888 = vmatpush1.msra.mxu0 0.0
        %3889 = vmatprep.subr.mxu0 0.0
        %3890 = vmatpush1.msra.mxu0 0.0
        %3891 = vmatprep.subr.mxu0 0.0
        %3892 = vmatpush1.msra.mxu0 0.0
        %3893 = vmatprep.subr.mxu0 0.0
        %3894 = vmatpush1.msra.mxu0 0.0
        %3895 = vmatprep.subr.mxu0 0.0
        %3896 = vmatpush1.msra.mxu0 0.0
        %3897 = vmatprep.subr.mxu0 0.0
        %3898 = vmatpush1.msra.mxu0 0.0
        %3899 = vmatprep.subr.mxu0 0.0
        %3900 = vmatpush1.msra.mxu0 0.0
        %3901 = vmatprep.subr.mxu0 0.0
        %3902 = vmatpush1.msra.mxu0 0.0
        %3903 = vmatprep.subr.mxu0 0.0
        %3904 = vmatpush1.msra.mxu0 0.0
        %3905 = vmatprep.subr.mxu0 0.0
        %3906 = vmatpush1.msra.mxu0 0.0
        %3907 = vmatprep.subr.mxu0 0.0
        %3908 = vmatpush1.msra.mxu0 0.0
        %3909 = vmatprep.subr.mxu0 0.0
        %3910 = vmatpush1.msra.mxu0 0.0
        %3911 = vmatprep.subr.mxu0 0.0
        %3912 = vmatpush1.msra.mxu0 0.0
        %3913 = vmatprep.subr.mxu0 0.0
        %3914 = vmatpush1.msra.mxu0 0.0
        %3915 = vmatprep.subr.mxu0 0.0
        %3916 = vmatpush1.msra.mxu0 0.0
        %3917 = vmatprep.subr.mxu0 0.0
        %3918 = vmatpush1.msra.mxu0 0.0
        %3919 = vmatprep.subr.mxu0 0.0
        %3920 = vmatpush1.msra.mxu0 0.0
        %3921 = vmatprep.mubr.f32.mxu0 0.0
        %3922 = vmatmul.mubr.f32.gmra.mrb[0].mxu0 %v3775
        %v3923 = vpop.f32.mrb[0].mxu0
        %v3924 = vadd.f32 %v3767, %v3923
        %v3925 = vpop.f32.mrb[0].mxu0
        %v3926 = vadd.f32 %v3767, %v3925
        %3927 = vmatprep.mubr.f32.mxu0 0.0
        %3928 = vmatmul.mubr.f32.gmra.mrb[0].mxu0 %v3778
        %v3929 = vpop.f32.mrb[0].mxu0
        %v3930 = vadd.f32 %v3772, %v3929
        %v3931 = vpop.f32.mrb[0].mxu0
        %v3932 = vadd.f32 %v3772, %v3931
        %3933 = vdwg.mxu0
        %v3934 = vadd.f32 %v3847, %v3423
        %v3935 = vadd.f32 %v3849, %v3424
        %v3936 = vadd.f32 %v3924, %v3425
        %v3937 = vadd.f32 %v3926, %v3426
        %v3938 = vadd.f32 %v3853, %v3427
        %v3939 = vadd.f32 %v3855, %v3428
        %v3940 = vadd.f32 %v3930, %v3429
        %v3941 = vadd.f32 %v3932, %v3430
        %v3942 = vadd.f32 %v3431, %v3934
        %v3943 = vadd.f32 %v3432, %v3935
        %v3944 = vadd.f32 %v3433, %v3936
        %v3945 = vadd.f32 %v3434, %v3937
        %v3946 = vadd.f32 %v3435, %v3938
        %v3947 = vadd.f32 %v3436, %v3939
        %v3948 = vadd.f32 %v3437, %v3940
        %v3949 = vadd.f32 %v3438, %v3941
        %s3950 = scalar_lea.vmem [#allocation2], 112
        %v3951 = vld [vmem:[%s3950] sm:$0xff]
        %v3952 = vld [vmem:[%s3950 + $0x8] sm:$0xff]
        %3953 = vst [vmem:[%s3950] sm:$0xff] %v3937
        %3954 = vst [vmem:[%s3950 + $0x8] sm:$0xff] %v3941
        %3965 = vrot.lane.b32.xlu0 %v3951, 4
        %v3966 = vpop.permute.xlu0 %3965
        %3967 = vrot.lane.b32.xlu0 %v3934, 4
        %v3968 = vpop.permute.xlu0 %3967
        %3969 = vrot.lane.b32.xlu0 %v3935, 4
        %v3970 = vpop.permute.xlu0 %3969
        %3971 = vrot.lane.b32.xlu0 %v3936, 4
        %v3972 = vpop.permute.xlu0 %3971
        %3973 = vrot.lane.b32.xlu0 %v3937, 4
        %v3974 = vpop.permute.xlu0 %3973
        %3975 = vrot.lane.b32.xlu0 %v3952, 4
        %v3976 = vpop.permute.xlu0 %3975
        %3977 = vrot.lane.b32.xlu0 %v3938, 4
        %v3978 = vpop.permute.xlu0 %3977
        %3979 = vrot.lane.b32.xlu0 %v3939, 4
        %v3980 = vpop.permute.xlu0 %3979
        %3981 = vrot.lane.b32.xlu0 %v3940, 4
        %v3982 = vpop.permute.xlu0 %3981
        %3983 = vrot.lane.b32.xlu0 %v3941, 4
        %v3984 = vpop.permute.xlu0 %3983
        %v3985 = vsel %vm1940, %v3966, %v3968
        %v3986 = vsel %vm1940, %v3968, %v3970
        %v3987 = vsel %vm1940, %v3970, %v3972
        %v3988 = vsel %vm1940, %v3972, %v3974
        %v3989 = vsel %vm1940, %v3976, %v3978
        %v3990 = vsel %vm1940, %v3978, %v3980
        %v3991 = vsel %vm1940, %v3980, %v3982
        %v3992 = vsel %vm1940, %v3982, %v3984
        %s4001 = scalar_lea.vmem %s5, 192
        %v4002 = vld [vmem:[%s4001] sm:$0xff]
        %v4003 = vld [vmem:[%s4001 + $0x8] sm:$0xff]
        %v4004 = vld [vmem:[%s4001 + $0x10] sm:$0xff]
        %v4005 = vld [vmem:[%s4001 + $0x18] sm:$0xff]
        %s4006 = scalar_lea.vmem %s6, 192
        %v4007 = vld [vmem:[%s4006] sm:$0xff]
        %v4008 = vld [vmem:[%s4006 + $0x8] sm:$0xff]
        %v4009 = vld [vmem:[%s4006 + $0x10] sm:$0xff]
        %v4010 = vld [vmem:[%s4006 + $0x18] sm:$0xff]
        %4012 = vset.pattern.permute.xlu0 0
        %4013 = vperm.xlu0 %4012, %v4007
        %v4014 = vpop.permute.xlu0 %4013
        %4017 = vset.pattern.permute.xlu0 0
        %4018 = vperm.xlu0 %4017, %v4008
        %v4019 = vpop.permute.xlu0 %4018
        %4022 = vset.pattern.permute.xlu0 0
        %4023 = vperm.xlu0 %4022, %v4009
        %v4024 = vpop.permute.xlu0 %4023
        %4027 = vset.pattern.permute.xlu0 0
        %4028 = vperm.xlu0 %4027, %v4010
        %v4029 = vpop.permute.xlu0 %4028
        %v4032 = vsel %vm964, %v4002, 0
        %v4035 = vsel %vm964, %v4003, 0
        %v4038 = vsel %vm964, %v4004, 0
        %v4041 = vsel %vm964, %v4005, 0
        %4043 = vmatprep.subr.mxu0 %v3935
        %4044 = vmatpush1.msra.mxu0 %v3934
        %4045 = vmatprep.subr.mxu0 %v3939
        %4046 = vmatpush1.msra.mxu0 %v3938
        %4047 = vmatprep.subr.mxu0 %v3986
        %4048 = vmatpush1.msra.mxu0 %v3985
        %4049 = vmatprep.subr.mxu0 %v3990
        %4050 = vmatpush1.msra.mxu0 %v3989
        %4051 = vmatprep.subr.mxu0 0.0
        %4052 = vmatpush1.msra.mxu0 0.0
        %4053 = vmatprep.subr.mxu0 0.0
        %4054 = vmatpush1.msra.mxu0 0.0
        %4055 = vmatprep.subr.mxu0 0.0
        %4056 = vmatpush1.msra.mxu0 0.0
        %4057 = vmatprep.subr.mxu0 0.0
        %4058 = vmatpush1.msra.mxu0 0.0
        %4059 = vmatprep.subr.mxu0 0.0
        %4060 = vmatpush1.msra.mxu0 0.0
        %4061 = vmatprep.subr.mxu0 0.0
        %4062 = vmatpush1.msra.mxu0 0.0
        %4063 = vmatprep.subr.mxu0 0.0
        %4064 = vmatpush1.msra.mxu0 0.0
        %4065 = vmatprep.subr.mxu0 0.0
        %4066 = vmatpush1.msra.mxu0 0.0
        %4067 = vmatprep.subr.mxu0 0.0
        %4068 = vmatpush1.msra.mxu0 0.0
        %4069 = vmatprep.subr.mxu0 0.0
        %4070 = vmatpush1.msra.mxu0 0.0
        %4071 = vmatprep.subr.mxu0 0.0
        %4072 = vmatpush1.msra.mxu0 0.0
        %4073 = vmatprep.subr.mxu0 0.0
        %4074 = vmatpush1.msra.mxu0 0.0
        %4075 = vmatprep.subr.mxu0 0.0
        %4076 = vmatpush1.msra.mxu0 0.0
        %4077 = vmatprep.subr.mxu0 0.0
        %4078 = vmatpush1.msra.mxu0 0.0
        %4079 = vmatprep.subr.mxu0 0.0
        %4080 = vmatpush1.msra.mxu0 0.0
        %4081 = vmatprep.subr.mxu0 0.0
        %4082 = vmatpush1.msra.mxu0 0.0
        %4083 = vmatprep.subr.mxu0 0.0
        %4084 = vmatpush1.msra.mxu0 0.0
        %4085 = vmatprep.subr.mxu0 0.0
        %4086 = vmatpush1.msra.mxu0 0.0
        %4087 = vmatprep.subr.mxu0 0.0
        %4088 = vmatpush1.msra.mxu0 0.0
        %4089 = vmatprep.subr.mxu0 0.0
        %4090 = vmatpush1.msra.mxu0 0.0
        %4091 = vmatprep.subr.mxu0 0.0
        %4092 = vmatpush1.msra.mxu0 0.0
        %4093 = vmatprep.subr.mxu0 0.0
        %4094 = vmatpush1.msra.mxu0 0.0
        %4095 = vmatprep.subr.mxu0 0.0
        %4096 = vmatpush1.msra.mxu0 0.0
        %4097 = vmatprep.subr.mxu0 0.0
        %4098 = vmatpush1.msra.mxu0 0.0
        %4099 = vmatprep.subr.mxu0 0.0
        %4100 = vmatpush1.msra.mxu0 0.0
        %4101 = vmatprep.subr.mxu0 0.0
        %4102 = vmatpush1.msra.mxu0 0.0
        %4103 = vmatprep.subr.mxu0 0.0
        %4104 = vmatpush1.msra.mxu0 0.0
        %4105 = vmatprep.subr.mxu0 0.0
        %4106 = vmatpush1.msra.mxu0 0.0
        %4107 = vmatprep.mubr.f32.mxu0 0.0
        %4108 = vmatmul.mubr.f32.gmra.mrb[0].mxu0 %v4032
        %v4109 = vpop.f32.mrb[0].mxu0
        %v4110 = vadd.f32 %v4014, %v4109
        %v4111 = vpop.f32.mrb[0].mxu0
        %v4112 = vadd.f32 %v4014, %v4111
        %4113 = vmatprep.mubr.f32.mxu0 0.0
        %4114 = vmatmul.mubr.f32.gmra.mrb[0].mxu0 %v4035
        %v4115 = vpop.f32.mrb[0].mxu0
        %v4116 = vadd.f32 %v4019, %v4115
        %v4117 = vpop.f32.mrb[0].mxu0
        %v4118 = vadd.f32 %v4019, %v4117
        %4119 = vmatprep.mubr.f32.mxu0 0.0
        %4120 = vmatmul.mubr.f32.gmra.mrb[0].mxu0 %v4038
        %v4121 = vpop.f32.mrb[0].mxu0
        %v4122 = vadd.f32 %v4024, %v4121
        %v4123 = vpop.f32.mrb[0].mxu0
        %v4124 = vadd.f32 %v4024, %v4123
        %4125 = vmatprep.mubr.f32.mxu0 0.0
        %4126 = vmatmul.mubr.f32.gmra.mrb[0].mxu0 %v4041
        %v4127 = vpop.f32.mrb[0].mxu0
        %v4128 = vadd.f32 %v4029, %v4127
        %v4129 = vpop.f32.mrb[0].mxu0
        %v4130 = vadd.f32 %v4029, %v4129
        %4131 = vdwg.mxu0
        %4132 = vmatprep.subr.mxu0 %v3937
        %4133 = vmatpush1.msra.mxu0 %v3936
        %4134 = vmatprep.subr.mxu0 %v3941
        %4135 = vmatpush1.msra.mxu0 %v3940
        %4136 = vmatprep.subr.mxu0 %v3988
        %4137 = vmatpush1.msra.mxu0 %v3987
        %4138 = vmatprep.subr.mxu0 %v3992
        %4139 = vmatpush1.msra.mxu0 %v3991
        %4140 = vmatprep.subr.mxu0 0.0
        %4141 = vmatpush1.msra.mxu0 0.0
        %4142 = vmatprep.subr.mxu0 0.0
        %4143 = vmatpush1.msra.mxu0 0.0
        %4144 = vmatprep.subr.mxu0 0.0
        %4145 = vmatpush1.msra.mxu0 0.0
        %4146 = vmatprep.subr.mxu0 0.0
        %4147 = vmatpush1.msra.mxu0 0.0
        %4148 = vmatprep.subr.mxu0 0.0
        %4149 = vmatpush1.msra.mxu0 0.0
        %4150 = vmatprep.subr.mxu0 0.0
        %4151 = vmatpush1.msra.mxu0 0.0
        %4152 = vmatprep.subr.mxu0 0.0
        %4153 = vmatpush1.msra.mxu0 0.0
        %4154 = vmatprep.subr.mxu0 0.0
        %4155 = vmatpush1.msra.mxu0 0.0
        %4156 = vmatprep.subr.mxu0 0.0
        %4157 = vmatpush1.msra.mxu0 0.0
        %4158 = vmatprep.subr.mxu0 0.0
        %4159 = vmatpush1.msra.mxu0 0.0
        %4160 = vmatprep.subr.mxu0 0.0
        %4161 = vmatpush1.msra.mxu0 0.0
        %4162 = vmatprep.subr.mxu0 0.0
        %4163 = vmatpush1.msra.mxu0 0.0
        %4164 = vmatprep.subr.mxu0 0.0
        %4165 = vmatpush1.msra.mxu0 0.0
        %4166 = vmatprep.subr.mxu0 0.0
        %4167 = vmatpush1.msra.mxu0 0.0
        %4168 = vmatprep.subr.mxu0 0.0
        %4169 = vmatpush1.msra.mxu0 0.0
        %4170 = vmatprep.subr.mxu0 0.0
        %4171 = vmatpush1.msra.mxu0 0.0
        %4172 = vmatprep.subr.mxu0 0.0
        %4173 = vmatpush1.msra.mxu0 0.0
        %4174 = vmatprep.subr.mxu0 0.0
        %4175 = vmatpush1.msra.mxu0 0.0
        %4176 = vmatprep.subr.mxu0 0.0
        %4177 = vmatpush1.msra.mxu0 0.0
        %4178 = vmatprep.subr.mxu0 0.0
        %4179 = vmatpush1.msra.mxu0 0.0
        %4180 = vmatprep.subr.mxu0 0.0
        %4181 = vmatpush1.msra.mxu0 0.0
        %4182 = vmatprep.subr.mxu0 0.0
        %4183 = vmatpush1.msra.mxu0 0.0
        %4184 = vmatprep.subr.mxu0 0.0
        %4185 = vmatpush1.msra.mxu0 0.0
        %4186 = vmatprep.subr.mxu0 0.0
        %4187 = vmatpush1.msra.mxu0 0.0
        %4188 = vmatprep.subr.mxu0 0.0
        %4189 = vmatpush1.msra.mxu0 0.0
        %4190 = vmatprep.subr.mxu0 0.0
        %4191 = vmatpush1.msra.mxu0 0.0
        %4192 = vmatprep.subr.mxu0 0.0
        %4193 = vmatpush1.msra.mxu0 0.0
        %4194 = vmatprep.subr.mxu0 0.0
        %4195 = vmatpush1.msra.mxu0 0.0
        %4196 = vmatprep.mubr.f32.mxu0 0.0
        %4197 = vmatmul.mubr.f32.gmra.mrb[0].mxu0 %v4032
        %v4198 = vpop.f32.mrb[0].mxu0
        %v4199 = vadd.f32 %v4014, %v4198
        %v4200 = vpop.f32.mrb[0].mxu0
        %v4201 = vadd.f32 %v4014, %v4200
        %4202 = vmatprep.mubr.f32.mxu0 0.0
        %4203 = vmatmul.mubr.f32.gmra.mrb[0].mxu0 %v4035
        %v4204 = vpop.f32.mrb[0].mxu0
        %v4205 = vadd.f32 %v4019, %v4204
        %v4206 = vpop.f32.mrb[0].mxu0
        %v4207 = vadd.f32 %v4019, %v4206
        %4208 = vmatprep.mubr.f32.mxu0 0.0
        %4209 = vmatmul.mubr.f32.gmra.mrb[0].mxu0 %v4038
        %v4210 = vpop.f32.mrb[0].mxu0
        %v4211 = vadd.f32 %v4024, %v4210
        %v4212 = vpop.f32.mrb[0].mxu0
        %v4213 = vadd.f32 %v4024, %v4212
        %4214 = vmatprep.mubr.f32.mxu0 0.0
        %4215 = vmatmul.mubr.f32.gmra.mrb[0].mxu0 %v4041
        %v4216 = vpop.f32.mrb[0].mxu0
        %v4217 = vadd.f32 %v4029, %v4216
        %v4218 = vpop.f32.mrb[0].mxu0
        %v4219 = vadd.f32 %v4029, %v4218
        %4220 = vdwg.mxu0
        %v4221 = vtanh.pop %v4110
        %v4222 = vtanh.pop %v4112
        %v4223 = vtanh.pop %v4199
        %v4224 = vtanh.pop %v4201
        %v4225 = vtanh.pop %v4116
        %v4226 = vtanh.pop %v4118
        %v4227 = vtanh.pop %v4205
        %v4228 = vtanh.pop %v4207
        %v4229 = vmul.f32 %v4122, 0.5
        %v4230 = vmul.f32 %v4124, 0.5
        %v4231 = vmul.f32 %v4211, 0.5
        %v4232 = vmul.f32 %v4213, 0.5
        %v4233 = vmul.f32 %v4128, 0.5
        %v4234 = vmul.f32 %v4130, 0.5
        %v4235 = vmul.f32 %v4217, 0.5
        %v4236 = vmul.f32 %v4219, 0.5
        %v4237 = vtanh.pop %v4229
        %v4238 = vtanh.pop %v4230
        %v4239 = vtanh.pop %v4231
        %v4240 = vtanh.pop %v4232
        %v4241 = vtanh.pop %v4233
        %v4242 = vtanh.pop %v4234
        %v4243 = vtanh.pop %v4235
        %v4244 = vtanh.pop %v4236
        %v4245 = vadd.f32 %v4237, 1.0
        %v4246 = vadd.f32 %v4238, 1.0
        %v4247 = vadd.f32 %v4239, 1.0
        %v4248 = vadd.f32 %v4240, 1.0
        %v4249 = vadd.f32 %v4241, 1.0
        %v4250 = vadd.f32 %v4242, 1.0
        %v4251 = vadd.f32 %v4243, 1.0
        %v4252 = vadd.f32 %v4244, 1.0
        %v4253 = vmul.f32 %v4245, 0.5
        %v4254 = vmul.f32 %v4246, 0.5
        %v4255 = vmul.f32 %v4247, 0.5
        %v4256 = vmul.f32 %v4248, 0.5
        %v4257 = vmul.f32 %v4249, 0.5
        %v4258 = vmul.f32 %v4250, 0.5
        %v4259 = vmul.f32 %v4251, 0.5
        %v4260 = vmul.f32 %v4252, 0.5
        %v4261 = vmul.f32 %v4221, %v4253
        %v4262 = vmul.f32 %v4222, %v4254
        %v4263 = vmul.f32 %v4223, %v4255
        %v4264 = vmul.f32 %v4224, %v4256
        %v4265 = vmul.f32 %v4225, %v4257
        %v4266 = vmul.f32 %v4226, %v4258
        %v4267 = vmul.f32 %v4227, %v4259
        %v4268 = vmul.f32 %v4228, %v4260
        %s4269 = scalar_lea.vmem %s7, 96
        %v4270 = vld [vmem:[%s4269] sm:$0xff]
        %v4271 = vld [vmem:[%s4269 + $0x8] sm:$0xff]
        %s4272 = scalar_lea.vmem %s8, 96
        %v4273 = vld [vmem:[%s4272] sm:$0xff]
        %v4274 = vld [vmem:[%s4272 + $0x8] sm:$0xff]
        %4276 = vset.pattern.permute.xlu0 0
        %4277 = vperm.xlu0 %4276, %v4273
        %v4278 = vpop.permute.xlu0 %4277
        %4281 = vset.pattern.permute.xlu0 0
        %4282 = vperm.xlu0 %4281, %v4274
        %v4283 = vpop.permute.xlu0 %4282
        %v4286 = vsel %vm716, %v4270, 0
        %v4289 = vsel %vm716, %v4271, 0
        %4291 = vmatprep.subr.mxu0 %v4262
        %4292 = vmatpush1.msra.mxu0 %v4261
        %4293 = vmatprep.subr.mxu0 %v4266
        %4294 = vmatpush1.msra.mxu0 %v4265
        %4295 = vmatprep.subr.mxu0 0.0
        %4296 = vmatpush1.msra.mxu0 0.0
        %4297 = vmatprep.subr.mxu0 0.0
        %4298 = vmatpush1.msra.mxu0 0.0
        %4299 = vmatprep.subr.mxu0 0.0
        %4300 = vmatpush1.msra.mxu0 0.0
        %4301 = vmatprep.subr.mxu0 0.0
        %4302 = vmatpush1.msra.mxu0 0.0
        %4303 = vmatprep.subr.mxu0 0.0
        %4304 = vmatpush1.msra.mxu0 0.0
        %4305 = vmatprep.subr.mxu0 0.0
        %4306 = vmatpush1.msra.mxu0 0.0
        %4307 = vmatprep.subr.mxu0 0.0
        %4308 = vmatpush1.msra.mxu0 0.0
        %4309 = vmatprep.subr.mxu0 0.0
        %4310 = vmatpush1.msra.mxu0 0.0
        %4311 = vmatprep.subr.mxu0 0.0
        %4312 = vmatpush1.msra.mxu0 0.0
        %4313 = vmatprep.subr.mxu0 0.0
        %4314 = vmatpush1.msra.mxu0 0.0
        %4315 = vmatprep.subr.mxu0 0.0
        %4316 = vmatpush1.msra.mxu0 0.0
        %4317 = vmatprep.subr.mxu0 0.0
        %4318 = vmatpush1.msra.mxu0 0.0
        %4319 = vmatprep.subr.mxu0 0.0
        %4320 = vmatpush1.msra.mxu0 0.0
        %4321 = vmatprep.subr.mxu0 0.0
        %4322 = vmatpush1.msra.mxu0 0.0
        %4323 = vmatprep.subr.mxu0 0.0
        %4324 = vmatpush1.msra.mxu0 0.0
        %4325 = vmatprep.subr.mxu0 0.0
        %4326 = vmatpush1.msra.mxu0 0.0
        %4327 = vmatprep.subr.mxu0 0.0
        %4328 = vmatpush1.msra.mxu0 0.0
        %4329 = vmatprep.subr.mxu0 0.0
        %4330 = vmatpush1.msra.mxu0 0.0
        %4331 = vmatprep.subr.mxu0 0.0
        %4332 = vmatpush1.msra.mxu0 0.0
        %4333 = vmatprep.subr.mxu0 0.0
        %4334 = vmatpush1.msra.mxu0 0.0
        %4335 = vmatprep.subr.mxu0 0.0
        %4336 = vmatpush1.msra.mxu0 0.0
        %4337 = vmatprep.subr.mxu0 0.0
        %4338 = vmatpush1.msra.mxu0 0.0
        %4339 = vmatprep.subr.mxu0 0.0
        %4340 = vmatpush1.msra.mxu0 0.0
        %4341 = vmatprep.subr.mxu0 0.0
        %4342 = vmatpush1.msra.mxu0 0.0
        %4343 = vmatprep.subr.mxu0 0.0
        %4344 = vmatpush1.msra.mxu0 0.0
        %4345 = vmatprep.subr.mxu0 0.0
        %4346 = vmatpush1.msra.mxu0 0.0
        %4347 = vmatprep.subr.mxu0 0.0
        %4348 = vmatpush1.msra.mxu0 0.0
        %4349 = vmatprep.subr.mxu0 0.0
        %4350 = vmatpush1.msra.mxu0 0.0
        %4351 = vmatprep.subr.mxu0 0.0
        %4352 = vmatpush1.msra.mxu0 0.0
        %4353 = vmatprep.subr.mxu0 0.0
        %4354 = vmatpush1.msra.mxu0 0.0
        %4355 = vmatprep.mubr.f32.mxu0 0.0
        %4356 = vmatmul.mubr.f32.gmra.mrb[0].mxu0 %v4286
        %v4357 = vpop.f32.mrb[0].mxu0
        %v4358 = vadd.f32 %v4278, %v4357
        %v4359 = vpop.f32.mrb[0].mxu0
        %v4360 = vadd.f32 %v4278, %v4359
        %4361 = vmatprep.mubr.f32.mxu0 0.0
        %4362 = vmatmul.mubr.f32.gmra.mrb[0].mxu0 %v4289
        %v4363 = vpop.f32.mrb[0].mxu0
        %v4364 = vadd.f32 %v4283, %v4363
        %v4365 = vpop.f32.mrb[0].mxu0
        %v4366 = vadd.f32 %v4283, %v4365
        %4367 = vdwg.mxu0
        %4368 = vmatprep.subr.mxu0 %v4264
        %4369 = vmatpush1.msra.mxu0 %v4263
        %4370 = vmatprep.subr.mxu0 %v4268
        %4371 = vmatpush1.msra.mxu0 %v4267
        %4372 = vmatprep.subr.mxu0 0.0
        %4373 = vmatpush1.msra.mxu0 0.0
        %4374 = vmatprep.subr.mxu0 0.0
        %4375 = vmatpush1.msra.mxu0 0.0
        %4376 = vmatprep.subr.mxu0 0.0
        %4377 = vmatpush1.msra.mxu0 0.0
        %4378 = vmatprep.subr.mxu0 0.0
        %4379 = vmatpush1.msra.mxu0 0.0
        %4380 = vmatprep.subr.mxu0 0.0
        %4381 = vmatpush1.msra.mxu0 0.0
        %4382 = vmatprep.subr.mxu0 0.0
        %4383 = vmatpush1.msra.mxu0 0.0
        %4384 = vmatprep.subr.mxu0 0.0
        %4385 = vmatpush1.msra.mxu0 0.0
        %4386 = vmatprep.subr.mxu0 0.0
        %4387 = vmatpush1.msra.mxu0 0.0
        %4388 = vmatprep.subr.mxu0 0.0
        %4389 = vmatpush1.msra.mxu0 0.0
        %4390 = vmatprep.subr.mxu0 0.0
        %4391 = vmatpush1.msra.mxu0 0.0
        %4392 = vmatprep.subr.mxu0 0.0
        %4393 = vmatpush1.msra.mxu0 0.0
        %4394 = vmatprep.subr.mxu0 0.0
        %4395 = vmatpush1.msra.mxu0 0.0
        %4396 = vmatprep.subr.mxu0 0.0
        %4397 = vmatpush1.msra.mxu0 0.0
        %4398 = vmatprep.subr.mxu0 0.0
        %4399 = vmatpush1.msra.mxu0 0.0
        %4400 = vmatprep.subr.mxu0 0.0
        %4401 = vmatpush1.msra.mxu0 0.0
        %4402 = vmatprep.subr.mxu0 0.0
        %4403 = vmatpush1.msra.mxu0 0.0
        %4404 = vmatprep.subr.mxu0 0.0
        %4405 = vmatpush1.msra.mxu0 0.0
        %4406 = vmatprep.subr.mxu0 0.0
        %4407 = vmatpush1.msra.mxu0 0.0
        %4408 = vmatprep.subr.mxu0 0.0
        %4409 = vmatpush1.msra.mxu0 0.0
        %4410 = vmatprep.subr.mxu0 0.0
        %4411 = vmatpush1.msra.mxu0 0.0
        %4412 = vmatprep.subr.mxu0 0.0
        %4413 = vmatpush1.msra.mxu0 0.0
        %4414 = vmatprep.subr.mxu0 0.0
        %4415 = vmatpush1.msra.mxu0 0.0
        %4416 = vmatprep.subr.mxu0 0.0
        %4417 = vmatpush1.msra.mxu0 0.0
        %4418 = vmatprep.subr.mxu0 0.0
        %4419 = vmatpush1.msra.mxu0 0.0
        %4420 = vmatprep.subr.mxu0 0.0
        %4421 = vmatpush1.msra.mxu0 0.0
        %4422 = vmatprep.subr.mxu0 0.0
        %4423 = vmatpush1.msra.mxu0 0.0
        %4424 = vmatprep.subr.mxu0 0.0
        %4425 = vmatpush1.msra.mxu0 0.0
        %4426 = vmatprep.subr.mxu0 0.0
        %4427 = vmatpush1.msra.mxu0 0.0
        %4428 = vmatprep.subr.mxu0 0.0
        %4429 = vmatpush1.msra.mxu0 0.0
        %4430 = vmatprep.subr.mxu0 0.0
        %4431 = vmatpush1.msra.mxu0 0.0
        %4432 = vmatprep.mubr.f32.mxu0 0.0
        %4433 = vmatmul.mubr.f32.gmra.mrb[0].mxu0 %v4286
        %v4434 = vpop.f32.mrb[0].mxu0
        %v4435 = vadd.f32 %v4278, %v4434
        %v4436 = vpop.f32.mrb[0].mxu0
        %v4437 = vadd.f32 %v4278, %v4436
        %4438 = vmatprep.mubr.f32.mxu0 0.0
        %4439 = vmatmul.mubr.f32.gmra.mrb[0].mxu0 %v4289
        %v4440 = vpop.f32.mrb[0].mxu0
        %v4441 = vadd.f32 %v4283, %v4440
        %v4442 = vpop.f32.mrb[0].mxu0
        %v4443 = vadd.f32 %v4283, %v4442
        %4444 = vdwg.mxu0
        %v4445 = vadd.f32 %v4358, %v3934
        %v4446 = vadd.f32 %v4360, %v3935
        %v4447 = vadd.f32 %v4435, %v3936
        %v4448 = vadd.f32 %v4437, %v3937
        %v4449 = vadd.f32 %v4364, %v3938
        %v4450 = vadd.f32 %v4366, %v3939
        %v4451 = vadd.f32 %v4441, %v3940
        %v4452 = vadd.f32 %v4443, %v3941
        %v4453 = vadd.f32 %v3942, %v4445
        %v4454 = vadd.f32 %v3943, %v4446
        %v4455 = vadd.f32 %v3944, %v4447
        %v4456 = vadd.f32 %v3945, %v4448
        %v4457 = vadd.f32 %v3946, %v4449
        %v4458 = vadd.f32 %v3947, %v4450
        %v4459 = vadd.f32 %v3948, %v4451
        %v4460 = vadd.f32 %v3949, %v4452
        %s4461 = scalar_lea.vmem [#allocation2], 128
        %v4462 = vld [vmem:[%s4461] sm:$0xff]
        %v4463 = vld [vmem:[%s4461 + $0x8] sm:$0xff]
        %4464 = vst [vmem:[%s4461] sm:$0xff] %v4448
        %4465 = vst [vmem:[%s4461 + $0x8] sm:$0xff] %v4452
        %4476 = vrot.lane.b32.xlu0 %v4462, 8
        %v4477 = vpop.permute.xlu0 %4476
        %4478 = vrot.lane.b32.xlu0 %v4445, 8
        %v4479 = vpop.permute.xlu0 %4478
        %4480 = vrot.lane.b32.xlu0 %v4446, 8
        %v4481 = vpop.permute.xlu0 %4480
        %4482 = vrot.lane.b32.xlu0 %v4447, 8
        %v4483 = vpop.permute.xlu0 %4482
        %4484 = vrot.lane.b32.xlu0 %v4448, 8
        %v4485 = vpop.permute.xlu0 %4484
        %4486 = vrot.lane.b32.xlu0 %v4463, 8
        %v4487 = vpop.permute.xlu0 %4486
        %4488 = vrot.lane.b32.xlu0 %v4449, 8
        %v4489 = vpop.permute.xlu0 %4488
        %4490 = vrot.lane.b32.xlu0 %v4450, 8
        %v4491 = vpop.permute.xlu0 %4490
        %4492 = vrot.lane.b32.xlu0 %v4451, 8
        %v4493 = vpop.permute.xlu0 %4492
        %4494 = vrot.lane.b32.xlu0 %v4452, 8
        %v4495 = vpop.permute.xlu0 %4494
        %v4496 = vsel %vm490, %v4477, %v4479
        %v4497 = vsel %vm490, %v4479, %v4481
        %v4498 = vsel %vm490, %v4481, %v4483
        %v4499 = vsel %vm490, %v4483, %v4485
        %v4500 = vsel %vm490, %v4487, %v4489
        %v4501 = vsel %vm490, %v4489, %v4491
        %v4502 = vsel %vm490, %v4491, %v4493
        %v4503 = vsel %vm490, %v4493, %v4495
        %s4512 = scalar_lea.vmem %s5, 224
        %v4513 = vld [vmem:[%s4512] sm:$0xff]
        %v4514 = vld [vmem:[%s4512 + $0x8] sm:$0xff]
        %v4515 = vld [vmem:[%s4512 + $0x10] sm:$0xff]
        %v4516 = vld [vmem:[%s4512 + $0x18] sm:$0xff]
        %s4517 = scalar_lea.vmem %s6, 224
        %v4518 = vld [vmem:[%s4517] sm:$0xff]
        %v4519 = vld [vmem:[%s4517 + $0x8] sm:$0xff]
        %v4520 = vld [vmem:[%s4517 + $0x10] sm:$0xff]
        %v4521 = vld [vmem:[%s4517 + $0x18] sm:$0xff]
        %4523 = vset.pattern.permute.xlu0 0
        %4524 = vperm.xlu0 %4523, %v4518
        %v4525 = vpop.permute.xlu0 %4524
        %4528 = vset.pattern.permute.xlu0 0
        %4529 = vperm.xlu0 %4528, %v4519
        %v4530 = vpop.permute.xlu0 %4529
        %4533 = vset.pattern.permute.xlu0 0
        %4534 = vperm.xlu0 %4533, %v4520
        %v4535 = vpop.permute.xlu0 %4534
        %4538 = vset.pattern.permute.xlu0 0
        %4539 = vperm.xlu0 %4538, %v4521
        %v4540 = vpop.permute.xlu0 %4539
        %v4543 = vsel %vm964, %v4513, 0
        %v4546 = vsel %vm964, %v4514, 0
        %v4549 = vsel %vm964, %v4515, 0
        %v4552 = vsel %vm964, %v4516, 0
        %4554 = vmatprep.subr.mxu0 %v4446
        %4555 = vmatpush1.msra.mxu0 %v4445
        %4556 = vmatprep.subr.mxu0 %v4450
        %4557 = vmatpush1.msra.mxu0 %v4449
        %4558 = vmatprep.subr.mxu0 %v4497
        %4559 = vmatpush1.msra.mxu0 %v4496
        %4560 = vmatprep.subr.mxu0 %v4501
        %4561 = vmatpush1.msra.mxu0 %v4500
        %4562 = vmatprep.subr.mxu0 0.0
        %4563 = vmatpush1.msra.mxu0 0.0
        %4564 = vmatprep.subr.mxu0 0.0
        %4565 = vmatpush1.msra.mxu0 0.0
        %4566 = vmatprep.subr.mxu0 0.0
        %4567 = vmatpush1.msra.mxu0 0.0
        %4568 = vmatprep.subr.mxu0 0.0
        %4569 = vmatpush1.msra.mxu0 0.0
        %4570 = vmatprep.subr.mxu0 0.0
        %4571 = vmatpush1.msra.mxu0 0.0
        %4572 = vmatprep.subr.mxu0 0.0
        %4573 = vmatpush1.msra.mxu0 0.0
        %4574 = vmatprep.subr.mxu0 0.0
        %4575 = vmatpush1.msra.mxu0 0.0
        %4576 = vmatprep.subr.mxu0 0.0
        %4577 = vmatpush1.msra.mxu0 0.0
        %4578 = vmatprep.subr.mxu0 0.0
        %4579 = vmatpush1.msra.mxu0 0.0
        %4580 = vmatprep.subr.mxu0 0.0
        %4581 = vmatpush1.msra.mxu0 0.0
        %4582 = vmatprep.subr.mxu0 0.0
        %4583 = vmatpush1.msra.mxu0 0.0
        %4584 = vmatprep.subr.mxu0 0.0
        %4585 = vmatpush1.msra.mxu0 0.0
        %4586 = vmatprep.subr.mxu0 0.0
        %4587 = vmatpush1.msra.mxu0 0.0
        %4588 = vmatprep.subr.mxu0 0.0
        %4589 = vmatpush1.msra.mxu0 0.0
        %4590 = vmatprep.subr.mxu0 0.0
        %4591 = vmatpush1.msra.mxu0 0.0
        %4592 = vmatprep.subr.mxu0 0.0
        %4593 = vmatpush1.msra.mxu0 0.0
        %4594 = vmatprep.subr.mxu0 0.0
        %4595 = vmatpush1.msra.mxu0 0.0
        %4596 = vmatprep.subr.mxu0 0.0
        %4597 = vmatpush1.msra.mxu0 0.0
        %4598 = vmatprep.subr.mxu0 0.0
        %4599 = vmatpush1.msra.mxu0 0.0
        %4600 = vmatprep.subr.mxu0 0.0
        %4601 = vmatpush1.msra.mxu0 0.0
        %4602 = vmatprep.subr.mxu0 0.0
        %4603 = vmatpush1.msra.mxu0 0.0
        %4604 = vmatprep.subr.mxu0 0.0
        %4605 = vmatpush1.msra.mxu0 0.0
        %4606 = vmatprep.subr.mxu0 0.0
        %4607 = vmatpush1.msra.mxu0 0.0
        %4608 = vmatprep.subr.mxu0 0.0
        %4609 = vmatpush1.msra.mxu0 0.0
        %4610 = vmatprep.subr.mxu0 0.0
        %4611 = vmatpush1.msra.mxu0 0.0
        %4612 = vmatprep.subr.mxu0 0.0
        %4613 = vmatpush1.msra.mxu0 0.0
        %4614 = vmatprep.subr.mxu0 0.0
        %4615 = vmatpush1.msra.mxu0 0.0
        %4616 = vmatprep.subr.mxu0 0.0
        %4617 = vmatpush1.msra.mxu0 0.0
        %4618 = vmatprep.mubr.f32.mxu0 0.0
        %4619 = vmatmul.mubr.f32.gmra.mrb[0].mxu0 %v4543
        %v4620 = vpop.f32.mrb[0].mxu0
        %v4621 = vadd.f32 %v4525, %v4620
        %v4622 = vpop.f32.mrb[0].mxu0
        %v4623 = vadd.f32 %v4525, %v4622
        %4624 = vmatprep.mubr.f32.mxu0 0.0
        %4625 = vmatmul.mubr.f32.gmra.mrb[0].mxu0 %v4546
        %v4626 = vpop.f32.mrb[0].mxu0
        %v4627 = vadd.f32 %v4530, %v4626
        %v4628 = vpop.f32.mrb[0].mxu0
        %v4629 = vadd.f32 %v4530, %v4628
        %4630 = vmatprep.mubr.f32.mxu0 0.0
        %4631 = vmatmul.mubr.f32.gmra.mrb[0].mxu0 %v4549
        %v4632 = vpop.f32.mrb[0].mxu0
        %v4633 = vadd.f32 %v4535, %v4632
        %v4634 = vpop.f32.mrb[0].mxu0
        %v4635 = vadd.f32 %v4535, %v4634
        %4636 = vmatprep.mubr.f32.mxu0 0.0
        %4637 = vmatmul.mubr.f32.gmra.mrb[0].mxu0 %v4552
        %v4638 = vpop.f32.mrb[0].mxu0
        %v4639 = vadd.f32 %v4540, %v4638
        %v4640 = vpop.f32.mrb[0].mxu0
        %v4641 = vadd.f32 %v4540, %v4640
        %4642 = vdwg.mxu0
        %4643 = vmatprep.subr.mxu0 %v4448
        %4644 = vmatpush1.msra.mxu0 %v4447
        %4645 = vmatprep.subr.mxu0 %v4452
        %4646 = vmatpush1.msra.mxu0 %v4451
        %4647 = vmatprep.subr.mxu0 %v4499
        %4648 = vmatpush1.msra.mxu0 %v4498
        %4649 = vmatprep.subr.mxu0 %v4503
        %4650 = vmatpush1.msra.mxu0 %v4502
        %4651 = vmatprep.subr.mxu0 0.0
        %4652 = vmatpush1.msra.mxu0 0.0
        %4653 = vmatprep.subr.mxu0 0.0
        %4654 = vmatpush1.msra.mxu0 0.0
        %4655 = vmatprep.subr.mxu0 0.0
        %4656 = vmatpush1.msra.mxu0 0.0
        %4657 = vmatprep.subr.mxu0 0.0
        %4658 = vmatpush1.msra.mxu0 0.0
        %4659 = vmatprep.subr.mxu0 0.0
        %4660 = vmatpush1.msra.mxu0 0.0
        %4661 = vmatprep.subr.mxu0 0.0
        %4662 = vmatpush1.msra.mxu0 0.0
        %4663 = vmatprep.subr.mxu0 0.0
        %4664 = vmatpush1.msra.mxu0 0.0
        %4665 = vmatprep.subr.mxu0 0.0
        %4666 = vmatpush1.msra.mxu0 0.0
        %4667 = vmatprep.subr.mxu0 0.0
        %4668 = vmatpush1.msra.mxu0 0.0
        %4669 = vmatprep.subr.mxu0 0.0
        %4670 = vmatpush1.msra.mxu0 0.0
        %4671 = vmatprep.subr.mxu0 0.0
        %4672 = vmatpush1.msra.mxu0 0.0
        %4673 = vmatprep.subr.mxu0 0.0
        %4674 = vmatpush1.msra.mxu0 0.0
        %4675 = vmatprep.subr.mxu0 0.0
        %4676 = vmatpush1.msra.mxu0 0.0
        %4677 = vmatprep.subr.mxu0 0.0
        %4678 = vmatpush1.msra.mxu0 0.0
        %4679 = vmatprep.subr.mxu0 0.0
        %4680 = vmatpush1.msra.mxu0 0.0
        %4681 = vmatprep.subr.mxu0 0.0
        %4682 = vmatpush1.msra.mxu0 0.0
        %4683 = vmatprep.subr.mxu0 0.0
        %4684 = vmatpush1.msra.mxu0 0.0
        %4685 = vmatprep.subr.mxu0 0.0
        %4686 = vmatpush1.msra.mxu0 0.0
        %4687 = vmatprep.subr.mxu0 0.0
        %4688 = vmatpush1.msra.mxu0 0.0
        %4689 = vmatprep.subr.mxu0 0.0
        %4690 = vmatpush1.msra.mxu0 0.0
        %4691 = vmatprep.subr.mxu0 0.0
        %4692 = vmatpush1.msra.mxu0 0.0
        %4693 = vmatprep.subr.mxu0 0.0
        %4694 = vmatpush1.msra.mxu0 0.0
        %4695 = vmatprep.subr.mxu0 0.0
        %4696 = vmatpush1.msra.mxu0 0.0
        %4697 = vmatprep.subr.mxu0 0.0
        %4698 = vmatpush1.msra.mxu0 0.0
        %4699 = vmatprep.subr.mxu0 0.0
        %4700 = vmatpush1.msra.mxu0 0.0
        %4701 = vmatprep.subr.mxu0 0.0
        %4702 = vmatpush1.msra.mxu0 0.0
        %4703 = vmatprep.subr.mxu0 0.0
        %4704 = vmatpush1.msra.mxu0 0.0
        %4705 = vmatprep.subr.mxu0 0.0
        %4706 = vmatpush1.msra.mxu0 0.0
        %4707 = vmatprep.mubr.f32.mxu0 0.0
        %4708 = vmatmul.mubr.f32.gmra.mrb[0].mxu0 %v4543
        %v4709 = vpop.f32.mrb[0].mxu0
        %v4710 = vadd.f32 %v4525, %v4709
        %v4711 = vpop.f32.mrb[0].mxu0
        %v4712 = vadd.f32 %v4525, %v4711
        %4713 = vmatprep.mubr.f32.mxu0 0.0
        %4714 = vmatmul.mubr.f32.gmra.mrb[0].mxu0 %v4546
        %v4715 = vpop.f32.mrb[0].mxu0
        %v4716 = vadd.f32 %v4530, %v4715
        %v4717 = vpop.f32.mrb[0].mxu0
        %v4718 = vadd.f32 %v4530, %v4717
        %4719 = vmatprep.mubr.f32.mxu0 0.0
        %4720 = vmatmul.mubr.f32.gmra.mrb[0].mxu0 %v4549
        %v4721 = vpop.f32.mrb[0].mxu0
        %v4722 = vadd.f32 %v4535, %v4721
        %v4723 = vpop.f32.mrb[0].mxu0
        %v4724 = vadd.f32 %v4535, %v4723
        %4725 = vmatprep.mubr.f32.mxu0 0.0
        %4726 = vmatmul.mubr.f32.gmra.mrb[0].mxu0 %v4552
        %v4727 = vpop.f32.mrb[0].mxu0
        %v4728 = vadd.f32 %v4540, %v4727
        %v4729 = vpop.f32.mrb[0].mxu0
        %v4730 = vadd.f32 %v4540, %v4729
        %4731 = vdwg.mxu0
        %v4732 = vtanh.pop %v4621
        %v4733 = vtanh.pop %v4623
        %v4734 = vtanh.pop %v4710
        %v4735 = vtanh.pop %v4712
        %v4736 = vtanh.pop %v4627
        %v4737 = vtanh.pop %v4629
        %v4738 = vtanh.pop %v4716
        %v4739 = vtanh.pop %v4718
        %v4740 = vmul.f32 %v4633, 0.5
        %v4741 = vmul.f32 %v4635, 0.5
        %v4742 = vmul.f32 %v4722, 0.5
        %v4743 = vmul.f32 %v4724, 0.5
        %v4744 = vmul.f32 %v4639, 0.5
        %v4745 = vmul.f32 %v4641, 0.5
        %v4746 = vmul.f32 %v4728, 0.5
        %v4747 = vmul.f32 %v4730, 0.5
        %v4748 = vtanh.pop %v4740
        %v4749 = vtanh.pop %v4741
        %v4750 = vtanh.pop %v4742
        %v4751 = vtanh.pop %v4743
        %v4752 = vtanh.pop %v4744
        %v4753 = vtanh.pop %v4745
        %v4754 = vtanh.pop %v4746
        %v4755 = vtanh.pop %v4747
        %v4756 = vadd.f32 %v4748, 1.0
        %v4757 = vadd.f32 %v4749, 1.0
        %v4758 = vadd.f32 %v4750, 1.0
        %v4759 = vadd.f32 %v4751, 1.0
        %v4760 = vadd.f32 %v4752, 1.0
        %v4761 = vadd.f32 %v4753, 1.0
        %v4762 = vadd.f32 %v4754, 1.0
        %v4763 = vadd.f32 %v4755, 1.0
        %v4764 = vmul.f32 %v4756, 0.5
        %v4765 = vmul.f32 %v4757, 0.5
        %v4766 = vmul.f32 %v4758, 0.5
        %v4767 = vmul.f32 %v4759, 0.5
        %v4768 = vmul.f32 %v4760, 0.5
        %v4769 = vmul.f32 %v4761, 0.5
        %v4770 = vmul.f32 %v4762, 0.5
        %v4771 = vmul.f32 %v4763, 0.5
        %v4772 = vmul.f32 %v4732, %v4764
        %v4773 = vmul.f32 %v4733, %v4765
        %v4774 = vmul.f32 %v4734, %v4766
        %v4775 = vmul.f32 %v4735, %v4767
        %v4776 = vmul.f32 %v4736, %v4768
        %v4777 = vmul.f32 %v4737, %v4769
        %v4778 = vmul.f32 %v4738, %v4770
        %v4779 = vmul.f32 %v4739, %v4771
        %s4780 = scalar_lea.vmem %s7, 112
        %v4781 = vld [vmem:[%s4780] sm:$0xff]
        %v4782 = vld [vmem:[%s4780 + $0x8] sm:$0xff]
        %s4783 = scalar_lea.vmem %s8, 112
        %v4784 = vld [vmem:[%s4783] sm:$0xff]
        %v4785 = vld [vmem:[%s4783 + $0x8] sm:$0xff]
        %4787 = vset.pattern.permute.xlu0 0
        %4788 = vperm.xlu0 %4787, %v4784
        %v4789 = vpop.permute.xlu0 %4788
        %4792 = vset.pattern.permute.xlu0 0
        %4793 = vperm.xlu0 %4792, %v4785
        %v4794 = vpop.permute.xlu0 %4793
        %v4797 = vsel %vm716, %v4781, 0
        %v4800 = vsel %vm716, %v4782, 0
        %4802 = vmatprep.subr.mxu0 %v4773
        %4803 = vmatpush1.msra.mxu0 %v4772
        %4804 = vmatprep.subr.mxu0 %v4777
        %4805 = vmatpush1.msra.mxu0 %v4776
        %4806 = vmatprep.subr.mxu0 0.0
        %4807 = vmatpush1.msra.mxu0 0.0
        %4808 = vmatprep.subr.mxu0 0.0
        %4809 = vmatpush1.msra.mxu0 0.0
        %4810 = vmatprep.subr.mxu0 0.0
        %4811 = vmatpush1.msra.mxu0 0.0
        %4812 = vmatprep.subr.mxu0 0.0
        %4813 = vmatpush1.msra.mxu0 0.0
        %4814 = vmatprep.subr.mxu0 0.0
        %4815 = vmatpush1.msra.mxu0 0.0
        %4816 = vmatprep.subr.mxu0 0.0
        %4817 = vmatpush1.msra.mxu0 0.0
        %4818 = vmatprep.subr.mxu0 0.0
        %4819 = vmatpush1.msra.mxu0 0.0
        %4820 = vmatprep.subr.mxu0 0.0
        %4821 = vmatpush1.msra.mxu0 0.0
        %4822 = vmatprep.subr.mxu0 0.0
        %4823 = vmatpush1.msra.mxu0 0.0
        %4824 = vmatprep.subr.mxu0 0.0
        %4825 = vmatpush1.msra.mxu0 0.0
        %4826 = vmatprep.subr.mxu0 0.0
        %4827 = vmatpush1.msra.mxu0 0.0
        %4828 = vmatprep.subr.mxu0 0.0
        %4829 = vmatpush1.msra.mxu0 0.0
        %4830 = vmatprep.subr.mxu0 0.0
        %4831 = vmatpush1.msra.mxu0 0.0
        %4832 = vmatprep.subr.mxu0 0.0
        %4833 = vmatpush1.msra.mxu0 0.0
        %4834 = vmatprep.subr.mxu0 0.0
        %4835 = vmatpush1.msra.mxu0 0.0
        %4836 = vmatprep.subr.mxu0 0.0
        %4837 = vmatpush1.msra.mxu0 0.0
        %4838 = vmatprep.subr.mxu0 0.0
        %4839 = vmatpush1.msra.mxu0 0.0
        %4840 = vmatprep.subr.mxu0 0.0
        %4841 = vmatpush1.msra.mxu0 0.0
        %4842 = vmatprep.subr.mxu0 0.0
        %4843 = vmatpush1.msra.mxu0 0.0
        %4844 = vmatprep.subr.mxu0 0.0
        %4845 = vmatpush1.msra.mxu0 0.0
        %4846 = vmatprep.subr.mxu0 0.0
        %4847 = vmatpush1.msra.mxu0 0.0
        %4848 = vmatprep.subr.mxu0 0.0
        %4849 = vmatpush1.msra.mxu0 0.0
        %4850 = vmatprep.subr.mxu0 0.0
        %4851 = vmatpush1.msra.mxu0 0.0
        %4852 = vmatprep.subr.mxu0 0.0
        %4853 = vmatpush1.msra.mxu0 0.0
        %4854 = vmatprep.subr.mxu0 0.0
        %4855 = vmatpush1.msra.mxu0 0.0
        %4856 = vmatprep.subr.mxu0 0.0
        %4857 = vmatpush1.msra.mxu0 0.0
        %4858 = vmatprep.subr.mxu0 0.0
        %4859 = vmatpush1.msra.mxu0 0.0
        %4860 = vmatprep.subr.mxu0 0.0
        %4861 = vmatpush1.msra.mxu0 0.0
        %4862 = vmatprep.subr.mxu0 0.0
        %4863 = vmatpush1.msra.mxu0 0.0
        %4864 = vmatprep.subr.mxu0 0.0
        %4865 = vmatpush1.msra.mxu0 0.0
        %4866 = vmatprep.mubr.f32.mxu0 0.0
        %4867 = vmatmul.mubr.f32.gmra.mrb[0].mxu0 %v4797
        %v4868 = vpop.f32.mrb[0].mxu0
        %v4869 = vadd.f32 %v4789, %v4868
        %v4870 = vpop.f32.mrb[0].mxu0
        %v4871 = vadd.f32 %v4789, %v4870
        %4872 = vmatprep.mubr.f32.mxu0 0.0
        %4873 = vmatmul.mubr.f32.gmra.mrb[0].mxu0 %v4800
        %v4874 = vpop.f32.mrb[0].mxu0
        %v4875 = vadd.f32 %v4794, %v4874
        %v4876 = vpop.f32.mrb[0].mxu0
        %v4877 = vadd.f32 %v4794, %v4876
        %4878 = vdwg.mxu0
        %4879 = vmatprep.subr.mxu0 %v4775
        %4880 = vmatpush1.msra.mxu0 %v4774
        %4881 = vmatprep.subr.mxu0 %v4779
        %4882 = vmatpush1.msra.mxu0 %v4778
        %4883 = vmatprep.subr.mxu0 0.0
        %4884 = vmatpush1.msra.mxu0 0.0
        %4885 = vmatprep.subr.mxu0 0.0
        %4886 = vmatpush1.msra.mxu0 0.0
        %4887 = vmatprep.subr.mxu0 0.0
        %4888 = vmatpush1.msra.mxu0 0.0
        %4889 = vmatprep.subr.mxu0 0.0
        %4890 = vmatpush1.msra.mxu0 0.0
        %4891 = vmatprep.subr.mxu0 0.0
        %4892 = vmatpush1.msra.mxu0 0.0
        %4893 = vmatprep.subr.mxu0 0.0
        %4894 = vmatpush1.msra.mxu0 0.0
        %4895 = vmatprep.subr.mxu0 0.0
        %4896 = vmatpush1.msra.mxu0 0.0
        %4897 = vmatprep.subr.mxu0 0.0
        %4898 = vmatpush1.msra.mxu0 0.0
        %4899 = vmatprep.subr.mxu0 0.0
        %4900 = vmatpush1.msra.mxu0 0.0
        %4901 = vmatprep.subr.mxu0 0.0
        %4902 = vmatpush1.msra.mxu0 0.0
        %4903 = vmatprep.subr.mxu0 0.0
        %4904 = vmatpush1.msra.mxu0 0.0
        %4905 = vmatprep.subr.mxu0 0.0
        %4906 = vmatpush1.msra.mxu0 0.0
        %4907 = vmatprep.subr.mxu0 0.0
        %4908 = vmatpush1.msra.mxu0 0.0
        %4909 = vmatprep.subr.mxu0 0.0
        %4910 = vmatpush1.msra.mxu0 0.0
        %4911 = vmatprep.subr.mxu0 0.0
        %4912 = vmatpush1.msra.mxu0 0.0
        %4913 = vmatprep.subr.mxu0 0.0
        %4914 = vmatpush1.msra.mxu0 0.0
        %4915 = vmatprep.subr.mxu0 0.0
        %4916 = vmatpush1.msra.mxu0 0.0
        %4917 = vmatprep.subr.mxu0 0.0
        %4918 = vmatpush1.msra.mxu0 0.0
        %4919 = vmatprep.subr.mxu0 0.0
        %4920 = vmatpush1.msra.mxu0 0.0
        %4921 = vmatprep.subr.mxu0 0.0
        %4922 = vmatpush1.msra.mxu0 0.0
        %4923 = vmatprep.subr.mxu0 0.0
        %4924 = vmatpush1.msra.mxu0 0.0
        %4925 = vmatprep.subr.mxu0 0.0
        %4926 = vmatpush1.msra.mxu0 0.0
        %4927 = vmatprep.subr.mxu0 0.0
        %4928 = vmatpush1.msra.mxu0 0.0
        %4929 = vmatprep.subr.mxu0 0.0
        %4930 = vmatpush1.msra.mxu0 0.0
        %4931 = vmatprep.subr.mxu0 0.0
        %4932 = vmatpush1.msra.mxu0 0.0
        %4933 = vmatprep.subr.mxu0 0.0
        %4934 = vmatpush1.msra.mxu0 0.0
        %4935 = vmatprep.subr.mxu0 0.0
        %4936 = vmatpush1.msra.mxu0 0.0
        %4937 = vmatprep.subr.mxu0 0.0
        %4938 = vmatpush1.msra.mxu0 0.0
        %4939 = vmatprep.subr.mxu0 0.0
        %4940 = vmatpush1.msra.mxu0 0.0
        %4941 = vmatprep.subr.mxu0 0.0
        %4942 = vmatpush1.msra.mxu0 0.0
        %4943 = vmatprep.mubr.f32.mxu0 0.0
        %4944 = vmatmul.mubr.f32.gmra.mrb[0].mxu0 %v4797
        %v4945 = vpop.f32.mrb[0].mxu0
        %v4946 = vadd.f32 %v4789, %v4945
        %v4947 = vpop.f32.mrb[0].mxu0
        %v4948 = vadd.f32 %v4789, %v4947
        %4949 = vmatprep.mubr.f32.mxu0 0.0
        %4950 = vmatmul.mubr.f32.gmra.mrb[0].mxu0 %v4800
        %v4951 = vpop.f32.mrb[0].mxu0
        %v4952 = vadd.f32 %v4794, %v4951
        %v4953 = vpop.f32.mrb[0].mxu0
        %v4954 = vadd.f32 %v4794, %v4953
        %4955 = vdwg.mxu0
        %v4956 = vadd.f32 %v4869, %v4445
        %v4957 = vadd.f32 %v4871, %v4446
        %v4958 = vadd.f32 %v4946, %v4447
        %v4959 = vadd.f32 %v4948, %v4448
        %v4960 = vadd.f32 %v4875, %v4449
        %v4961 = vadd.f32 %v4877, %v4450
        %v4962 = vadd.f32 %v4952, %v4451
        %v4963 = vadd.f32 %v4954, %v4452
        %v4964 = vadd.f32 %v4453, %v4956
        %v4965 = vadd.f32 %v4454, %v4957
        %v4966 = vadd.f32 %v4455, %v4958
        %v4967 = vadd.f32 %v4456, %v4959
        %v4968 = vadd.f32 %v4457, %v4960
        %v4969 = vadd.f32 %v4458, %v4961
        %v4970 = vadd.f32 %v4459, %v4962
        %v4971 = vadd.f32 %v4460, %v4963
        %v4972 = vmul.f32 %v4964, 0.125
        %v4973 = vmul.f32 %v4965, 0.125
        %v4974 = vmul.f32 %v4966, 0.125
        %v4975 = vmul.f32 %v4967, 0.125
        %v4976 = vmul.f32 %v4968, 0.125
        %v4977 = vmul.f32 %v4969, 0.125
        %v4978 = vmul.f32 %v4970, 0.125
        %v4979 = vmul.f32 %v4971, 0.125
        %v4980 = vmax.f32 %v4972, 0.0
        %v4981 = vmax.f32 %v4973, 0.0
        %v4982 = vmax.f32 %v4974, 0.0
        %v4983 = vmax.f32 %v4975, 0.0
        %v4984 = vmax.f32 %v4976, 0.0
        %v4985 = vmax.f32 %v4977, 0.0
        %v4986 = vmax.f32 %v4978, 0.0
        %v4987 = vmax.f32 %v4979, 0.0
        %v4988 = vld [vmem:[%s9] sm:$0xff]
        %v4989 = vld [vmem:[%s9 + $0x8] sm:$0xff]
        %v4990 = vld [vmem:[%s10] sm:$0xff]
        %v4991 = vld [vmem:[%s10 + $0x8] sm:$0xff]
        %4993 = vset.pattern.permute.xlu0 0
        %4994 = vperm.xlu0 %4993, %v4990
        %v4995 = vpop.permute.xlu0 %4994
        %4998 = vset.pattern.permute.xlu0 0
        %4999 = vperm.xlu0 %4998, %v4991
        %v5000 = vpop.permute.xlu0 %4999
        %v5003 = vsel %vm716, %v4988, 0
        %v5006 = vsel %vm716, %v4989, 0
        %5008 = vmatprep.subr.mxu0 %v4981
        %5009 = vmatpush1.msra.mxu0 %v4980
        %5010 = vmatprep.subr.mxu0 %v4985
        %5011 = vmatpush1.msra.mxu0 %v4984
        %5012 = vmatprep.subr.mxu0 0.0
        %5013 = vmatpush1.msra.mxu0 0.0
        %5014 = vmatprep.subr.mxu0 0.0
        %5015 = vmatpush1.msra.mxu0 0.0
        %5016 = vmatprep.subr.mxu0 0.0
        %5017 = vmatpush1.msra.mxu0 0.0
        %5018 = vmatprep.subr.mxu0 0.0
        %5019 = vmatpush1.msra.mxu0 0.0
        %5020 = vmatprep.subr.mxu0 0.0
        %5021 = vmatpush1.msra.mxu0 0.0
        %5022 = vmatprep.subr.mxu0 0.0
        %5023 = vmatpush1.msra.mxu0 0.0
        %5024 = vmatprep.subr.mxu0 0.0
        %5025 = vmatpush1.msra.mxu0 0.0
        %5026 = vmatprep.subr.mxu0 0.0
        %5027 = vmatpush1.msra.mxu0 0.0
        %5028 = vmatprep.subr.mxu0 0.0
        %5029 = vmatpush1.msra.mxu0 0.0
        %5030 = vmatprep.subr.mxu0 0.0
        %5031 = vmatpush1.msra.mxu0 0.0
        %5032 = vmatprep.subr.mxu0 0.0
        %5033 = vmatpush1.msra.mxu0 0.0
        %5034 = vmatprep.subr.mxu0 0.0
        %5035 = vmatpush1.msra.mxu0 0.0
        %5036 = vmatprep.subr.mxu0 0.0
        %5037 = vmatpush1.msra.mxu0 0.0
        %5038 = vmatprep.subr.mxu0 0.0
        %5039 = vmatpush1.msra.mxu0 0.0
        %5040 = vmatprep.subr.mxu0 0.0
        %5041 = vmatpush1.msra.mxu0 0.0
        %5042 = vmatprep.subr.mxu0 0.0
        %5043 = vmatpush1.msra.mxu0 0.0
        %5044 = vmatprep.subr.mxu0 0.0
        %5045 = vmatpush1.msra.mxu0 0.0
        %5046 = vmatprep.subr.mxu0 0.0
        %5047 = vmatpush1.msra.mxu0 0.0
        %5048 = vmatprep.subr.mxu0 0.0
        %5049 = vmatpush1.msra.mxu0 0.0
        %5050 = vmatprep.subr.mxu0 0.0
        %5051 = vmatpush1.msra.mxu0 0.0
        %5052 = vmatprep.subr.mxu0 0.0
        %5053 = vmatpush1.msra.mxu0 0.0
        %5054 = vmatprep.subr.mxu0 0.0
        %5055 = vmatpush1.msra.mxu0 0.0
        %5056 = vmatprep.subr.mxu0 0.0
        %5057 = vmatpush1.msra.mxu0 0.0
        %5058 = vmatprep.subr.mxu0 0.0
        %5059 = vmatpush1.msra.mxu0 0.0
        %5060 = vmatprep.subr.mxu0 0.0
        %5061 = vmatpush1.msra.mxu0 0.0
        %5062 = vmatprep.subr.mxu0 0.0
        %5063 = vmatpush1.msra.mxu0 0.0
        %5064 = vmatprep.subr.mxu0 0.0
        %5065 = vmatpush1.msra.mxu0 0.0
        %5066 = vmatprep.subr.mxu0 0.0
        %5067 = vmatpush1.msra.mxu0 0.0
        %5068 = vmatprep.subr.mxu0 0.0
        %5069 = vmatpush1.msra.mxu0 0.0
        %5070 = vmatprep.subr.mxu0 0.0
        %5071 = vmatpush1.msra.mxu0 0.0
        %5072 = vmatprep.mubr.f32.mxu0 0.0
        %5073 = vmatmul.mubr.f32.gmra.mrb[0].mxu0 %v5003
        %v5074 = vpop.f32.mrb[0].mxu0
        %v5075 = vadd.f32 %v4995, %v5074
        %v5076 = vpop.f32.mrb[0].mxu0
        %v5077 = vadd.f32 %v4995, %v5076
        %5078 = vmatprep.mubr.f32.mxu0 0.0
        %5079 = vmatmul.mubr.f32.gmra.mrb[0].mxu0 %v5006
        %v5080 = vpop.f32.mrb[0].mxu0
        %v5081 = vadd.f32 %v5000, %v5080
        %v5082 = vpop.f32.mrb[0].mxu0
        %v5083 = vadd.f32 %v5000, %v5082
        %5084 = vdwg.mxu0
        %5085 = vmatprep.subr.mxu0 %v4983
        %5086 = vmatpush1.msra.mxu0 %v4982
        %5087 = vmatprep.subr.mxu0 %v4987
        %5088 = vmatpush1.msra.mxu0 %v4986
        %5089 = vmatprep.subr.mxu0 0.0
        %5090 = vmatpush1.msra.mxu0 0.0
        %5091 = vmatprep.subr.mxu0 0.0
        %5092 = vmatpush1.msra.mxu0 0.0
        %5093 = vmatprep.subr.mxu0 0.0
        %5094 = vmatpush1.msra.mxu0 0.0
        %5095 = vmatprep.subr.mxu0 0.0
        %5096 = vmatpush1.msra.mxu0 0.0
        %5097 = vmatprep.subr.mxu0 0.0
        %5098 = vmatpush1.msra.mxu0 0.0
        %5099 = vmatprep.subr.mxu0 0.0
        %5100 = vmatpush1.msra.mxu0 0.0
        %5101 = vmatprep.subr.mxu0 0.0
        %5102 = vmatpush1.msra.mxu0 0.0
        %5103 = vmatprep.subr.mxu0 0.0
        %5104 = vmatpush1.msra.mxu0 0.0
        %5105 = vmatprep.subr.mxu0 0.0
        %5106 = vmatpush1.msra.mxu0 0.0
        %5107 = vmatprep.subr.mxu0 0.0
        %5108 = vmatpush1.msra.mxu0 0.0
        %5109 = vmatprep.subr.mxu0 0.0
        %5110 = vmatpush1.msra.mxu0 0.0
        %5111 = vmatprep.subr.mxu0 0.0
        %5112 = vmatpush1.msra.mxu0 0.0
        %5113 = vmatprep.subr.mxu0 0.0
        %5114 = vmatpush1.msra.mxu0 0.0
        %5115 = vmatprep.subr.mxu0 0.0
        %5116 = vmatpush1.msra.mxu0 0.0
        %5117 = vmatprep.subr.mxu0 0.0
        %5118 = vmatpush1.msra.mxu0 0.0
        %5119 = vmatprep.subr.mxu0 0.0
        %5120 = vmatpush1.msra.mxu0 0.0
        %5121 = vmatprep.subr.mxu0 0.0
        %5122 = vmatpush1.msra.mxu0 0.0
        %5123 = vmatprep.subr.mxu0 0.0
        %5124 = vmatpush1.msra.mxu0 0.0
        %5125 = vmatprep.subr.mxu0 0.0
        %5126 = vmatpush1.msra.mxu0 0.0
        %5127 = vmatprep.subr.mxu0 0.0
        %5128 = vmatpush1.msra.mxu0 0.0
        %5129 = vmatprep.subr.mxu0 0.0
        %5130 = vmatpush1.msra.mxu0 0.0
        %5131 = vmatprep.subr.mxu0 0.0
        %5132 = vmatpush1.msra.mxu0 0.0
        %5133 = vmatprep.subr.mxu0 0.0
        %5134 = vmatpush1.msra.mxu0 0.0
        %5135 = vmatprep.subr.mxu0 0.0
        %5136 = vmatpush1.msra.mxu0 0.0
        %5137 = vmatprep.subr.mxu0 0.0
        %5138 = vmatpush1.msra.mxu0 0.0
        %5139 = vmatprep.subr.mxu0 0.0
        %5140 = vmatpush1.msra.mxu0 0.0
        %5141 = vmatprep.subr.mxu0 0.0
        %5142 = vmatpush1.msra.mxu0 0.0
        %5143 = vmatprep.subr.mxu0 0.0
        %5144 = vmatpush1.msra.mxu0 0.0
        %5145 = vmatprep.subr.mxu0 0.0
        %5146 = vmatpush1.msra.mxu0 0.0
        %5147 = vmatprep.subr.mxu0 0.0
        %5148 = vmatpush1.msra.mxu0 0.0
        %5149 = vmatprep.mubr.f32.mxu0 0.0
        %5150 = vmatmul.mubr.f32.gmra.mrb[0].mxu0 %v5003
        %v5151 = vpop.f32.mrb[0].mxu0
        %v5152 = vadd.f32 %v4995, %v5151
        %v5153 = vpop.f32.mrb[0].mxu0
        %v5154 = vadd.f32 %v4995, %v5153
        %5155 = vmatprep.mubr.f32.mxu0 0.0
        %5156 = vmatmul.mubr.f32.gmra.mrb[0].mxu0 %v5006
        %v5157 = vpop.f32.mrb[0].mxu0
        %v5158 = vadd.f32 %v5000, %v5157
        %v5159 = vpop.f32.mrb[0].mxu0
        %v5160 = vadd.f32 %v5000, %v5159
        %5161 = vdwg.mxu0
        %v5162 = vmax.f32 %v5075, 0.0
        %v5163 = vmax.f32 %v5077, 0.0
        %v5164 = vmax.f32 %v5152, 0.0
        %v5165 = vmax.f32 %v5154, 0.0
        %v5166 = vmax.f32 %v5081, 0.0
        %v5167 = vmax.f32 %v5083, 0.0
        %v5168 = vmax.f32 %v5158, 0.0
        %v5169 = vmax.f32 %v5160, 0.0
        %v5170 = vld [vmem:[%s11] sm:$0xff]
        %v5171 = vld [vmem:[%s11 + $0x8] sm:$0xff]
        %v5172 = vld [vmem:[%s11 + $0x10] sm:$0xff]
        %v5173 = vld [vmem:[%s11 + $0x18] sm:$0xff]
        %v5174 = vld [vmem:[%s11 + $0x20] sm:$0xff]
        %v5175 = vld [vmem:[%s11 + $0x28] sm:$0xff]
        %v5176 = vld [vmem:[%s11 + $0x30] sm:$0xff]
        %v5177 = vld [vmem:[%s11 + $0x38] sm:$0xff]
        %v5178 = vld [vmem:[%s12] sm:$0xff]
        %v5179 = vld [vmem:[%s12 + $0x8] sm:$0xff]
        %v5180 = vld [vmem:[%s12 + $0x10] sm:$0xff]
        %v5181 = vld [vmem:[%s12 + $0x18] sm:$0xff]
        %v5182 = vld [vmem:[%s12 + $0x20] sm:$0xff]
        %v5183 = vld [vmem:[%s12 + $0x28] sm:$0xff]
        %v5184 = vld [vmem:[%s12 + $0x30] sm:$0xff]
        %v5185 = vld [vmem:[%s12 + $0x38] sm:$0xff]
        %5187 = vset.pattern.permute.xlu0 0
        %5188 = vperm.xlu0 %5187, %v5178
        %v5189 = vpop.permute.xlu0 %5188
        %5192 = vset.pattern.permute.xlu0 0
        %5193 = vperm.xlu0 %5192, %v5179
        %v5194 = vpop.permute.xlu0 %5193
        %5197 = vset.pattern.permute.xlu0 0
        %5198 = vperm.xlu0 %5197, %v5180
        %v5199 = vpop.permute.xlu0 %5198
        %5202 = vset.pattern.permute.xlu0 0
        %5203 = vperm.xlu0 %5202, %v5181
        %v5204 = vpop.permute.xlu0 %5203
        %5207 = vset.pattern.permute.xlu0 0
        %5208 = vperm.xlu0 %5207, %v5182
        %v5209 = vpop.permute.xlu0 %5208
        %5212 = vset.pattern.permute.xlu0 0
        %5213 = vperm.xlu0 %5212, %v5183
        %v5214 = vpop.permute.xlu0 %5213
        %5217 = vset.pattern.permute.xlu0 0
        %5218 = vperm.xlu0 %5217, %v5184
        %v5219 = vpop.permute.xlu0 %5218
        %5222 = vset.pattern.permute.xlu0 0
        %5223 = vperm.xlu0 %5222, %v5185
        %v5224 = vpop.permute.xlu0 %5223
        %v5227 = vsel %vm716, %v5170, 0
        %v5230 = vsel %vm716, %v5171, 0
        %v5233 = vsel %vm716, %v5172, 0
        %v5236 = vsel %vm716, %v5173, 0
        %v5239 = vsel %vm716, %v5174, 0
        %v5242 = vsel %vm716, %v5175, 0
        %v5245 = vsel %vm716, %v5176, 0
        %v5248 = vsel %vm716, %v5177, 0
        %5250 = vmatprep.subr.mxu0 %v5163
        %5251 = vmatpush1.msra.mxu0 %v5162
        %5252 = vmatprep.subr.mxu0 %v5167
        %5253 = vmatpush1.msra.mxu0 %v5166
        %5254 = vmatprep.subr.mxu0 0.0
        %5255 = vmatpush1.msra.mxu0 0.0
        %5256 = vmatprep.subr.mxu0 0.0
        %5257 = vmatpush1.msra.mxu0 0.0
        %5258 = vmatprep.subr.mxu0 0.0
        %5259 = vmatpush1.msra.mxu0 0.0
        %5260 = vmatprep.subr.mxu0 0.0
        %5261 = vmatpush1.msra.mxu0 0.0
        %5262 = vmatprep.subr.mxu0 0.0
        %5263 = vmatpush1.msra.mxu0 0.0
        %5264 = vmatprep.subr.mxu0 0.0
        %5265 = vmatpush1.msra.mxu0 0.0
        %5266 = vmatprep.subr.mxu0 0.0
        %5267 = vmatpush1.msra.mxu0 0.0
        %5268 = vmatprep.subr.mxu0 0.0
        %5269 = vmatpush1.msra.mxu0 0.0
        %5270 = vmatprep.subr.mxu0 0.0
        %5271 = vmatpush1.msra.mxu0 0.0
        %5272 = vmatprep.subr.mxu0 0.0
        %5273 = vmatpush1.msra.mxu0 0.0
        %5274 = vmatprep.subr.mxu0 0.0
        %5275 = vmatpush1.msra.mxu0 0.0
        %5276 = vmatprep.subr.mxu0 0.0
        %5277 = vmatpush1.msra.mxu0 0.0
        %5278 = vmatprep.subr.mxu0 0.0
        %5279 = vmatpush1.msra.mxu0 0.0
        %5280 = vmatprep.subr.mxu0 0.0
        %5281 = vmatpush1.msra.mxu0 0.0
        %5282 = vmatprep.subr.mxu0 0.0
        %5283 = vmatpush1.msra.mxu0 0.0
        %5284 = vmatprep.subr.mxu0 0.0
        %5285 = vmatpush1.msra.mxu0 0.0
        %5286 = vmatprep.subr.mxu0 0.0
        %5287 = vmatpush1.msra.mxu0 0.0
        %5288 = vmatprep.subr.mxu0 0.0
        %5289 = vmatpush1.msra.mxu0 0.0
        %5290 = vmatprep.subr.mxu0 0.0
        %5291 = vmatpush1.msra.mxu0 0.0
        %5292 = vmatprep.subr.mxu0 0.0
        %5293 = vmatpush1.msra.mxu0 0.0
        %5294 = vmatprep.subr.mxu0 0.0
        %5295 = vmatpush1.msra.mxu0 0.0
        %5296 = vmatprep.subr.mxu0 0.0
        %5297 = vmatpush1.msra.mxu0 0.0
        %5298 = vmatprep.subr.mxu0 0.0
        %5299 = vmatpush1.msra.mxu0 0.0
        %5300 = vmatprep.subr.mxu0 0.0
        %5301 = vmatpush1.msra.mxu0 0.0
        %5302 = vmatprep.subr.mxu0 0.0
        %5303 = vmatpush1.msra.mxu0 0.0
        %5304 = vmatprep.subr.mxu0 0.0
        %5305 = vmatpush1.msra.mxu0 0.0
        %5306 = vmatprep.subr.mxu0 0.0
        %5307 = vmatpush1.msra.mxu0 0.0
        %5308 = vmatprep.subr.mxu0 0.0
        %5309 = vmatpush1.msra.mxu0 0.0
        %5310 = vmatprep.subr.mxu0 0.0
        %5311 = vmatpush1.msra.mxu0 0.0
        %5312 = vmatprep.subr.mxu0 0.0
        %5313 = vmatpush1.msra.mxu0 0.0
        %5314 = vmatprep.mubr.f32.mxu0 0.0
        %5315 = vmatmul.mubr.f32.gmra.mrb[0].mxu0 %v5227
        %v5316 = vpop.f32.mrb[0].mxu0
        %v5317 = vadd.f32 %v5189, %v5316
        %v5318 = vpop.f32.mrb[0].mxu0
        %v5319 = vadd.f32 %v5189, %v5318
        %5320 = vmatprep.mubr.f32.mxu0 0.0
        %5321 = vmatmul.mubr.f32.gmra.mrb[0].mxu0 %v5230
        %v5322 = vpop.f32.mrb[0].mxu0
        %v5323 = vadd.f32 %v5194, %v5322
        %v5324 = vpop.f32.mrb[0].mxu0
        %v5325 = vadd.f32 %v5194, %v5324
        %5326 = vmatprep.mubr.f32.mxu0 0.0
        %5327 = vmatmul.mubr.f32.gmra.mrb[0].mxu0 %v5233
        %v5328 = vpop.f32.mrb[0].mxu0
        %v5329 = vadd.f32 %v5199, %v5328
        %v5330 = vpop.f32.mrb[0].mxu0
        %v5331 = vadd.f32 %v5199, %v5330
        %5332 = vmatprep.mubr.f32.mxu0 0.0
        %5333 = vmatmul.mubr.f32.gmra.mrb[0].mxu0 %v5236
        %v5334 = vpop.f32.mrb[0].mxu0
        %v5335 = vadd.f32 %v5204, %v5334
        %v5336 = vpop.f32.mrb[0].mxu0
        %v5337 = vadd.f32 %v5204, %v5336
        %5338 = vmatprep.mubr.f32.mxu0 0.0
        %5339 = vmatmul.mubr.f32.gmra.mrb[0].mxu0 %v5239
        %v5340 = vpop.f32.mrb[0].mxu0
        %v5341 = vadd.f32 %v5209, %v5340
        %v5342 = vpop.f32.mrb[0].mxu0
        %v5343 = vadd.f32 %v5209, %v5342
        %5344 = vmatprep.mubr.f32.mxu0 0.0
        %5345 = vmatmul.mubr.f32.gmra.mrb[0].mxu0 %v5242
        %v5346 = vpop.f32.mrb[0].mxu0
        %v5347 = vadd.f32 %v5214, %v5346
        %v5348 = vpop.f32.mrb[0].mxu0
        %v5349 = vadd.f32 %v5214, %v5348
        %5350 = vmatprep.mubr.f32.mxu0 0.0
        %5351 = vmatmul.mubr.f32.gmra.mrb[0].mxu0 %v5245
        %v5352 = vpop.f32.mrb[0].mxu0
        %v5353 = vadd.f32 %v5219, %v5352
        %v5354 = vpop.f32.mrb[0].mxu0
        %v5355 = vadd.f32 %v5219, %v5354
        %5356 = vmatprep.mubr.f32.mxu0 0.0
        %5357 = vmatmul.mubr.f32.gmra.mrb[0].mxu0 %v5248
        %v5358 = vpop.f32.mrb[0].mxu0
        %v5359 = vadd.f32 %v5224, %v5358
        %v5360 = vpop.f32.mrb[0].mxu0
        %v5361 = vadd.f32 %v5224, %v5360
        %5362 = vdwg.mxu0
        %5363 = vmatprep.subr.mxu0 %v5165
        %5364 = vmatpush1.msra.mxu0 %v5164
        %5365 = vmatprep.subr.mxu0 %v5169
        %5366 = vmatpush1.msra.mxu0 %v5168
        %5367 = vmatprep.subr.mxu0 0.0
        %5368 = vmatpush1.msra.mxu0 0.0
        %5369 = vmatprep.subr.mxu0 0.0
        %5370 = vmatpush1.msra.mxu0 0.0
        %5371 = vmatprep.subr.mxu0 0.0
        %5372 = vmatpush1.msra.mxu0 0.0
        %5373 = vmatprep.subr.mxu0 0.0
        %5374 = vmatpush1.msra.mxu0 0.0
        %5375 = vmatprep.subr.mxu0 0.0
        %5376 = vmatpush1.msra.mxu0 0.0
        %5377 = vmatprep.subr.mxu0 0.0
        %5378 = vmatpush1.msra.mxu0 0.0
        %5379 = vmatprep.subr.mxu0 0.0
        %5380 = vmatpush1.msra.mxu0 0.0
        %5381 = vmatprep.subr.mxu0 0.0
        %5382 = vmatpush1.msra.mxu0 0.0
        %5383 = vmatprep.subr.mxu0 0.0
        %5384 = vmatpush1.msra.mxu0 0.0
        %5385 = vmatprep.subr.mxu0 0.0
        %5386 = vmatpush1.msra.mxu0 0.0
        %5387 = vmatprep.subr.mxu0 0.0
        %5388 = vmatpush1.msra.mxu0 0.0
        %5389 = vmatprep.subr.mxu0 0.0
        %5390 = vmatpush1.msra.mxu0 0.0
        %5391 = vmatprep.subr.mxu0 0.0
        %5392 = vmatpush1.msra.mxu0 0.0
        %5393 = vmatprep.subr.mxu0 0.0
        %5394 = vmatpush1.msra.mxu0 0.0
        %5395 = vmatprep.subr.mxu0 0.0
        %5396 = vmatpush1.msra.mxu0 0.0
        %5397 = vmatprep.subr.mxu0 0.0
        %5398 = vmatpush1.msra.mxu0 0.0
        %5399 = vmatprep.subr.mxu0 0.0
        %5400 = vmatpush1.msra.mxu0 0.0
        %5401 = vmatprep.subr.mxu0 0.0
        %5402 = vmatpush1.msra.mxu0 0.0
        %5403 = vmatprep.subr.mxu0 0.0
        %5404 = vmatpush1.msra.mxu0 0.0
        %5405 = vmatprep.subr.mxu0 0.0
        %5406 = vmatpush1.msra.mxu0 0.0
        %5407 = vmatprep.subr.mxu0 0.0
        %5408 = vmatpush1.msra.mxu0 0.0
        %5409 = vmatprep.subr.mxu0 0.0
        %5410 = vmatpush1.msra.mxu0 0.0
        %5411 = vmatprep.subr.mxu0 0.0
        %5412 = vmatpush1.msra.mxu0 0.0
        %5413 = vmatprep.subr.mxu0 0.0
        %5414 = vmatpush1.msra.mxu0 0.0
        %5415 = vmatprep.subr.mxu0 0.0
        %5416 = vmatpush1.msra.mxu0 0.0
        %5417 = vmatprep.subr.mxu0 0.0
        %5418 = vmatpush1.msra.mxu0 0.0
        %5419 = vmatprep.subr.mxu0 0.0
        %5420 = vmatpush1.msra.mxu0 0.0
        %5421 = vmatprep.subr.mxu0 0.0
        %5422 = vmatpush1.msra.mxu0 0.0
        %5423 = vmatprep.subr.mxu0 0.0
        %5424 = vmatpush1.msra.mxu0 0.0
        %5425 = vmatprep.subr.mxu0 0.0
        %5426 = vmatpush1.msra.mxu0 0.0
        %5427 = vmatprep.mubr.f32.mxu0 0.0
        %5428 = vmatmul.mubr.f32.gmra.mrb[0].mxu0 %v5227
        %v5429 = vpop.f32.mrb[0].mxu0
        %v5430 = vadd.f32 %v5189, %v5429
        %v5431 = vpop.f32.mrb[0].mxu0
        %v5432 = vadd.f32 %v5189, %v5431
        %5433 = vmatprep.mubr.f32.mxu0 0.0
        %5434 = vmatmul.mubr.f32.gmra.mrb[0].mxu0 %v5230
        %v5435 = vpop.f32.mrb[0].mxu0
        %v5436 = vadd.f32 %v5194, %v5435
        %v5437 = vpop.f32.mrb[0].mxu0
        %v5438 = vadd.f32 %v5194, %v5437
        %5439 = vmatprep.mubr.f32.mxu0 0.0
        %5440 = vmatmul.mubr.f32.gmra.mrb[0].mxu0 %v5233
        %v5441 = vpop.f32.mrb[0].mxu0
        %v5442 = vadd.f32 %v5199, %v5441
        %v5443 = vpop.f32.mrb[0].mxu0
        %v5444 = vadd.f32 %v5199, %v5443
        %5445 = vmatprep.mubr.f32.mxu0 0.0
        %5446 = vmatmul.mubr.f32.gmra.mrb[0].mxu0 %v5236
        %v5447 = vpop.f32.mrb[0].mxu0
        %v5448 = vadd.f32 %v5204, %v5447
        %v5449 = vpop.f32.mrb[0].mxu0
        %v5450 = vadd.f32 %v5204, %v5449
        %5451 = vmatprep.mubr.f32.mxu0 0.0
        %5452 = vmatmul.mubr.f32.gmra.mrb[0].mxu0 %v5239
        %v5453 = vpop.f32.mrb[0].mxu0
        %v5454 = vadd.f32 %v5209, %v5453
        %v5455 = vpop.f32.mrb[0].mxu0
        %v5456 = vadd.f32 %v5209, %v5455
        %5457 = vmatprep.mubr.f32.mxu0 0.0
        %5458 = vmatmul.mubr.f32.gmra.mrb[0].mxu0 %v5242
        %v5459 = vpop.f32.mrb[0].mxu0
        %v5460 = vadd.f32 %v5214, %v5459
        %v5461 = vpop.f32.mrb[0].mxu0
        %v5462 = vadd.f32 %v5214, %v5461
        %5463 = vmatprep.mubr.f32.mxu0 0.0
        %5464 = vmatmul.mubr.f32.gmra.mrb[0].mxu0 %v5245
        %v5465 = vpop.f32.mrb[0].mxu0
        %v5466 = vadd.f32 %v5219, %v5465
        %v5467 = vpop.f32.mrb[0].mxu0
        %v5468 = vadd.f32 %v5219, %v5467
        %5469 = vmatprep.mubr.f32.mxu0 0.0
        %5470 = vmatmul.mubr.f32.gmra.mrb[0].mxu0 %v5248
        %v5471 = vpop.f32.mrb[0].mxu0
        %v5472 = vadd.f32 %v5224, %v5471
        %v5473 = vpop.f32.mrb[0].mxu0
        %v5474 = vadd.f32 %v5224, %v5473
        %5475 = vdwg.mxu0
        %5476 = vst [vmem:[%s430] sm:$0xff] %v5317
        %5477 = vst [vmem:[%s430 + $0x8] sm:$0xff] %v5319
        %5478 = vst [vmem:[%s430 + $0x10] sm:$0xff] %v5430
        %5479 = vst [vmem:[%s430 + $0x18] sm:$0xff] %v5432
        %5480 = vst [vmem:[%s430 + $0x20] sm:$0xff] %v5323
        %5481 = vst [vmem:[%s430 + $0x28] sm:$0xff] %v5325
        %5482 = vst [vmem:[%s430 + $0x30] sm:$0xff] %v5436
        %5483 = vst [vmem:[%s430 + $0x38] sm:$0xff] %v5438
        %5484 = vst [vmem:[%s430 + $0x40] sm:$0xff] %v5329
        %5485 = vst [vmem:[%s430 + $0x48] sm:$0xff] %v5331
        %5486 = vst [vmem:[%s430 + $0x50] sm:$0xff] %v5442
        %5487 = vst [vmem:[%s430 + $0x58] sm:$0xff] %v5444
        %5488 = vst [vmem:[%s430 + $0x60] sm:$0xff] %v5335
        %5489 = vst [vmem:[%s430 + $0x68] sm:$0xff] %v5337
        %5490 = vst [vmem:[%s430 + $0x70] sm:$0xff] %v5448
        %5491 = vst [vmem:[%s430 + $0x78] sm:$0xff] %v5450
        %5492 = vst [vmem:[%s430 + $0x80] sm:$0xff] %v5341
        %5493 = vst [vmem:[%s430 + $0x88] sm:$0xff] %v5343
        %5494 = vst [vmem:[%s430 + $0x90] sm:$0xff] %v5454
        %5495 = vst [vmem:[%s430 + $0x98] sm:$0xff] %v5456
        %5496 = vst [vmem:[%s430 + $0xa0] sm:$0xff] %v5347
        %5497 = vst [vmem:[%s430 + $0xa8] sm:$0xff] %v5349
        %5498 = vst [vmem:[%s430 + $0xb0] sm:$0xff] %v5460
        %5499 = vst [vmem:[%s430 + $0xb8] sm:$0xff] %v5462
        %5500 = vst [vmem:[%s430 + $0xc0] sm:$0xff] %v5353
        %5501 = vst [vmem:[%s430 + $0xc8] sm:$0xff] %v5355
        %5502 = vst [vmem:[%s430 + $0xd0] sm:$0xff] %v5466
        %5503 = vst [vmem:[%s430 + $0xd8] sm:$0xff] %v5468
        %5504 = vst [vmem:[%s430 + $0xe0] sm:$0xff] %v5359
        %5505 = vst [vmem:[%s430 + $0xe8] sm:$0xff] %v5361
        %5506 = vst [vmem:[%s430 + $0xf0] sm:$0xff] %v5472
        %5507 = vst [vmem:[%s430 + $0xf8] sm:$0xff] %v5474
        %s5508 = sand.u32 %s310, 1
        %s5509 = sand.u32 %s310, 1
        %s5510 = smul.addr %s5509, 256
        %s5511 = scalar_lea.vmem [#allocation3], %s5510
        // Predicated region
        $region77: #{_wavenet_forward_impl.1} parent=71 // pred_check
          %p5512 = pneg %p320
        $region78: #{_wavenet_forward_impl.1} parent=71 // pred_check_branch
          %5514 = sbr.rel (%p5512) target = $region80
        $region79: #{_wavenet_forward_impl.1} parent=71 // pred_region
          %s5515 = smul.u32 4, %s24
          %s5516 = smul.addr %s5515, 8
          %s5517 = scalar_lea.vmem %s13, %s5516
          // Predicated region
          $region81: #{_wavenet_forward_impl.1} parent=79 // pred_check
            _
          $region82: #{_wavenet_forward_impl.1} parent=79 // pred_check_branch
            %5519 = sbr.rel (0) target = $region84
          $region83: #{_wavenet_forward_impl.1} parent=79 // pred_region
            // Predicated region
            $region85: #{_wavenet_forward_impl.1} parent=83 // pred_check
              _
            $region86: #{_wavenet_forward_impl.1} parent=83 // pred_check_branch
              %5521 = sbr.rel (0) target = $region88
            $region87: #{_wavenet_forward_impl.1} parent=83 // pred_region
              loop: start=0, step=1, limit=1
              $region89: #{_wavenet_forward_impl.1} parent=87 // loop_pre_header
                _
              $region90: #{_wavenet_forward_impl.1} parent=87 // loop_header
                %s5523 = sphi 0, %s5527
                %p5524 = scmp.ge.s32.totalorder %s5523, 1
                %s5528 = sphi %s5511, %s5511
                %s5529 = sphi %s5517, %s5517
              $region91: #{_wavenet_forward_impl.1} parent=87 // loop_header_branch
                %5526 = sbr.rel (%p5524) target = $region95
              $region92: #{_wavenet_forward_impl.1} parent=87 // loop_body
                %v5530 = vld [vmem:[%s5528] sm:$0xff]
                %5531 = vst [vmem:[%s5529] sm:$0xff] %v5530
                %v5532 = vld [vmem:[%s5528 + $0x8] sm:$0xff]
                %5533 = vst [vmem:[%s5529 + $0x8] sm:$0xff] %v5532
                %v5534 = vld [vmem:[%s5528 + $0x10] sm:$0xff]
                %5535 = vst [vmem:[%s5529 + $0x10] sm:$0xff] %v5534
                %v5536 = vld [vmem:[%s5528 + $0x18] sm:$0xff]
                %5537 = vst [vmem:[%s5529 + $0x18] sm:$0xff] %v5536
                %v5538 = vld [vmem:[%s5528 + $0x20] sm:$0xff]
                %5539 = vst [vmem:[%s5529 + $0x80] sm:$0xff] %v5538
                %v5540 = vld [vmem:[%s5528 + $0x28] sm:$0xff]
                %5541 = vst [vmem:[%s5529 + $0x88] sm:$0xff] %v5540
                %v5542 = vld [vmem:[%s5528 + $0x30] sm:$0xff]
                %5543 = vst [vmem:[%s5529 + $0x90] sm:$0xff] %v5542
                %v5544 = vld [vmem:[%s5528 + $0x38] sm:$0xff]
                %5545 = vst [vmem:[%s5529 + $0x98] sm:$0xff] %v5544
                %v5546 = vld [vmem:[%s5528 + $0x40] sm:$0xff]
                %5547 = vst [vmem:[%s5529 + $0x100] sm:$0xff] %v5546
                %v5548 = vld [vmem:[%s5528 + $0x48] sm:$0xff]
                %5549 = vst [vmem:[%s5529 + $0x108] sm:$0xff] %v5548
                %v5550 = vld [vmem:[%s5528 + $0x50] sm:$0xff]
                %5551 = vst [vmem:[%s5529 + $0x110] sm:$0xff] %v5550
                %v5552 = vld [vmem:[%s5528 + $0x58] sm:$0xff]
                %5553 = vst [vmem:[%s5529 + $0x118] sm:$0xff] %v5552
                %v5554 = vld [vmem:[%s5528 + $0x60] sm:$0xff]
                %5555 = vst [vmem:[%s5529 + $0x180] sm:$0xff] %v5554
                %v5556 = vld [vmem:[%s5528 + $0x68] sm:$0xff]
                %5557 = vst [vmem:[%s5529 + $0x188] sm:$0xff] %v5556
                %v5558 = vld [vmem:[%s5528 + $0x70] sm:$0xff]
                %5559 = vst [vmem:[%s5529 + $0x190] sm:$0xff] %v5558
                %v5560 = vld [vmem:[%s5528 + $0x78] sm:$0xff]
                %5561 = vst [vmem:[%s5529 + $0x198] sm:$0xff] %v5560
                %v5562 = vld [vmem:[%s5528 + $0x80] sm:$0xff]
                %5563 = vst [vmem:[%s5529 + $0x200] sm:$0xff] %v5562
                %v5564 = vld [vmem:[%s5528 + $0x88] sm:$0xff]
                %5565 = vst [vmem:[%s5529 + $0x208] sm:$0xff] %v5564
                %v5566 = vld [vmem:[%s5528 + $0x90] sm:$0xff]
                %5567 = vst [vmem:[%s5529 + $0x210] sm:$0xff] %v5566
                %v5568 = vld [vmem:[%s5528 + $0x98] sm:$0xff]
                %5569 = vst [vmem:[%s5529 + $0x218] sm:$0xff] %v5568
                %v5570 = vld [vmem:[%s5528 + $0xa0] sm:$0xff]
                %5571 = vst [vmem:[%s5529 + $0x280] sm:$0xff] %v5570
                %v5572 = vld [vmem:[%s5528 + $0xa8] sm:$0xff]
                %5573 = vst [vmem:[%s5529 + $0x288] sm:$0xff] %v5572
                %v5574 = vld [vmem:[%s5528 + $0xb0] sm:$0xff]
                %5575 = vst [vmem:[%s5529 + $0x290] sm:$0xff] %v5574
                %v5576 = vld [vmem:[%s5528 + $0xb8] sm:$0xff]
                %5577 = vst [vmem:[%s5529 + $0x298] sm:$0xff] %v5576
                %v5578 = vld [vmem:[%s5528 + $0xc0] sm:$0xff]
                %5579 = vst [vmem:[%s5529 + $0x300] sm:$0xff] %v5578
                %v5580 = vld [vmem:[%s5528 + $0xc8] sm:$0xff]
                %5581 = vst [vmem:[%s5529 + $0x308] sm:$0xff] %v5580
                %v5582 = vld [vmem:[%s5528 + $0xd0] sm:$0xff]
                %5583 = vst [vmem:[%s5529 + $0x310] sm:$0xff] %v5582
                %v5584 = vld [vmem:[%s5528 + $0xd8] sm:$0xff]
                %5585 = vst [vmem:[%s5529 + $0x318] sm:$0xff] %v5584
                %v5586 = vld [vmem:[%s5528 + $0xe0] sm:$0xff]
                %5587 = vst [vmem:[%s5529 + $0x380] sm:$0xff] %v5586
                %v5588 = vld [vmem:[%s5528 + $0xe8] sm:$0xff]
                %5589 = vst [vmem:[%s5529 + $0x388] sm:$0xff] %v5588
                %v5590 = vld [vmem:[%s5528 + $0xf0] sm:$0xff]
                %5591 = vst [vmem:[%s5529 + $0x390] sm:$0xff] %v5590
                %v5592 = vld [vmem:[%s5528 + $0xf8] sm:$0xff]
                %5593 = vst [vmem:[%s5529 + $0x398] sm:$0xff] %v5592
              $region93: #{_wavenet_forward_impl.1} parent=87 // loop_footer
                %s5527 = sadd.s32 1, %s5523
              $region94: #{_wavenet_forward_impl.1} parent=87 // loop_footer_branch
                %5522 = sbr.rel target = $region90
              $region95: #{_wavenet_forward_impl.1} parent=87 // loop_exit
                _
            $region88: #{_wavenet_forward_impl.1} parent=83 // pred_fallthru
              _
            // Predicated region
            $region96: #{_wavenet_forward_impl.1} parent=83 // pred_check
              _
            $region97: #{_wavenet_forward_impl.1} parent=83 // pred_check_branch
              %5595 = sbr.rel target = $region99
            $region98: #{_wavenet_forward_impl.1} parent=83 // pred_region
              _
            $region99: #{_wavenet_forward_impl.1} parent=83 // pred_fallthru
              _
          $region84: #{_wavenet_forward_impl.1} parent=79 // pred_fallthru
            _
          %5596 = vnop
        $region80: #{_wavenet_forward_impl.1} parent=71 // pred_fallthru
          _
      $region72: #{_wavenet_forward_impl.1} parent=5 // pred_fallthru
        _
      %p5597 = scmp.le.s32.totalorder 2, %s19
      // Predicated region
      $region100: #{_wavenet_forward_impl.1} parent=5 // pred_check
        %p5598 = pneg %p5597
      $region101: #{_wavenet_forward_impl.1} parent=5 // pred_check_branch
        %5600 = sbr.rel (%p5598) target = $region103
      $region102: #{_wavenet_forward_impl.1} parent=5 // pred_region
        %s5601 = ssub.s32 %s19, 2
        // Predicated region
        $region104: #{_wavenet_forward_impl.1} parent=102 // pred_check
          %p5602 = pneg %p326
        $region105: #{_wavenet_forward_impl.1} parent=102 // pred_check_branch
          %5604 = sbr.rel (%p5602) target = $region107
        $region106: #{_wavenet_forward_impl.1} parent=102 // pred_region
          %s5605 = sand.u32 %s311, 1
          %s5606 = sand.u32 %s311, 1
          %s5607 = smul.addr %s5606, 256
          %s5608 = scalar_lea.vmem [#allocation3], %s5607
        $region107: #{_wavenet_forward_impl.1} parent=102 // pred_fallthru
          _
      $region103: #{_wavenet_forward_impl.1} parent=5 // pred_fallthru
        _
    $region6: #{_wavenet_forward_impl.1} parent=1 // loop_footer
      %s23 = sadd.s32 1, %s19
    $region7: #{_wavenet_forward_impl.1} parent=1 // loop_footer_branch
      %18 = sbr.rel target = $region3
    $region8: #{_wavenet_forward_impl.1} parent=1 // loop_exit
      _

</llo_original>
